<compile_context>
chip_gen: v7x
topology: tpu7x:2x2x1
jax: 0.10.0
libtpu: 0.0.40
codegen_flags: <defaults>
</compile_context>

<pallas_src>
import functools

import jax
import jax.numpy as jnp
from jax.experimental import pallas as pl
from jax.experimental.pallas import tpu as pltpu


# ----------------------------------------------------------------------------
# Pallas kernel: one bidirectional-LSTM sub-layer, both directions fused.
# Grid = (time_tile,).  Per grid cell it
#   1) computes the hoisted input projection for the whole tile (one big matmul),
#   2) runs the fused fwd+bwd recurrence over the tile with h/c kept in vregs,
#   3) writes length-masked outputs (padded steps are exact zeros).
# Lane layouts:
#   x_cat  rows: [ x | x_reversed ]                      (lanes 2*D)
#   gates  cols: [ i_f i_b | f_f f_b | g_f g_b | o_f o_b ] (lanes 8*H)
#   h / c / out: [ h_fwd | h_bwd_reversed_time ]          (lanes 2*H)
# ----------------------------------------------------------------------------
def _bilstm_kernel(len_ref, x_ref, win_ref, whh_ref, b_ref, out_ref, h_sc, c_sc,
                   *, batch, t_tile):
    # len_ref: (B, 1) int32          sequence lengths
    # x_ref:   (t_tile*B, 2D) bf16   time-major rows, row = local_t * B + b
    # win_ref: (2D, 8H) bf16         block-diag, gate-interleaved input weights
    # whh_ref: (2H, 8H) bf16         block-diag, gate-interleaved recurrent weights
    # b_ref:   (1, 8H) f32           b_ih + b_hh (both directions, interleaved)
    # out_ref: (t_tile*B, 2H) f32
    # h_sc/c_sc: VMEM (B, 2H) f32    recurrent state, persists across time tiles
    G = h_sc.shape[1]                      # 2*H (both directions stacked along lanes)
    t_blk = pl.program_id(0)

    @pl.when(t_blk == 0)
    def _init():
        h_sc[...] = jnp.zeros_like(h_sc)
        c_sc[...] = jnp.zeros_like(c_sc)

    # ---- hoisted input projection: one MXU matmul for the whole time tile ----
    gx = jnp.dot(x_ref[...], win_ref[...],
                 preferred_element_type=jnp.float32) + b_ref[...]   # (t_tile*B, 8H) f32

    whh = whh_ref[...]            # (2H, 8H) bf16, loaded once per tile
    lens = len_ref[...]           # (B, 1) int32, loaded once per tile
    t0 = t_blk * t_tile

    h = h_sc[...]                 # (B, 2H) f32, vreg-resident within the tile
    c = c_sc[...]

    # Statically unrolled recurrence; only h @ W_hh + gate math on the critical path,
    # and it advances BOTH directions at once.
    for t in range(t_tile):
        gates = gx[t * batch:(t + 1) * batch, :] + jnp.dot(
            h.astype(jnp.bfloat16), whh, preferred_element_type=jnp.float32)  # (B, 8H)

        # PyTorch gate order i, f, g, o; each slice holds [fwd | bwd] lanes.
        i_g = jax.nn.sigmoid(gates[:, 0:G])
        f_g = jax.nn.sigmoid(gates[:, G:2 * G])
        g_g = jnp.tanh(gates[:, 2 * G:3 * G])
        o_g = jax.nn.sigmoid(gates[:, 3 * G:4 * G])

        c_new = f_g * c + i_g * g_g
        h_new = o_g * jnp.tanh(c_new)

        valid = (t0 + t) < lens                        # (B, 1) packed-seq validity mask
        h = jnp.where(valid, h_new, h)
        c = jnp.where(valid, c_new, c)
        out_ref[pl.ds(t * batch, batch), :] = jnp.where(valid, h_new, 0.0)

    h_sc[...] = h                 # write state back only at the tile boundary
    c_sc[...] = c


# ----------------------------------------------------------------------------
# One bidirectional sub-layer (both directions in a single fused recurrence).
# ----------------------------------------------------------------------------
def bilstm_sublayer(x_tbd, len2d, rev_idx, unrev_idx, w_in, w_hh, b, t_tile):
    """x_tbd: (T_pad, B, D) f32 time-major.  Returns (T_pad, B, 2H) f32."""
    T_pad, B, D = x_tbd.shape
    G = w_hh.shape[0]                      # 2H
    H = G // 2
    nt = T_pad // t_tile

    x_bf = x_tbd.astype(jnp.bfloat16)
    # Length-reversed copy for the backward direction (padded steps masked in-kernel).
    x_rev = jnp.take_along_axis(x_bf, rev_idx[:, :, None], axis=0)          # (T_pad, B, D)
    x_cat = jnp.concatenate([x_bf, x_rev], axis=-1).reshape(T_pad * B, 2 * D)

    kernel = functools.partial(_bilstm_kernel, batch=B, t_tile=t_tile)
    out = pl.pallas_call(
        kernel,
        out_shape=jax.ShapeDtypeStruct((T_pad * B, G), jnp.float32),
        grid=(nt,),
        in_specs=[
            pl.BlockSpec((B, 1), lambda t: (0, 0)),                 # lengths
            pl.BlockSpec((t_tile * B, 2 * D), lambda t: (t, 0)),    # [x | x_rev] tile
            pl.BlockSpec((2 * D, 4 * G), lambda t: (0, 0)),         # W_in  (block-diag)
            pl.BlockSpec((G, 4 * G), lambda t: (0, 0)),             # W_hh  (block-diag)
            pl.BlockSpec((1, 4 * G), lambda t: (0, 0)),             # bias
        ],
        out_specs=pl.BlockSpec((t_tile * B, G), lambda t: (t, 0)),
        scratch_shapes=[pltpu.VMEM((B, G), jnp.float32),            # h state (fwd|bwd)
                        pltpu.VMEM((B, G), jnp.float32)],           # c state (fwd|bwd)
        compiler_params=pltpu.CompilerParams(
            dimension_semantics=("arbitrary",),
            vmem_limit_bytes=32 * 1024 * 1024),
    )(len2d, x_cat, w_in, w_hh, b)

    out = out.reshape(T_pad, B, G)
    fwd = out[..., :H]                                                       # (T_pad, B, H)
    # Un-reverse backward output; padded steps map to a row the kernel already zeroed,
    # so no extra masking pass is needed.
    bwd = jnp.take_along_axis(out[..., H:], unrev_idx[:, :, None], axis=0)   # (T_pad, B, H)
    return jnp.concatenate([fwd, bwd], axis=-1)                              # (T_pad, B, 2H)


# ----------------------------------------------------------------------------
# Parameters (PyTorch nn.LSTM-style uniform(-1/sqrt(H), 1/sqrt(H))), raw layout.
# Each sublayer: (wih_f (4H,Din), whh_f (4H,H), b_f (4H,), wih_b, whh_b, b_b)
# ----------------------------------------------------------------------------
def init_params(key, embedding_size, hidden_size, n_layers):
    H = hidden_size
    scale = 1.0 / float(H) ** 0.5
    params = []
    for i in range(n_layers):                 # the n_layers nn.LSTM modules
        module_in = embedding_size if i == 0 else 2 * H
        sublayers = []
        for l in range(n_layers):             # num_layers inside each nn.LSTM
            d_in = module_in if l == 0 else 2 * H
            dir_p = []
            for _ in range(2):                # forward / backward directions
                key, k1, k2, k3, k4 = jax.random.split(key, 5)
                wih = jax.random.uniform(k1, (4 * H, d_in), jnp.float32, -scale, scale)
                whh = jax.random.uniform(k2, (4 * H, H), jnp.float32, -scale, scale)
                bih = jax.random.uniform(k3, (4 * H,), jnp.float32, -scale, scale)
                bhh = jax.random.uniform(k4, (4 * H,), jnp.float32, -scale, scale)
                dir_p.append((wih, whh, bih + bhh))
            (wf, hf, bf), (wb, hb, bb) = dir_p
            sublayers.append((wf, hf, bf, wb, hb, bb))
        params.append(sublayers)
    return params


def _interleave_dir_gates(wf, wb, H):
    """wf, wb: (in_dim, 4H) per-direction W^T (gate order i,f,g,o along columns).
    Returns (in_dim, 8H) with columns [i_f i_b | f_f f_b | g_f g_b | o_f o_b]."""
    cols = []
    for g in range(4):
        cols.append(wf[:, g * H:(g + 1) * H])
        cols.append(wb[:, g * H:(g + 1) * H])
    return jnp.concatenate(cols, axis=1)


def pack_params(raw_params):
    """Pack raw PyTorch-layout params into fused (W_in, W_hh, b) kernel tensors."""
    packed = []
    for block in raw_params:
        packed_block = []
        for (wih_f, whh_f, b_f, wih_b, whh_b, b_b) in block:
            H = whh_f.shape[1]
            d_in = wih_f.shape[1]
            zi = jnp.zeros((d_in, 4 * H), jnp.float32)
            zh = jnp.zeros((H, 4 * H), jnp.float32)
            # rows 0:D act on x (forward dir); rows D:2D act on x_rev (backward dir)
            w_in = jnp.concatenate([_interleave_dir_gates(wih_f.T, zi, H),
                                    _interleave_dir_gates(zi, wih_b.T, H)], axis=0)
            # rows 0:H act on h_fwd; rows H:2H act on h_bwd
            w_hh = jnp.concatenate([_interleave_dir_gates(whh_f.T, zh, H),
                                    _interleave_dir_gates(zh, whh_b.T, H)], axis=0)
            b = _interleave_dir_gates(b_f.reshape(1, -1), b_b.reshape(1, -1), H)
            packed_block.append((w_in.astype(jnp.bfloat16),
                                 w_hh.astype(jnp.bfloat16),
                                 b.astype(jnp.float32)))
        packed.append(packed_block)
    return packed


# ----------------------------------------------------------------------------
# Full module forward (Pallas path)
# ----------------------------------------------------------------------------
def stacked_bilstms_forward(embedded_inputs, sequence_lengths, packed_params, t_tile=8):
    """embedded_inputs: (B, T, E) f32; sequence_lengths: (B,) int.
    Returns (B, T, n_layers * 2 * hidden_size) f32."""
    B, T, _ = embedded_inputs.shape
    lengths = sequence_lengths.astype(jnp.int32)
    T_pad = -(-T // t_tile) * t_tile
    if T_pad > t_tile and (t_tile * B) % 8 != 0:
        t_tile = T_pad  # keep the sublane block dim legal (multiple of 8 or full extent)

    # Single transpose to time-major for the whole stack; transpose back once at the end.
    x = jnp.transpose(embedded_inputs, (1, 0, 2))                  # (T, B, E)
    if T_pad != T:
        x = jnp.pad(x, ((0, T_pad - T), (0, 0), (0, 0)))
    len2d = lengths.reshape(B, 1)

    t_idx = jnp.arange(T_pad, dtype=jnp.int32)[:, None]            # (T_pad, 1)
    L = lengths[None, :]                                           # (1, B)
    # Input reversal index: x_rev[t, b] = x[L_b-1-t, b]; padded steps clipped (masked in-kernel).
    rev_idx = jnp.clip(L - 1 - t_idx, 0, T_pad - 1)                # (T_pad, B)
    # Output un-reversal index: padded steps map to a row the kernel wrote as zero.
    unrev_idx = jnp.where(t_idx < L, L - 1 - t_idx, jnp.minimum(L, T_pad - 1))  # (T_pad, B)

    cur = x
    module_outputs = []
    for block in packed_params:               # each nn.LSTM block
        layer_in = cur
        for (w_in, w_hh, b) in block:         # stacked bidirectional sublayers
            layer_in = bilstm_sublayer(layer_in, len2d, rev_idx, unrev_idx,
                                       w_in, w_hh, b, t_tile)      # (T_pad, B, 2H)
        module_outputs.append(layer_in)
        cur = layer_in

    out_tb = jnp.concatenate(module_outputs, axis=-1)              # (T_pad, B, n_layers*2H)
    # final dropout == identity (eval / p=0)
    return jnp.transpose(out_tb, (1, 0, 2))[:, :T]                 # (B, T, n_layers*2H)


# ----------------------------------------------------------------------------
# Pure-JAX reference (lax.scan), same precision policy, for correctness check.
# ----------------------------------------------------------------------------
def _lstm_dir_reference(x_tbd, lengths, wih, whh, b):
    T, B, _ = x_tbd.shape
    H = whh.shape[1]
    wih_t = wih.T.astype(jnp.bfloat16)
    whh_t = whh.T.astype(jnp.bfloat16)

    def step(carry, inp):
        h, c = carry
        x_t, t = inp
        gates = (jnp.dot(x_t.astype(jnp.bfloat16), wih_t, preferred_element_type=jnp.float32)
                 + jnp.dot(h.astype(jnp.bfloat16), whh_t, preferred_element_type=jnp.float32)
                 + b)
        i_g = jax.nn.sigmoid(gates[:, 0:H])
        f_g = jax.nn.sigmoid(gates[:, H:2 * H])
        g_g = jnp.tanh(gates[:, 2 * H:3 * H])
        o_g = jax.nn.sigmoid(gates[:, 3 * H:4 * H])
        c_new = f_g * c + i_g * g_g
        h_new = o_g * jnp.tanh(c_new)
        valid = (t < lengths)[:, None]
        return ((jnp.where(valid, h_new, h), jnp.where(valid, c_new, c)),
                jnp.where(valid, h_new, 0.0))

    init = (jnp.zeros((B, H), jnp.float32), jnp.zeros((B, H), jnp.float32))
    _, outs = jax.lax.scan(step, init, (x_tbd, jnp.arange(T, dtype=jnp.int32)))
    return outs                                                              # (T, B, H)


def _bilstm_reference(x_tbd, lengths, sub):
    wih_f, whh_f, b_f, wih_b, whh_b, b_b = sub
    T, _, _ = x_tbd.shape
    t_idx = jnp.arange(T, dtype=jnp.int32)[:, None]
    L = lengths[None, :]
    rev_idx = jnp.clip(L - 1 - t_idx, 0, T - 1)
    unrev_idx = jnp.where(t_idx < L, L - 1 - t_idx, jnp.minimum(L, T - 1))
    x_rev = jnp.take_along_axis(x_tbd, rev_idx[:, :, None], axis=0)
    out_f = _lstm_dir_reference(x_tbd, lengths, wih_f, whh_f, b_f)
    out_b_rev = _lstm_dir_reference(x_rev, lengths, wih_b, whh_b, b_b)
    out_b = jnp.take_along_axis(out_b_rev, unrev_idx[:, :, None], axis=0)
    return jnp.concatenate([out_f, out_b], axis=-1)


def stacked_bilstms_reference(embedded_inputs, sequence_lengths, raw_params):
    lengths = sequence_lengths.astype(jnp.int32)
    x = jnp.transpose(embedded_inputs, (1, 0, 2))
    cur = x
    outs = []
    for block in raw_params:
        layer_in = cur
        for sub in block:
            layer_in = _bilstm_reference(layer_in, lengths, sub)
        outs.append(layer_in)
        cur = layer_in
    return jnp.transpose(jnp.concatenate(outs, axis=-1), (1, 0, 2))


if __name__ == "__main__":
    B, T, E, H, N_LAYERS = 2, 8, 16, 32, 2

    key = jax.random.PRNGKey(0)
    kx, kp = jax.random.split(key)
    embedded_inputs = jax.random.normal(kx, (B, T, E), dtype=jnp.float32)
    sequence_lengths = jnp.array([8, 5], dtype=jnp.int32)

    raw_params = init_params(kp, E, H, N_LAYERS)
    packed_params = pack_params(raw_params)

    fwd_fn = jax.jit(functools.partial(stacked_bilstms_forward, t_tile=8))
    out = jax.block_until_ready(fwd_fn(embedded_inputs, sequence_lengths, packed_params))

    assert out.shape == (B, T, N_LAYERS * 2 * H), out.shape
    assert bool(jnp.all(jnp.isfinite(out)))
    # padded positions of the shorter sequence must be exactly zero (packed-seq semantics)
    assert bool(jnp.all(out[1, 5:, :] == 0.0))

    # numerical check against the pure-JAX reference (same bf16-matmul precision policy)
    ref = jax.block_until_ready(
        jax.jit(stacked_bilstms_reference)(embedded_inputs, sequence_lengths, raw_params))
    max_err = float(jnp.max(jnp.abs(out - ref)))
    assert max_err < 2e-2, f"kernel/reference mismatch: max_err={max_err}"

    print("KERNEL_OK")
</pallas_src>

<mosaic_0001>
module attributes {stable_mosaic.version = 11 : i64} {
  func.func @_bilstm_kernel(%arg0: i32, %arg1: memref<2x1xi32, #tpu.memory_space<vmem>>, %arg2: memref<16x32xbf16, #tpu.memory_space<vmem>>, %arg3: memref<32x256xbf16, #tpu.memory_space<vmem>>, %arg4: memref<64x256xbf16, #tpu.memory_space<vmem>>, %arg5: memref<1x256xf32, #tpu.memory_space<vmem>>, %arg6: memref<16x64xf32, #tpu.memory_space<vmem>>, %arg7: memref<2x64xf32, #tpu.memory_space<vmem>>, %arg8: memref<2x64xf32, #tpu.memory_space<vmem>>) attributes {dimension_semantics = [#tpu.dimension_semantics<arbitrary>], iteration_bounds = array<i64: 1>, scalar_prefetch = 0 : i64, scratch_operands = 2 : i64, tpu.core_type = #tpu.core_type<tc>, window_params = [{pipeline_mode = #tpu.pipeline_mode<synchronous>, transform_indices = @transform_0, window_bounds = array<i64: 2, 1>}, {transform_indices = @transform_1, window_bounds = array<i64: 16, 32>}, {pipeline_mode = #tpu.pipeline_mode<synchronous>, transform_indices = @transform_2, window_bounds = array<i64: 32, 256>}, {pipeline_mode = #tpu.pipeline_mode<synchronous>, transform_indices = @transform_3, window_bounds = array<i64: 64, 256>}, {pipeline_mode = #tpu.pipeline_mode<synchronous>, transform_indices = @transform_4, window_bounds = array<i64: 1, 256>}, {transform_indices = @transform_5, window_bounds = array<i64: 16, 64>}]} {
    %c0_i32 = arith.constant 0 : i32
    %0 = arith.cmpi eq, %arg0, %c0_i32 : i32
    %1 = arith.extui %0 : i1 to i32
    %c0_i32_0 = arith.constant 0 : i32
    %2 = arith.cmpi ne, %1, %c0_i32_0 : i32
    scf.if %2 {
      %cst_68 = arith.constant 0.000000e+00 : f32
      %360 = vector.broadcast %cst_68 : f32 to vector<2x64xf32>
      %c0_69 = arith.constant 0 : index
      %c0_70 = arith.constant 0 : index
      %361 = vector.load %arg7[%c0_69, %c0_70] : memref<2x64xf32, #tpu.memory_space<vmem>>, vector<2x64xf32>
      tpu.vector_store %arg7[%c0_69, %c0_70], %360 {strides = array<i32>} : memref<2x64xf32, #tpu.memory_space<vmem>>, vector<2x64xf32>,
      %cst_71 = arith.constant 0.000000e+00 : f32
      %362 = vector.broadcast %cst_71 : f32 to vector<2x64xf32>
      %c0_72 = arith.constant 0 : index
      %c0_73 = arith.constant 0 : index
      %363 = vector.load %arg8[%c0_72, %c0_73] : memref<2x64xf32, #tpu.memory_space<vmem>>, vector<2x64xf32>
      tpu.vector_store %arg8[%c0_72, %c0_73], %362 {strides = array<i32>} : memref<2x64xf32, #tpu.memory_space<vmem>>, vector<2x64xf32>,
    } else {
    }
    %c0 = arith.constant 0 : index
    %c0_1 = arith.constant 0 : index
    %3 = vector.load %arg2[%c0, %c0_1] : memref<16x32xbf16, #tpu.memory_space<vmem>>, vector<16x32xbf16>
    %c0_2 = arith.constant 0 : index
    %c0_3 = arith.constant 0 : index
    %4 = vector.load %arg3[%c0_2, %c0_3] : memref<32x256xbf16, #tpu.memory_space<vmem>>, vector<32x256xbf16>
    %cst = arith.constant dense<0.000000e+00> : vector<16x256xf32>
    %5 = tpu.matmul %3, %4, %cst {dimension_numbers = #tpu.dot_dimension_numbers<[1], [0], [0], [1], [0, 0, 1, 1], [], []>} : vector<16x32xbf16>, vector<32x256xbf16>, vector<16x256xf32> -> vector<16x256xf32>
    %c0_4 = arith.constant 0 : index
    %c0_5 = arith.constant 0 : index
    %6 = vector.load %arg5[%c0_4, %c0_5] : memref<1x256xf32, #tpu.memory_space<vmem>>, vector<1x256xf32>
    %7 = vector.broadcast %6 : vector<1x256xf32> to vector<16x256xf32>
    %8 = arith.addf %5, %7 : vector<16x256xf32>
    %c0_6 = arith.constant 0 : index
    %c0_7 = arith.constant 0 : index
    %9 = vector.load %arg4[%c0_6, %c0_7] : memref<64x256xbf16, #tpu.memory_space<vmem>>, vector<64x256xbf16>
    %c0_8 = arith.constant 0 : index
    %c0_9 = arith.constant 0 : index
    %10 = vector.load %arg1[%c0_8, %c0_9] : memref<2x1xi32, #tpu.memory_space<vmem>>, vector<2x1xi32>
    %c8_i32 = arith.constant 8 : i32
    %11 = arith.muli %arg0, %c8_i32 : i32
    %c0_10 = arith.constant 0 : index
    %c0_11 = arith.constant 0 : index
    %12 = vector.load %arg7[%c0_10, %c0_11] : memref<2x64xf32, #tpu.memory_space<vmem>>, vector<2x64xf32>
    %c0_12 = arith.constant 0 : index
    %c0_13 = arith.constant 0 : index
    %13 = vector.load %arg8[%c0_12, %c0_13] : memref<2x64xf32, #tpu.memory_space<vmem>>, vector<2x64xf32>
    %14 = vector.extract_strided_slice %8 {offsets = [0, 0], sizes = [2, 256], strides = [1, 1]} : vector<16x256xf32> to vector<2x256xf32>
    %15 = arith.truncf %12 : vector<2x64xf32> to vector<2x64xbf16>
    %cst_14 = arith.constant dense<0.000000e+00> : vector<2x256xf32>
    %16 = tpu.matmul %15, %9, %cst_14 {dimension_numbers = #tpu.dot_dimension_numbers<[1], [0], [0], [1], [0, 0, 1, 1], [], []>} : vector<2x64xbf16>, vector<64x256xbf16>, vector<2x256xf32> -> vector<2x256xf32>
    %17 = arith.addf %14, %16 : vector<2x256xf32>
    %18 = vector.extract_strided_slice %17 {offsets = [0, 0], sizes = [2, 64], strides = [1, 1]} : vector<2x256xf32> to vector<2x64xf32>
    %19 = arith.negf %18 : vector<2x64xf32>
    %20 = math.exp %19 : vector<2x64xf32>
    %cst_15 = arith.constant 1.000000e+00 : f32
    %21 = vector.broadcast %cst_15 : f32 to vector<2x64xf32>
    %22 = arith.addf %21, %20 : vector<2x64xf32>
    %23 = arith.divf %21, %22 : vector<2x64xf32>
    %24 = vector.extract_strided_slice %17 {offsets = [0, 64], sizes = [2, 64], strides = [1, 1]} : vector<2x256xf32> to vector<2x64xf32>
    %25 = arith.negf %24 : vector<2x64xf32>
    %26 = math.exp %25 : vector<2x64xf32>
    %cst_16 = arith.constant 1.000000e+00 : f32
    %27 = vector.broadcast %cst_16 : f32 to vector<2x64xf32>
    %28 = arith.addf %27, %26 : vector<2x64xf32>
    %29 = arith.divf %27, %28 : vector<2x64xf32>
    %30 = vector.extract_strided_slice %17 {offsets = [0, 128], sizes = [2, 64], strides = [1, 1]} : vector<2x256xf32> to vector<2x64xf32>
    %31 = math.tanh %30 : vector<2x64xf32>
    %32 = vector.extract_strided_slice %17 {offsets = [0, 192], sizes = [2, 64], strides = [1, 1]} : vector<2x256xf32> to vector<2x64xf32>
    %33 = arith.negf %32 : vector<2x64xf32>
    %34 = math.exp %33 : vector<2x64xf32>
    %cst_17 = arith.constant 1.000000e+00 : f32
    %35 = vector.broadcast %cst_17 : f32 to vector<2x64xf32>
    %36 = arith.addf %35, %34 : vector<2x64xf32>
    %37 = arith.divf %35, %36 : vector<2x64xf32>
    %38 = arith.mulf %29, %13 : vector<2x64xf32>
    %39 = arith.mulf %23, %31 : vector<2x64xf32>
    %40 = arith.addf %38, %39 : vector<2x64xf32>
    %41 = math.tanh %40 : vector<2x64xf32>
    %42 = arith.mulf %37, %41 : vector<2x64xf32>
    %c0_i32_18 = arith.constant 0 : i32
    %43 = arith.addi %11, %c0_i32_18 : i32
    %44 = vector.broadcast %43 : i32 to vector<2x1xi32>
    %45 = arith.cmpi slt, %44, %10 : vector<2x1xi32>
    %46 = vector.shape_cast %45 : vector<2x1xi1> to vector<2x1xi1>
    %47 = vector.broadcast %46 : vector<2x1xi1> to vector<2x64xi1>
    %48 = arith.select %47, %42, %12 : vector<2x64xi1>, vector<2x64xf32>
    %49 = vector.shape_cast %45 : vector<2x1xi1> to vector<2x1xi1>
    %50 = vector.broadcast %49 : vector<2x1xi1> to vector<2x64xi1>
    %51 = arith.select %50, %40, %13 : vector<2x64xi1>, vector<2x64xf32>
    %cst_19 = arith.constant 0.000000e+00 : f32
    %52 = vector.shape_cast %45 : vector<2x1xi1> to vector<2x1xi1>
    %53 = vector.broadcast %52 : vector<2x1xi1> to vector<2x64xi1>
    %54 = vector.broadcast %cst_19 : f32 to vector<2x64xf32>
    %55 = arith.select %53, %42, %54 : vector<2x64xi1>, vector<2x64xf32>
    %c0_20 = arith.constant 0 : index
    %c0_21 = arith.constant 0 : index
    %56 = vector.load %arg6[%c0_20, %c0_21] : memref<16x64xf32, #tpu.memory_space<vmem>>, vector<2x64xf32>
    tpu.vector_store %arg6[%c0_20, %c0_21], %55 {strides = array<i32>} : memref<16x64xf32, #tpu.memory_space<vmem>>, vector<2x64xf32>,
    %57 = vector.extract_strided_slice %8 {offsets = [2, 0], sizes = [2, 256], strides = [1, 1]} : vector<16x256xf32> to vector<2x256xf32>
    %58 = arith.truncf %48 : vector<2x64xf32> to vector<2x64xbf16>
    %cst_22 = arith.constant dense<0.000000e+00> : vector<2x256xf32>
    %59 = tpu.matmul %58, %9, %cst_22 {dimension_numbers = #tpu.dot_dimension_numbers<[1], [0], [0], [1], [0, 0, 1, 1], [], []>} : vector<2x64xbf16>, vector<64x256xbf16>, vector<2x256xf32> -> vector<2x256xf32>
    %60 = arith.addf %57, %59 : vector<2x256xf32>
    %61 = vector.extract_strided_slice %60 {offsets = [0, 0], sizes = [2, 64], strides = [1, 1]} : vector<2x256xf32> to vector<2x64xf32>
    %62 = arith.negf %61 : vector<2x64xf32>
    %63 = math.exp %62 : vector<2x64xf32>
    %cst_23 = arith.constant 1.000000e+00 : f32
    %64 = vector.broadcast %cst_23 : f32 to vector<2x64xf32>
    %65 = arith.addf %64, %63 : vector<2x64xf32>
    %66 = arith.divf %64, %65 : vector<2x64xf32>
    %67 = vector.extract_strided_slice %60 {offsets = [0, 64], sizes = [2, 64], strides = [1, 1]} : vector<2x256xf32> to vector<2x64xf32>
    %68 = arith.negf %67 : vector<2x64xf32>
    %69 = math.exp %68 : vector<2x64xf32>
    %cst_24 = arith.constant 1.000000e+00 : f32
    %70 = vector.broadcast %cst_24 : f32 to vector<2x64xf32>
    %71 = arith.addf %70, %69 : vector<2x64xf32>
    %72 = arith.divf %70, %71 : vector<2x64xf32>
    %73 = vector.extract_strided_slice %60 {offsets = [0, 128], sizes = [2, 64], strides = [1, 1]} : vector<2x256xf32> to vector<2x64xf32>
    %74 = math.tanh %73 : vector<2x64xf32>
    %75 = vector.extract_strided_slice %60 {offsets = [0, 192], sizes = [2, 64], strides = [1, 1]} : vector<2x256xf32> to vector<2x64xf32>
    %76 = arith.negf %75 : vector<2x64xf32>
    %77 = math.exp %76 : vector<2x64xf32>
    %cst_25 = arith.constant 1.000000e+00 : f32
    %78 = vector.broadcast %cst_25 : f32 to vector<2x64xf32>
    %79 = arith.addf %78, %77 : vector<2x64xf32>
    %80 = arith.divf %78, %79 : vector<2x64xf32>
    %81 = arith.mulf %72, %51 : vector<2x64xf32>
    %82 = arith.mulf %66, %74 : vector<2x64xf32>
    %83 = arith.addf %81, %82 : vector<2x64xf32>
    %84 = math.tanh %83 : vector<2x64xf32>
    %85 = arith.mulf %80, %84 : vector<2x64xf32>
    %c1_i32 = arith.constant 1 : i32
    %86 = arith.addi %11, %c1_i32 : i32
    %87 = vector.broadcast %86 : i32 to vector<2x1xi32>
    %88 = arith.cmpi slt, %87, %10 : vector<2x1xi32>
    %89 = vector.shape_cast %88 : vector<2x1xi1> to vector<2x1xi1>
    %90 = vector.broadcast %89 : vector<2x1xi1> to vector<2x64xi1>
    %91 = arith.select %90, %85, %48 : vector<2x64xi1>, vector<2x64xf32>
    %92 = vector.shape_cast %88 : vector<2x1xi1> to vector<2x1xi1>
    %93 = vector.broadcast %92 : vector<2x1xi1> to vector<2x64xi1>
    %94 = arith.select %93, %83, %51 : vector<2x64xi1>, vector<2x64xf32>
    %cst_26 = arith.constant 0.000000e+00 : f32
    %95 = vector.shape_cast %88 : vector<2x1xi1> to vector<2x1xi1>
    %96 = vector.broadcast %95 : vector<2x1xi1> to vector<2x64xi1>
    %97 = vector.broadcast %cst_26 : f32 to vector<2x64xf32>
    %98 = arith.select %96, %85, %97 : vector<2x64xi1>, vector<2x64xf32>
    %c2 = arith.constant 2 : index
    %c0_27 = arith.constant 0 : index
    %99 = vector.load %arg6[%c2, %c0_27] : memref<16x64xf32, #tpu.memory_space<vmem>>, vector<2x64xf32>
    tpu.vector_store %arg6[%c2, %c0_27], %98 {strides = array<i32>} : memref<16x64xf32, #tpu.memory_space<vmem>>, vector<2x64xf32>,
    %100 = vector.extract_strided_slice %8 {offsets = [4, 0], sizes = [2, 256], strides = [1, 1]} : vector<16x256xf32> to vector<2x256xf32>
    %101 = arith.truncf %91 : vector<2x64xf32> to vector<2x64xbf16>
    %cst_28 = arith.constant dense<0.000000e+00> : vector<2x256xf32>
    %102 = tpu.matmul %101, %9, %cst_28 {dimension_numbers = #tpu.dot_dimension_numbers<[1], [0], [0], [1], [0, 0, 1, 1], [], []>} : vector<2x64xbf16>, vector<64x256xbf16>, vector<2x256xf32> -> vector<2x256xf32>
    %103 = arith.addf %100, %102 : vector<2x256xf32>
    %104 = vector.extract_strided_slice %103 {offsets = [0, 0], sizes = [2, 64], strides = [1, 1]} : vector<2x256xf32> to vector<2x64xf32>
    %105 = arith.negf %104 : vector<2x64xf32>
    %106 = math.exp %105 : vector<2x64xf32>
    %cst_29 = arith.constant 1.000000e+00 : f32
    %107 = vector.broadcast %cst_29 : f32 to vector<2x64xf32>
    %108 = arith.addf %107, %106 : vector<2x64xf32>
    %109 = arith.divf %107, %108 : vector<2x64xf32>
    %110 = vector.extract_strided_slice %103 {offsets = [0, 64], sizes = [2, 64], strides = [1, 1]} : vector<2x256xf32> to vector<2x64xf32>
    %111 = arith.negf %110 : vector<2x64xf32>
    %112 = math.exp %111 : vector<2x64xf32>
    %cst_30 = arith.constant 1.000000e+00 : f32
    %113 = vector.broadcast %cst_30 : f32 to vector<2x64xf32>
    %114 = arith.addf %113, %112 : vector<2x64xf32>
    %115 = arith.divf %113, %114 : vector<2x64xf32>
    %116 = vector.extract_strided_slice %103 {offsets = [0, 128], sizes = [2, 64], strides = [1, 1]} : vector<2x256xf32> to vector<2x64xf32>
    %117 = math.tanh %116 : vector<2x64xf32>
    %118 = vector.extract_strided_slice %103 {offsets = [0, 192], sizes = [2, 64], strides = [1, 1]} : vector<2x256xf32> to vector<2x64xf32>
    %119 = arith.negf %118 : vector<2x64xf32>
    %120 = math.exp %119 : vector<2x64xf32>
    %cst_31 = arith.constant 1.000000e+00 : f32
    %121 = vector.broadcast %cst_31 : f32 to vector<2x64xf32>
    %122 = arith.addf %121, %120 : vector<2x64xf32>
    %123 = arith.divf %121, %122 : vector<2x64xf32>
    %124 = arith.mulf %115, %94 : vector<2x64xf32>
    %125 = arith.mulf %109, %117 : vector<2x64xf32>
    %126 = arith.addf %124, %125 : vector<2x64xf32>
    %127 = math.tanh %126 : vector<2x64xf32>
    %128 = arith.mulf %123, %127 : vector<2x64xf32>
    %c2_i32 = arith.constant 2 : i32
    %129 = arith.addi %11, %c2_i32 : i32
    %130 = vector.broadcast %129 : i32 to vector<2x1xi32>
    %131 = arith.cmpi slt, %130, %10 : vector<2x1xi32>
    %132 = vector.shape_cast %131 : vector<2x1xi1> to vector<2x1xi1>
    %133 = vector.broadcast %132 : vector<2x1xi1> to vector<2x64xi1>
    %134 = arith.select %133, %128, %91 : vector<2x64xi1>, vector<2x64xf32>
    %135 = vector.shape_cast %131 : vector<2x1xi1> to vector<2x1xi1>
    %136 = vector.broadcast %135 : vector<2x1xi1> to vector<2x64xi1>
    %137 = arith.select %136, %126, %94 : vector<2x64xi1>, vector<2x64xf32>
    %cst_32 = arith.constant 0.000000e+00 : f32
    %138 = vector.shape_cast %131 : vector<2x1xi1> to vector<2x1xi1>
    %139 = vector.broadcast %138 : vector<2x1xi1> to vector<2x64xi1>
    %140 = vector.broadcast %cst_32 : f32 to vector<2x64xf32>
    %141 = arith.select %139, %128, %140 : vector<2x64xi1>, vector<2x64xf32>
    %c4 = arith.constant 4 : index
    %c0_33 = arith.constant 0 : index
    %142 = vector.load %arg6[%c4, %c0_33] : memref<16x64xf32, #tpu.memory_space<vmem>>, vector<2x64xf32>
    tpu.vector_store %arg6[%c4, %c0_33], %141 {strides = array<i32>} : memref<16x64xf32, #tpu.memory_space<vmem>>, vector<2x64xf32>,
    %143 = vector.extract_strided_slice %8 {offsets = [6, 0], sizes = [2, 256], strides = [1, 1]} : vector<16x256xf32> to vector<2x256xf32>
    %144 = arith.truncf %134 : vector<2x64xf32> to vector<2x64xbf16>
    %cst_34 = arith.constant dense<0.000000e+00> : vector<2x256xf32>
    %145 = tpu.matmul %144, %9, %cst_34 {dimension_numbers = #tpu.dot_dimension_numbers<[1], [0], [0], [1], [0, 0, 1, 1], [], []>} : vector<2x64xbf16>, vector<64x256xbf16>, vector<2x256xf32> -> vector<2x256xf32>
    %146 = arith.addf %143, %145 : vector<2x256xf32>
    %147 = vector.extract_strided_slice %146 {offsets = [0, 0], sizes = [2, 64], strides = [1, 1]} : vector<2x256xf32> to vector<2x64xf32>
    %148 = arith.negf %147 : vector<2x64xf32>
    %149 = math.exp %148 : vector<2x64xf32>
    %cst_35 = arith.constant 1.000000e+00 : f32
    %150 = vector.broadcast %cst_35 : f32 to vector<2x64xf32>
    %151 = arith.addf %150, %149 : vector<2x64xf32>
    %152 = arith.divf %150, %151 : vector<2x64xf32>
    %153 = vector.extract_strided_slice %146 {offsets = [0, 64], sizes = [2, 64], strides = [1, 1]} : vector<2x256xf32> to vector<2x64xf32>
    %154 = arith.negf %153 : vector<2x64xf32>
    %155 = math.exp %154 : vector<2x64xf32>
    %cst_36 = arith.constant 1.000000e+00 : f32
    %156 = vector.broadcast %cst_36 : f32 to vector<2x64xf32>
    %157 = arith.addf %156, %155 : vector<2x64xf32>
    %158 = arith.divf %156, %157 : vector<2x64xf32>
    %159 = vector.extract_strided_slice %146 {offsets = [0, 128], sizes = [2, 64], strides = [1, 1]} : vector<2x256xf32> to vector<2x64xf32>
    %160 = math.tanh %159 : vector<2x64xf32>
    %161 = vector.extract_strided_slice %146 {offsets = [0, 192], sizes = [2, 64], strides = [1, 1]} : vector<2x256xf32> to vector<2x64xf32>
    %162 = arith.negf %161 : vector<2x64xf32>
    %163 = math.exp %162 : vector<2x64xf32>
    %cst_37 = arith.constant 1.000000e+00 : f32
    %164 = vector.broadcast %cst_37 : f32 to vector<2x64xf32>
    %165 = arith.addf %164, %163 : vector<2x64xf32>
    %166 = arith.divf %164, %165 : vector<2x64xf32>
    %167 = arith.mulf %158, %137 : vector<2x64xf32>
    %168 = arith.mulf %152, %160 : vector<2x64xf32>
    %169 = arith.addf %167, %168 : vector<2x64xf32>
    %170 = math.tanh %169 : vector<2x64xf32>
    %171 = arith.mulf %166, %170 : vector<2x64xf32>
    %c3_i32 = arith.constant 3 : i32
    %172 = arith.addi %11, %c3_i32 : i32
    %173 = vector.broadcast %172 : i32 to vector<2x1xi32>
    %174 = arith.cmpi slt, %173, %10 : vector<2x1xi32>
    %175 = vector.shape_cast %174 : vector<2x1xi1> to vector<2x1xi1>
    %176 = vector.broadcast %175 : vector<2x1xi1> to vector<2x64xi1>
    %177 = arith.select %176, %171, %134 : vector<2x64xi1>, vector<2x64xf32>
    %178 = vector.shape_cast %174 : vector<2x1xi1> to vector<2x1xi1>
    %179 = vector.broadcast %178 : vector<2x1xi1> to vector<2x64xi1>
    %180 = arith.select %179, %169, %137 : vector<2x64xi1>, vector<2x64xf32>
    %cst_38 = arith.constant 0.000000e+00 : f32
    %181 = vector.shape_cast %174 : vector<2x1xi1> to vector<2x1xi1>
    %182 = vector.broadcast %181 : vector<2x1xi1> to vector<2x64xi1>
    %183 = vector.broadcast %cst_38 : f32 to vector<2x64xf32>
    %184 = arith.select %182, %171, %183 : vector<2x64xi1>, vector<2x64xf32>
    %c6 = arith.constant 6 : index
    %c0_39 = arith.constant 0 : index
    %185 = vector.load %arg6[%c6, %c0_39] : memref<16x64xf32, #tpu.memory_space<vmem>>, vector<2x64xf32>
    tpu.vector_store %arg6[%c6, %c0_39], %184 {strides = array<i32>} : memref<16x64xf32, #tpu.memory_space<vmem>>, vector<2x64xf32>,
    %186 = vector.extract_strided_slice %8 {offsets = [8, 0], sizes = [2, 256], strides = [1, 1]} : vector<16x256xf32> to vector<2x256xf32>
    %187 = arith.truncf %177 : vector<2x64xf32> to vector<2x64xbf16>
    %cst_40 = arith.constant dense<0.000000e+00> : vector<2x256xf32>
    %188 = tpu.matmul %187, %9, %cst_40 {dimension_numbers = #tpu.dot_dimension_numbers<[1], [0], [0], [1], [0, 0, 1, 1], [], []>} : vector<2x64xbf16>, vector<64x256xbf16>, vector<2x256xf32> -> vector<2x256xf32>
    %189 = arith.addf %186, %188 : vector<2x256xf32>
    %190 = vector.extract_strided_slice %189 {offsets = [0, 0], sizes = [2, 64], strides = [1, 1]} : vector<2x256xf32> to vector<2x64xf32>
    %191 = arith.negf %190 : vector<2x64xf32>
    %192 = math.exp %191 : vector<2x64xf32>
    %cst_41 = arith.constant 1.000000e+00 : f32
    %193 = vector.broadcast %cst_41 : f32 to vector<2x64xf32>
    %194 = arith.addf %193, %192 : vector<2x64xf32>
    %195 = arith.divf %193, %194 : vector<2x64xf32>
    %196 = vector.extract_strided_slice %189 {offsets = [0, 64], sizes = [2, 64], strides = [1, 1]} : vector<2x256xf32> to vector<2x64xf32>
    %197 = arith.negf %196 : vector<2x64xf32>
    %198 = math.exp %197 : vector<2x64xf32>
    %cst_42 = arith.constant 1.000000e+00 : f32
    %199 = vector.broadcast %cst_42 : f32 to vector<2x64xf32>
    %200 = arith.addf %199, %198 : vector<2x64xf32>
    %201 = arith.divf %199, %200 : vector<2x64xf32>
    %202 = vector.extract_strided_slice %189 {offsets = [0, 128], sizes = [2, 64], strides = [1, 1]} : vector<2x256xf32> to vector<2x64xf32>
    %203 = math.tanh %202 : vector<2x64xf32>
    %204 = vector.extract_strided_slice %189 {offsets = [0, 192], sizes = [2, 64], strides = [1, 1]} : vector<2x256xf32> to vector<2x64xf32>
    %205 = arith.negf %204 : vector<2x64xf32>
    %206 = math.exp %205 : vector<2x64xf32>
    %cst_43 = arith.constant 1.000000e+00 : f32
    %207 = vector.broadcast %cst_43 : f32 to vector<2x64xf32>
    %208 = arith.addf %207, %206 : vector<2x64xf32>
    %209 = arith.divf %207, %208 : vector<2x64xf32>
    %210 = arith.mulf %201, %180 : vector<2x64xf32>
    %211 = arith.mulf %195, %203 : vector<2x64xf32>
    %212 = arith.addf %210, %211 : vector<2x64xf32>
    %213 = math.tanh %212 : vector<2x64xf32>
    %214 = arith.mulf %209, %213 : vector<2x64xf32>
    %c4_i32 = arith.constant 4 : i32
    %215 = arith.addi %11, %c4_i32 : i32
    %216 = vector.broadcast %215 : i32 to vector<2x1xi32>
    %217 = arith.cmpi slt, %216, %10 : vector<2x1xi32>
    %218 = vector.shape_cast %217 : vector<2x1xi1> to vector<2x1xi1>
    %219 = vector.broadcast %218 : vector<2x1xi1> to vector<2x64xi1>
    %220 = arith.select %219, %214, %177 : vector<2x64xi1>, vector<2x64xf32>
    %221 = vector.shape_cast %217 : vector<2x1xi1> to vector<2x1xi1>
    %222 = vector.broadcast %221 : vector<2x1xi1> to vector<2x64xi1>
    %223 = arith.select %222, %212, %180 : vector<2x64xi1>, vector<2x64xf32>
    %cst_44 = arith.constant 0.000000e+00 : f32
    %224 = vector.shape_cast %217 : vector<2x1xi1> to vector<2x1xi1>
    %225 = vector.broadcast %224 : vector<2x1xi1> to vector<2x64xi1>
    %226 = vector.broadcast %cst_44 : f32 to vector<2x64xf32>
    %227 = arith.select %225, %214, %226 : vector<2x64xi1>, vector<2x64xf32>
    %c8 = arith.constant 8 : index
    %c0_45 = arith.constant 0 : index
    %228 = vector.load %arg6[%c8, %c0_45] : memref<16x64xf32, #tpu.memory_space<vmem>>, vector<2x64xf32>
    tpu.vector_store %arg6[%c8, %c0_45], %227 {strides = array<i32>} : memref<16x64xf32, #tpu.memory_space<vmem>>, vector<2x64xf32>,
    %229 = vector.extract_strided_slice %8 {offsets = [10, 0], sizes = [2, 256], strides = [1, 1]} : vector<16x256xf32> to vector<2x256xf32>
    %230 = arith.truncf %220 : vector<2x64xf32> to vector<2x64xbf16>
    %cst_46 = arith.constant dense<0.000000e+00> : vector<2x256xf32>
    %231 = tpu.matmul %230, %9, %cst_46 {dimension_numbers = #tpu.dot_dimension_numbers<[1], [0], [0], [1], [0, 0, 1, 1], [], []>} : vector<2x64xbf16>, vector<64x256xbf16>, vector<2x256xf32> -> vector<2x256xf32>
    %232 = arith.addf %229, %231 : vector<2x256xf32>
    %233 = vector.extract_strided_slice %232 {offsets = [0, 0], sizes = [2, 64], strides = [1, 1]} : vector<2x256xf32> to vector<2x64xf32>
    %234 = arith.negf %233 : vector<2x64xf32>
    %235 = math.exp %234 : vector<2x64xf32>
    %cst_47 = arith.constant 1.000000e+00 : f32
    %236 = vector.broadcast %cst_47 : f32 to vector<2x64xf32>
    %237 = arith.addf %236, %235 : vector<2x64xf32>
    %238 = arith.divf %236, %237 : vector<2x64xf32>
    %239 = vector.extract_strided_slice %232 {offsets = [0, 64], sizes = [2, 64], strides = [1, 1]} : vector<2x256xf32> to vector<2x64xf32>
    %240 = arith.negf %239 : vector<2x64xf32>
    %241 = math.exp %240 : vector<2x64xf32>
    %cst_48 = arith.constant 1.000000e+00 : f32
    %242 = vector.broadcast %cst_48 : f32 to vector<2x64xf32>
    %243 = arith.addf %242, %241 : vector<2x64xf32>
    %244 = arith.divf %242, %243 : vector<2x64xf32>
    %245 = vector.extract_strided_slice %232 {offsets = [0, 128], sizes = [2, 64], strides = [1, 1]} : vector<2x256xf32> to vector<2x64xf32>
    %246 = math.tanh %245 : vector<2x64xf32>
    %247 = vector.extract_strided_slice %232 {offsets = [0, 192], sizes = [2, 64], strides = [1, 1]} : vector<2x256xf32> to vector<2x64xf32>
    %248 = arith.negf %247 : vector<2x64xf32>
    %249 = math.exp %248 : vector<2x64xf32>
    %cst_49 = arith.constant 1.000000e+00 : f32
    %250 = vector.broadcast %cst_49 : f32 to vector<2x64xf32>
    %251 = arith.addf %250, %249 : vector<2x64xf32>
    %252 = arith.divf %250, %251 : vector<2x64xf32>
    %253 = arith.mulf %244, %223 : vector<2x64xf32>
    %254 = arith.mulf %238, %246 : vector<2x64xf32>
    %255 = arith.addf %253, %254 : vector<2x64xf32>
    %256 = math.tanh %255 : vector<2x64xf32>
    %257 = arith.mulf %252, %256 : vector<2x64xf32>
    %c5_i32 = arith.constant 5 : i32
    %258 = arith.addi %11, %c5_i32 : i32
    %259 = vector.broadcast %258 : i32 to vector<2x1xi32>
    %260 = arith.cmpi slt, %259, %10 : vector<2x1xi32>
    %261 = vector.shape_cast %260 : vector<2x1xi1> to vector<2x1xi1>
    %262 = vector.broadcast %261 : vector<2x1xi1> to vector<2x64xi1>
    %263 = arith.select %262, %257, %220 : vector<2x64xi1>, vector<2x64xf32>
    %264 = vector.shape_cast %260 : vector<2x1xi1> to vector<2x1xi1>
    %265 = vector.broadcast %264 : vector<2x1xi1> to vector<2x64xi1>
    %266 = arith.select %265, %255, %223 : vector<2x64xi1>, vector<2x64xf32>
    %cst_50 = arith.constant 0.000000e+00 : f32
    %267 = vector.shape_cast %260 : vector<2x1xi1> to vector<2x1xi1>
    %268 = vector.broadcast %267 : vector<2x1xi1> to vector<2x64xi1>
    %269 = vector.broadcast %cst_50 : f32 to vector<2x64xf32>
    %270 = arith.select %268, %257, %269 : vector<2x64xi1>, vector<2x64xf32>
    %c10 = arith.constant 10 : index
    %c0_51 = arith.constant 0 : index
    %271 = vector.load %arg6[%c10, %c0_51] : memref<16x64xf32, #tpu.memory_space<vmem>>, vector<2x64xf32>
    tpu.vector_store %arg6[%c10, %c0_51], %270 {strides = array<i32>} : memref<16x64xf32, #tpu.memory_space<vmem>>, vector<2x64xf32>,
    %272 = vector.extract_strided_slice %8 {offsets = [12, 0], sizes = [2, 256], strides = [1, 1]} : vector<16x256xf32> to vector<2x256xf32>
    %273 = arith.truncf %263 : vector<2x64xf32> to vector<2x64xbf16>
    %cst_52 = arith.constant dense<0.000000e+00> : vector<2x256xf32>
    %274 = tpu.matmul %273, %9, %cst_52 {dimension_numbers = #tpu.dot_dimension_numbers<[1], [0], [0], [1], [0, 0, 1, 1], [], []>} : vector<2x64xbf16>, vector<64x256xbf16>, vector<2x256xf32> -> vector<2x256xf32>
    %275 = arith.addf %272, %274 : vector<2x256xf32>
    %276 = vector.extract_strided_slice %275 {offsets = [0, 0], sizes = [2, 64], strides = [1, 1]} : vector<2x256xf32> to vector<2x64xf32>
    %277 = arith.negf %276 : vector<2x64xf32>
    %278 = math.exp %277 : vector<2x64xf32>
    %cst_53 = arith.constant 1.000000e+00 : f32
    %279 = vector.broadcast %cst_53 : f32 to vector<2x64xf32>
    %280 = arith.addf %279, %278 : vector<2x64xf32>
    %281 = arith.divf %279, %280 : vector<2x64xf32>
    %282 = vector.extract_strided_slice %275 {offsets = [0, 64], sizes = [2, 64], strides = [1, 1]} : vector<2x256xf32> to vector<2x64xf32>
    %283 = arith.negf %282 : vector<2x64xf32>
    %284 = math.exp %283 : vector<2x64xf32>
    %cst_54 = arith.constant 1.000000e+00 : f32
    %285 = vector.broadcast %cst_54 : f32 to vector<2x64xf32>
    %286 = arith.addf %285, %284 : vector<2x64xf32>
    %287 = arith.divf %285, %286 : vector<2x64xf32>
    %288 = vector.extract_strided_slice %275 {offsets = [0, 128], sizes = [2, 64], strides = [1, 1]} : vector<2x256xf32> to vector<2x64xf32>
    %289 = math.tanh %288 : vector<2x64xf32>
    %290 = vector.extract_strided_slice %275 {offsets = [0, 192], sizes = [2, 64], strides = [1, 1]} : vector<2x256xf32> to vector<2x64xf32>
    %291 = arith.negf %290 : vector<2x64xf32>
    %292 = math.exp %291 : vector<2x64xf32>
    %cst_55 = arith.constant 1.000000e+00 : f32
    %293 = vector.broadcast %cst_55 : f32 to vector<2x64xf32>
    %294 = arith.addf %293, %292 : vector<2x64xf32>
    %295 = arith.divf %293, %294 : vector<2x64xf32>
    %296 = arith.mulf %287, %266 : vector<2x64xf32>
    %297 = arith.mulf %281, %289 : vector<2x64xf32>
    %298 = arith.addf %296, %297 : vector<2x64xf32>
    %299 = math.tanh %298 : vector<2x64xf32>
    %300 = arith.mulf %295, %299 : vector<2x64xf32>
    %c6_i32 = arith.constant 6 : i32
    %301 = arith.addi %11, %c6_i32 : i32
    %302 = vector.broadcast %301 : i32 to vector<2x1xi32>
    %303 = arith.cmpi slt, %302, %10 : vector<2x1xi32>
    %304 = vector.shape_cast %303 : vector<2x1xi1> to vector<2x1xi1>
    %305 = vector.broadcast %304 : vector<2x1xi1> to vector<2x64xi1>
    %306 = arith.select %305, %300, %263 : vector<2x64xi1>, vector<2x64xf32>
    %307 = vector.shape_cast %303 : vector<2x1xi1> to vector<2x1xi1>
    %308 = vector.broadcast %307 : vector<2x1xi1> to vector<2x64xi1>
    %309 = arith.select %308, %298, %266 : vector<2x64xi1>, vector<2x64xf32>
    %cst_56 = arith.constant 0.000000e+00 : f32
    %310 = vector.shape_cast %303 : vector<2x1xi1> to vector<2x1xi1>
    %311 = vector.broadcast %310 : vector<2x1xi1> to vector<2x64xi1>
    %312 = vector.broadcast %cst_56 : f32 to vector<2x64xf32>
    %313 = arith.select %311, %300, %312 : vector<2x64xi1>, vector<2x64xf32>
    %c12 = arith.constant 12 : index
    %c0_57 = arith.constant 0 : index
    %314 = vector.load %arg6[%c12, %c0_57] : memref<16x64xf32, #tpu.memory_space<vmem>>, vector<2x64xf32>
    tpu.vector_store %arg6[%c12, %c0_57], %313 {strides = array<i32>} : memref<16x64xf32, #tpu.memory_space<vmem>>, vector<2x64xf32>,
    %315 = vector.extract_strided_slice %8 {offsets = [14, 0], sizes = [2, 256], strides = [1, 1]} : vector<16x256xf32> to vector<2x256xf32>
    %316 = arith.truncf %306 : vector<2x64xf32> to vector<2x64xbf16>
    %cst_58 = arith.constant dense<0.000000e+00> : vector<2x256xf32>
    %317 = tpu.matmul %316, %9, %cst_58 {dimension_numbers = #tpu.dot_dimension_numbers<[1], [0], [0], [1], [0, 0, 1, 1], [], []>} : vector<2x64xbf16>, vector<64x256xbf16>, vector<2x256xf32> -> vector<2x256xf32>
    %318 = arith.addf %315, %317 : vector<2x256xf32>
    %319 = vector.extract_strided_slice %318 {offsets = [0, 0], sizes = [2, 64], strides = [1, 1]} : vector<2x256xf32> to vector<2x64xf32>
    %320 = arith.negf %319 : vector<2x64xf32>
    %321 = math.exp %320 : vector<2x64xf32>
    %cst_59 = arith.constant 1.000000e+00 : f32
    %322 = vector.broadcast %cst_59 : f32 to vector<2x64xf32>
    %323 = arith.addf %322, %321 : vector<2x64xf32>
    %324 = arith.divf %322, %323 : vector<2x64xf32>
    %325 = vector.extract_strided_slice %318 {offsets = [0, 64], sizes = [2, 64], strides = [1, 1]} : vector<2x256xf32> to vector<2x64xf32>
    %326 = arith.negf %325 : vector<2x64xf32>
    %327 = math.exp %326 : vector<2x64xf32>
    %cst_60 = arith.constant 1.000000e+00 : f32
    %328 = vector.broadcast %cst_60 : f32 to vector<2x64xf32>
    %329 = arith.addf %328, %327 : vector<2x64xf32>
    %330 = arith.divf %328, %329 : vector<2x64xf32>
    %331 = vector.extract_strided_slice %318 {offsets = [0, 128], sizes = [2, 64], strides = [1, 1]} : vector<2x256xf32> to vector<2x64xf32>
    %332 = math.tanh %331 : vector<2x64xf32>
    %333 = vector.extract_strided_slice %318 {offsets = [0, 192], sizes = [2, 64], strides = [1, 1]} : vector<2x256xf32> to vector<2x64xf32>
    %334 = arith.negf %333 : vector<2x64xf32>
    %335 = math.exp %334 : vector<2x64xf32>
    %cst_61 = arith.constant 1.000000e+00 : f32
    %336 = vector.broadcast %cst_61 : f32 to vector<2x64xf32>
    %337 = arith.addf %336, %335 : vector<2x64xf32>
    %338 = arith.divf %336, %337 : vector<2x64xf32>
    %339 = arith.mulf %330, %309 : vector<2x64xf32>
    %340 = arith.mulf %324, %332 : vector<2x64xf32>
    %341 = arith.addf %339, %340 : vector<2x64xf32>
    %342 = math.tanh %341 : vector<2x64xf32>
    %343 = arith.mulf %338, %342 : vector<2x64xf32>
    %c7_i32 = arith.constant 7 : i32
    %344 = arith.addi %11, %c7_i32 : i32
    %345 = vector.broadcast %344 : i32 to vector<2x1xi32>
    %346 = arith.cmpi slt, %345, %10 : vector<2x1xi32>
    %347 = vector.shape_cast %346 : vector<2x1xi1> to vector<2x1xi1>
    %348 = vector.broadcast %347 : vector<2x1xi1> to vector<2x64xi1>
    %349 = arith.select %348, %343, %306 : vector<2x64xi1>, vector<2x64xf32>
    %350 = vector.shape_cast %346 : vector<2x1xi1> to vector<2x1xi1>
    %351 = vector.broadcast %350 : vector<2x1xi1> to vector<2x64xi1>
    %352 = arith.select %351, %341, %309 : vector<2x64xi1>, vector<2x64xf32>
    %cst_62 = arith.constant 0.000000e+00 : f32
    %353 = vector.shape_cast %346 : vector<2x1xi1> to vector<2x1xi1>
    %354 = vector.broadcast %353 : vector<2x1xi1> to vector<2x64xi1>
    %355 = vector.broadcast %cst_62 : f32 to vector<2x64xf32>
    %356 = arith.select %354, %343, %355 : vector<2x64xi1>, vector<2x64xf32>
    %c14 = arith.constant 14 : index
    %c0_63 = arith.constant 0 : index
    %357 = vector.load %arg6[%c14, %c0_63] : memref<16x64xf32, #tpu.memory_space<vmem>>, vector<2x64xf32>
    tpu.vector_store %arg6[%c14, %c0_63], %356 {strides = array<i32>} : memref<16x64xf32, #tpu.memory_space<vmem>>, vector<2x64xf32>,
    %c0_64 = arith.constant 0 : index
    %c0_65 = arith.constant 0 : index
    %358 = vector.load %arg7[%c0_64, %c0_65] : memref<2x64xf32, #tpu.memory_space<vmem>>, vector<2x64xf32>
    tpu.vector_store %arg7[%c0_64, %c0_65], %349 {strides = array<i32>} : memref<2x64xf32, #tpu.memory_space<vmem>>, vector<2x64xf32>,
    %c0_66 = arith.constant 0 : index
    %c0_67 = arith.constant 0 : index
    %359 = vector.load %arg8[%c0_66, %c0_67] : memref<2x64xf32, #tpu.memory_space<vmem>>, vector<2x64xf32>
    tpu.vector_store %arg8[%c0_66, %c0_67], %352 {strides = array<i32>} : memref<2x64xf32, #tpu.memory_space<vmem>>, vector<2x64xf32>,
    return
  }
  func.func @transform_0(%arg0: i32) -> (i32, i32) {
    %c0_i32 = arith.constant 0 : i32
    %c0_i32_0 = arith.constant 0 : i32
    %c0_i32_1 = arith.constant 0 : i32
    return %c0_i32, %c0_i32_0 : i32, i32
  }
  func.func @transform_1(%arg0: i32) -> (i32, i32) {
    %c0_i32 = arith.constant 0 : i32
    %c0_i32_0 = arith.constant 0 : i32
    return %arg0, %c0_i32 : i32, i32
  }
  func.func @transform_2(%arg0: i32) -> (i32, i32) {
    %c0_i32 = arith.constant 0 : i32
    %c0_i32_0 = arith.constant 0 : i32
    %c0_i32_1 = arith.constant 0 : i32
    return %c0_i32, %c0_i32_0 : i32, i32
  }
  func.func @transform_3(%arg0: i32) -> (i32, i32) {
    %c0_i32 = arith.constant 0 : i32
    %c0_i32_0 = arith.constant 0 : i32
    %c0_i32_1 = arith.constant 0 : i32
    return %c0_i32, %c0_i32_0 : i32, i32
  }
  func.func @transform_4(%arg0: i32) -> (i32, i32) {
    %c0_i32 = arith.constant 0 : i32
    %c0_i32_0 = arith.constant 0 : i32
    %c0_i32_1 = arith.constant 0 : i32
    return %c0_i32, %c0_i32_0 : i32, i32
  }
  func.func @transform_5(%arg0: i32) -> (i32, i32) {
    %c0_i32 = arith.constant 0 : i32
    %c0_i32_0 = arith.constant 0 : i32
    return %arg0, %c0_i32 : i32, i32
  }
}

module attributes {stable_mosaic.version = 11 : i64} {
  func.func @_bilstm_kernel(%arg0: i32, %arg1: memref<2x1xi32, #tpu.memory_space<vmem>>, %arg2: memref<16x128xbf16, #tpu.memory_space<vmem>>, %arg3: memref<128x256xbf16, #tpu.memory_space<vmem>>, %arg4: memref<64x256xbf16, #tpu.memory_space<vmem>>, %arg5: memref<1x256xf32, #tpu.memory_space<vmem>>, %arg6: memref<16x64xf32, #tpu.memory_space<vmem>>, %arg7: memref<2x64xf32, #tpu.memory_space<vmem>>, %arg8: memref<2x64xf32, #tpu.memory_space<vmem>>) attributes {dimension_semantics = [#tpu.dimension_semantics<arbitrary>], iteration_bounds = array<i64: 1>, scalar_prefetch = 0 : i64, scratch_operands = 2 : i64, tpu.core_type = #tpu.core_type<tc>, window_params = [{pipeline_mode = #tpu.pipeline_mode<synchronous>, transform_indices = @transform_0, window_bounds = array<i64: 2, 1>}, {transform_indices = @transform_1, window_bounds = array<i64: 16, 128>}, {pipeline_mode = #tpu.pipeline_mode<synchronous>, transform_indices = @transform_2, window_bounds = array<i64: 128, 256>}, {pipeline_mode = #tpu.pipeline_mode<synchronous>, transform_indices = @transform_3, window_bounds = array<i64: 64, 256>}, {pipeline_mode = #tpu.pipeline_mode<synchronous>, transform_indices = @transform_4, window_bounds = array<i64: 1, 256>}, {transform_indices = @transform_5, window_bounds = array<i64: 16, 64>}]} {
    %c0_i32 = arith.constant 0 : i32
    %0 = arith.cmpi eq, %arg0, %c0_i32 : i32
    %1 = arith.extui %0 : i1 to i32
    %c0_i32_0 = arith.constant 0 : i32
    %2 = arith.cmpi ne, %1, %c0_i32_0 : i32
    scf.if %2 {
      %cst_68 = arith.constant 0.000000e+00 : f32
      %360 = vector.broadcast %cst_68 : f32 to vector<2x64xf32>
      %c0_69 = arith.constant 0 : index
      %c0_70 = arith.constant 0 : index
      %361 = vector.load %arg7[%c0_69, %c0_70] : memref<2x64xf32, #tpu.memory_space<vmem>>, vector<2x64xf32>
      tpu.vector_store %arg7[%c0_69, %c0_70], %360 {strides = array<i32>} : memref<2x64xf32, #tpu.memory_space<vmem>>, vector<2x64xf32>,
      %cst_71 = arith.constant 0.000000e+00 : f32
      %362 = vector.broadcast %cst_71 : f32 to vector<2x64xf32>
      %c0_72 = arith.constant 0 : index
      %c0_73 = arith.constant 0 : index
      %363 = vector.load %arg8[%c0_72, %c0_73] : memref<2x64xf32, #tpu.memory_space<vmem>>, vector<2x64xf32>
      tpu.vector_store %arg8[%c0_72, %c0_73], %362 {strides = array<i32>} : memref<2x64xf32, #tpu.memory_space<vmem>>, vector<2x64xf32>,
    } else {
    }
    %c0 = arith.constant 0 : index
    %c0_1 = arith.constant 0 : index
    %3 = vector.load %arg2[%c0, %c0_1] : memref<16x128xbf16, #tpu.memory_space<vmem>>, vector<16x128xbf16>
    %c0_2 = arith.constant 0 : index
    %c0_3 = arith.constant 0 : index
    %4 = vector.load %arg3[%c0_2, %c0_3] : memref<128x256xbf16, #tpu.memory_space<vmem>>, vector<128x256xbf16>
    %cst = arith.constant dense<0.000000e+00> : vector<16x256xf32>
    %5 = tpu.matmul %3, %4, %cst {dimension_numbers = #tpu.dot_dimension_numbers<[1], [0], [0], [1], [0, 0, 1, 1], [], []>} : vector<16x128xbf16>, vector<128x256xbf16>, vector<16x256xf32> -> vector<16x256xf32>
    %c0_4 = arith.constant 0 : index
    %c0_5 = arith.constant 0 : index
    %6 = vector.load %arg5[%c0_4, %c0_5] : memref<1x256xf32, #tpu.memory_space<vmem>>, vector<1x256xf32>
    %7 = vector.broadcast %6 : vector<1x256xf32> to vector<16x256xf32>
    %8 = arith.addf %5, %7 : vector<16x256xf32>
    %c0_6 = arith.constant 0 : index
    %c0_7 = arith.constant 0 : index
    %9 = vector.load %arg4[%c0_6, %c0_7] : memref<64x256xbf16, #tpu.memory_space<vmem>>, vector<64x256xbf16>
    %c0_8 = arith.constant 0 : index
    %c0_9 = arith.constant 0 : index
    %10 = vector.load %arg1[%c0_8, %c0_9] : memref<2x1xi32, #tpu.memory_space<vmem>>, vector<2x1xi32>
    %c8_i32 = arith.constant 8 : i32
    %11 = arith.muli %arg0, %c8_i32 : i32
    %c0_10 = arith.constant 0 : index
    %c0_11 = arith.constant 0 : index
    %12 = vector.load %arg7[%c0_10, %c0_11] : memref<2x64xf32, #tpu.memory_space<vmem>>, vector<2x64xf32>
    %c0_12 = arith.constant 0 : index
    %c0_13 = arith.constant 0 : index
    %13 = vector.load %arg8[%c0_12, %c0_13] : memref<2x64xf32, #tpu.memory_space<vmem>>, vector<2x64xf32>
    %14 = vector.extract_strided_slice %8 {offsets = [0, 0], sizes = [2, 256], strides = [1, 1]} : vector<16x256xf32> to vector<2x256xf32>
    %15 = arith.truncf %12 : vector<2x64xf32> to vector<2x64xbf16>
    %cst_14 = arith.constant dense<0.000000e+00> : vector<2x256xf32>
    %16 = tpu.matmul %15, %9, %cst_14 {dimension_numbers = #tpu.dot_dimension_numbers<[1], [0], [0], [1], [0, 0, 1, 1], [], []>} : vector<2x64xbf16>, vector<64x256xbf16>, vector<2x256xf32> -> vector<2x256xf32>
    %17 = arith.addf %14, %16 : vector<2x256xf32>
    %18 = vector.extract_strided_slice %17 {offsets = [0, 0], sizes = [2, 64], strides = [1, 1]} : vector<2x256xf32> to vector<2x64xf32>
    %19 = arith.negf %18 : vector<2x64xf32>
    %20 = math.exp %19 : vector<2x64xf32>
    %cst_15 = arith.constant 1.000000e+00 : f32
    %21 = vector.broadcast %cst_15 : f32 to vector<2x64xf32>
    %22 = arith.addf %21, %20 : vector<2x64xf32>
    %23 = arith.divf %21, %22 : vector<2x64xf32>
    %24 = vector.extract_strided_slice %17 {offsets = [0, 64], sizes = [2, 64], strides = [1, 1]} : vector<2x256xf32> to vector<2x64xf32>
    %25 = arith.negf %24 : vector<2x64xf32>
    %26 = math.exp %25 : vector<2x64xf32>
    %cst_16 = arith.constant 1.000000e+00 : f32
    %27 = vector.broadcast %cst_16 : f32 to vector<2x64xf32>
    %28 = arith.addf %27, %26 : vector<2x64xf32>
    %29 = arith.divf %27, %28 : vector<2x64xf32>
    %30 = vector.extract_strided_slice %17 {offsets = [0, 128], sizes = [2, 64], strides = [1, 1]} : vector<2x256xf32> to vector<2x64xf32>
    %31 = math.tanh %30 : vector<2x64xf32>
    %32 = vector.extract_strided_slice %17 {offsets = [0, 192], sizes = [2, 64], strides = [1, 1]} : vector<2x256xf32> to vector<2x64xf32>
    %33 = arith.negf %32 : vector<2x64xf32>
    %34 = math.exp %33 : vector<2x64xf32>
    %cst_17 = arith.constant 1.000000e+00 : f32
    %35 = vector.broadcast %cst_17 : f32 to vector<2x64xf32>
    %36 = arith.addf %35, %34 : vector<2x64xf32>
    %37 = arith.divf %35, %36 : vector<2x64xf32>
    %38 = arith.mulf %29, %13 : vector<2x64xf32>
    %39 = arith.mulf %23, %31 : vector<2x64xf32>
    %40 = arith.addf %38, %39 : vector<2x64xf32>
    %41 = math.tanh %40 : vector<2x64xf32>
    %42 = arith.mulf %37, %41 : vector<2x64xf32>
    %c0_i32_18 = arith.constant 0 : i32
    %43 = arith.addi %11, %c0_i32_18 : i32
    %44 = vector.broadcast %43 : i32 to vector<2x1xi32>
    %45 = arith.cmpi slt, %44, %10 : vector<2x1xi32>
    %46 = vector.shape_cast %45 : vector<2x1xi1> to vector<2x1xi1>
    %47 = vector.broadcast %46 : vector<2x1xi1> to vector<2x64xi1>
    %48 = arith.select %47, %42, %12 : vector<2x64xi1>, vector<2x64xf32>
    %49 = vector.shape_cast %45 : vector<2x1xi1> to vector<2x1xi1>
    %50 = vector.broadcast %49 : vector<2x1xi1> to vector<2x64xi1>
    %51 = arith.select %50, %40, %13 : vector<2x64xi1>, vector<2x64xf32>
    %cst_19 = arith.constant 0.000000e+00 : f32
    %52 = vector.shape_cast %45 : vector<2x1xi1> to vector<2x1xi1>
    %53 = vector.broadcast %52 : vector<2x1xi1> to vector<2x64xi1>
    %54 = vector.broadcast %cst_19 : f32 to vector<2x64xf32>
    %55 = arith.select %53, %42, %54 : vector<2x64xi1>, vector<2x64xf32>
    %c0_20 = arith.constant 0 : index
    %c0_21 = arith.constant 0 : index
    %56 = vector.load %arg6[%c0_20, %c0_21] : memref<16x64xf32, #tpu.memory_space<vmem>>, vector<2x64xf32>
    tpu.vector_store %arg6[%c0_20, %c0_21], %55 {strides = array<i32>} : memref<16x64xf32, #tpu.memory_space<vmem>>, vector<2x64xf32>,
    %57 = vector.extract_strided_slice %8 {offsets = [2, 0], sizes = [2, 256], strides = [1, 1]} : vector<16x256xf32> to vector<2x256xf32>
    %58 = arith.truncf %48 : vector<2x64xf32> to vector<2x64xbf16>
    %cst_22 = arith.constant dense<0.000000e+00> : vector<2x256xf32>
    %59 = tpu.matmul %58, %9, %cst_22 {dimension_numbers = #tpu.dot_dimension_numbers<[1], [0], [0], [1], [0, 0, 1, 1], [], []>} : vector<2x64xbf16>, vector<64x256xbf16>, vector<2x256xf32> -> vector<2x256xf32>
    %60 = arith.addf %57, %59 : vector<2x256xf32>
    %61 = vector.extract_strided_slice %60 {offsets = [0, 0], sizes = [2, 64], strides = [1, 1]} : vector<2x256xf32> to vector<2x64xf32>
    %62 = arith.negf %61 : vector<2x64xf32>
    %63 = math.exp %62 : vector<2x64xf32>
    %cst_23 = arith.constant 1.000000e+00 : f32
    %64 = vector.broadcast %cst_23 : f32 to vector<2x64xf32>
    %65 = arith.addf %64, %63 : vector<2x64xf32>
    %66 = arith.divf %64, %65 : vector<2x64xf32>
    %67 = vector.extract_strided_slice %60 {offsets = [0, 64], sizes = [2, 64], strides = [1, 1]} : vector<2x256xf32> to vector<2x64xf32>
    %68 = arith.negf %67 : vector<2x64xf32>
    %69 = math.exp %68 : vector<2x64xf32>
    %cst_24 = arith.constant 1.000000e+00 : f32
    %70 = vector.broadcast %cst_24 : f32 to vector<2x64xf32>
    %71 = arith.addf %70, %69 : vector<2x64xf32>
    %72 = arith.divf %70, %71 : vector<2x64xf32>
    %73 = vector.extract_strided_slice %60 {offsets = [0, 128], sizes = [2, 64], strides = [1, 1]} : vector<2x256xf32> to vector<2x64xf32>
    %74 = math.tanh %73 : vector<2x64xf32>
    %75 = vector.extract_strided_slice %60 {offsets = [0, 192], sizes = [2, 64], strides = [1, 1]} : vector<2x256xf32> to vector<2x64xf32>
    %76 = arith.negf %75 : vector<2x64xf32>
    %77 = math.exp %76 : vector<2x64xf32>
    %cst_25 = arith.constant 1.000000e+00 : f32
    %78 = vector.broadcast %cst_25 : f32 to vector<2x64xf32>
    %79 = arith.addf %78, %77 : vector<2x64xf32>
    %80 = arith.divf %78, %79 : vector<2x64xf32>
    %81 = arith.mulf %72, %51 : vector<2x64xf32>
    %82 = arith.mulf %66, %74 : vector<2x64xf32>
    %83 = arith.addf %81, %82 : vector<2x64xf32>
    %84 = math.tanh %83 : vector<2x64xf32>
    %85 = arith.mulf %80, %84 : vector<2x64xf32>
    %c1_i32 = arith.constant 1 : i32
    %86 = arith.addi %11, %c1_i32 : i32
    %87 = vector.broadcast %86 : i32 to vector<2x1xi32>
    %88 = arith.cmpi slt, %87, %10 : vector<2x1xi32>
    %89 = vector.shape_cast %88 : vector<2x1xi1> to vector<2x1xi1>
    %90 = vector.broadcast %89 : vector<2x1xi1> to vector<2x64xi1>
    %91 = arith.select %90, %85, %48 : vector<2x64xi1>, vector<2x64xf32>
    %92 = vector.shape_cast %88 : vector<2x1xi1> to vector<2x1xi1>
    %93 = vector.broadcast %92 : vector<2x1xi1> to vector<2x64xi1>
    %94 = arith.select %93, %83, %51 : vector<2x64xi1>, vector<2x64xf32>
    %cst_26 = arith.constant 0.000000e+00 : f32
    %95 = vector.shape_cast %88 : vector<2x1xi1> to vector<2x1xi1>
    %96 = vector.broadcast %95 : vector<2x1xi1> to vector<2x64xi1>
    %97 = vector.broadcast %cst_26 : f32 to vector<2x64xf32>
    %98 = arith.select %96, %85, %97 : vector<2x64xi1>, vector<2x64xf32>
    %c2 = arith.constant 2 : index
    %c0_27 = arith.constant 0 : index
    %99 = vector.load %arg6[%c2, %c0_27] : memref<16x64xf32, #tpu.memory_space<vmem>>, vector<2x64xf32>
    tpu.vector_store %arg6[%c2, %c0_27], %98 {strides = array<i32>} : memref<16x64xf32, #tpu.memory_space<vmem>>, vector<2x64xf32>,
    %100 = vector.extract_strided_slice %8 {offsets = [4, 0], sizes = [2, 256], strides = [1, 1]} : vector<16x256xf32> to vector<2x256xf32>
    %101 = arith.truncf %91 : vector<2x64xf32> to vector<2x64xbf16>
    %cst_28 = arith.constant dense<0.000000e+00> : vector<2x256xf32>
    %102 = tpu.matmul %101, %9, %cst_28 {dimension_numbers = #tpu.dot_dimension_numbers<[1], [0], [0], [1], [0, 0, 1, 1], [], []>} : vector<2x64xbf16>, vector<64x256xbf16>, vector<2x256xf32> -> vector<2x256xf32>
    %103 = arith.addf %100, %102 : vector<2x256xf32>
    %104 = vector.extract_strided_slice %103 {offsets = [0, 0], sizes = [2, 64], strides = [1, 1]} : vector<2x256xf32> to vector<2x64xf32>
    %105 = arith.negf %104 : vector<2x64xf32>
    %106 = math.exp %105 : vector<2x64xf32>
    %cst_29 = arith.constant 1.000000e+00 : f32
    %107 = vector.broadcast %cst_29 : f32 to vector<2x64xf32>
    %108 = arith.addf %107, %106 : vector<2x64xf32>
    %109 = arith.divf %107, %108 : vector<2x64xf32>
    %110 = vector.extract_strided_slice %103 {offsets = [0, 64], sizes = [2, 64], strides = [1, 1]} : vector<2x256xf32> to vector<2x64xf32>
    %111 = arith.negf %110 : vector<2x64xf32>
    %112 = math.exp %111 : vector<2x64xf32>
    %cst_30 = arith.constant 1.000000e+00 : f32
    %113 = vector.broadcast %cst_30 : f32 to vector<2x64xf32>
    %114 = arith.addf %113, %112 : vector<2x64xf32>
    %115 = arith.divf %113, %114 : vector<2x64xf32>
    %116 = vector.extract_strided_slice %103 {offsets = [0, 128], sizes = [2, 64], strides = [1, 1]} : vector<2x256xf32> to vector<2x64xf32>
    %117 = math.tanh %116 : vector<2x64xf32>
    %118 = vector.extract_strided_slice %103 {offsets = [0, 192], sizes = [2, 64], strides = [1, 1]} : vector<2x256xf32> to vector<2x64xf32>
    %119 = arith.negf %118 : vector<2x64xf32>
    %120 = math.exp %119 : vector<2x64xf32>
    %cst_31 = arith.constant 1.000000e+00 : f32
    %121 = vector.broadcast %cst_31 : f32 to vector<2x64xf32>
    %122 = arith.addf %121, %120 : vector<2x64xf32>
    %123 = arith.divf %121, %122 : vector<2x64xf32>
    %124 = arith.mulf %115, %94 : vector<2x64xf32>
    %125 = arith.mulf %109, %117 : vector<2x64xf32>
    %126 = arith.addf %124, %125 : vector<2x64xf32>
    %127 = math.tanh %126 : vector<2x64xf32>
    %128 = arith.mulf %123, %127 : vector<2x64xf32>
    %c2_i32 = arith.constant 2 : i32
    %129 = arith.addi %11, %c2_i32 : i32
    %130 = vector.broadcast %129 : i32 to vector<2x1xi32>
    %131 = arith.cmpi slt, %130, %10 : vector<2x1xi32>
    %132 = vector.shape_cast %131 : vector<2x1xi1> to vector<2x1xi1>
    %133 = vector.broadcast %132 : vector<2x1xi1> to vector<2x64xi1>
    %134 = arith.select %133, %128, %91 : vector<2x64xi1>, vector<2x64xf32>
    %135 = vector.shape_cast %131 : vector<2x1xi1> to vector<2x1xi1>
    %136 = vector.broadcast %135 : vector<2x1xi1> to vector<2x64xi1>
    %137 = arith.select %136, %126, %94 : vector<2x64xi1>, vector<2x64xf32>
    %cst_32 = arith.constant 0.000000e+00 : f32
    %138 = vector.shape_cast %131 : vector<2x1xi1> to vector<2x1xi1>
    %139 = vector.broadcast %138 : vector<2x1xi1> to vector<2x64xi1>
    %140 = vector.broadcast %cst_32 : f32 to vector<2x64xf32>
    %141 = arith.select %139, %128, %140 : vector<2x64xi1>, vector<2x64xf32>
    %c4 = arith.constant 4 : index
    %c0_33 = arith.constant 0 : index
    %142 = vector.load %arg6[%c4, %c0_33] : memref<16x64xf32, #tpu.memory_space<vmem>>, vector<2x64xf32>
    tpu.vector_store %arg6[%c4, %c0_33], %141 {strides = array<i32>} : memref<16x64xf32, #tpu.memory_space<vmem>>, vector<2x64xf32>,
    %143 = vector.extract_strided_slice %8 {offsets = [6, 0], sizes = [2, 256], strides = [1, 1]} : vector<16x256xf32> to vector<2x256xf32>
    %144 = arith.truncf %134 : vector<2x64xf32> to vector<2x64xbf16>
    %cst_34 = arith.constant dense<0.000000e+00> : vector<2x256xf32>
    %145 = tpu.matmul %144, %9, %cst_34 {dimension_numbers = #tpu.dot_dimension_numbers<[1], [0], [0], [1], [0, 0, 1, 1], [], []>} : vector<2x64xbf16>, vector<64x256xbf16>, vector<2x256xf32> -> vector<2x256xf32>
    %146 = arith.addf %143, %145 : vector<2x256xf32>
    %147 = vector.extract_strided_slice %146 {offsets = [0, 0], sizes = [2, 64], strides = [1, 1]} : vector<2x256xf32> to vector<2x64xf32>
    %148 = arith.negf %147 : vector<2x64xf32>
    %149 = math.exp %148 : vector<2x64xf32>
    %cst_35 = arith.constant 1.000000e+00 : f32
    %150 = vector.broadcast %cst_35 : f32 to vector<2x64xf32>
    %151 = arith.addf %150, %149 : vector<2x64xf32>
    %152 = arith.divf %150, %151 : vector<2x64xf32>
    %153 = vector.extract_strided_slice %146 {offsets = [0, 64], sizes = [2, 64], strides = [1, 1]} : vector<2x256xf32> to vector<2x64xf32>
    %154 = arith.negf %153 : vector<2x64xf32>
    %155 = math.exp %154 : vector<2x64xf32>
    %cst_36 = arith.constant 1.000000e+00 : f32
    %156 = vector.broadcast %cst_36 : f32 to vector<2x64xf32>
    %157 = arith.addf %156, %155 : vector<2x64xf32>
    %158 = arith.divf %156, %157 : vector<2x64xf32>
    %159 = vector.extract_strided_slice %146 {offsets = [0, 128], sizes = [2, 64], strides = [1, 1]} : vector<2x256xf32> to vector<2x64xf32>
    %160 = math.tanh %159 : vector<2x64xf32>
    %161 = vector.extract_strided_slice %146 {offsets = [0, 192], sizes = [2, 64], strides = [1, 1]} : vector<2x256xf32> to vector<2x64xf32>
    %162 = arith.negf %161 : vector<2x64xf32>
    %163 = math.exp %162 : vector<2x64xf32>
    %cst_37 = arith.constant 1.000000e+00 : f32
    %164 = vector.broadcast %cst_37 : f32 to vector<2x64xf32>
    %165 = arith.addf %164, %163 : vector<2x64xf32>
    %166 = arith.divf %164, %165 : vector<2x64xf32>
    %167 = arith.mulf %158, %137 : vector<2x64xf32>
    %168 = arith.mulf %152, %160 : vector<2x64xf32>
    %169 = arith.addf %167, %168 : vector<2x64xf32>
    %170 = math.tanh %169 : vector<2x64xf32>
    %171 = arith.mulf %166, %170 : vector<2x64xf32>
    %c3_i32 = arith.constant 3 : i32
    %172 = arith.addi %11, %c3_i32 : i32
    %173 = vector.broadcast %172 : i32 to vector<2x1xi32>
    %174 = arith.cmpi slt, %173, %10 : vector<2x1xi32>
    %175 = vector.shape_cast %174 : vector<2x1xi1> to vector<2x1xi1>
    %176 = vector.broadcast %175 : vector<2x1xi1> to vector<2x64xi1>
    %177 = arith.select %176, %171, %134 : vector<2x64xi1>, vector<2x64xf32>
    %178 = vector.shape_cast %174 : vector<2x1xi1> to vector<2x1xi1>
    %179 = vector.broadcast %178 : vector<2x1xi1> to vector<2x64xi1>
    %180 = arith.select %179, %169, %137 : vector<2x64xi1>, vector<2x64xf32>
    %cst_38 = arith.constant 0.000000e+00 : f32
    %181 = vector.shape_cast %174 : vector<2x1xi1> to vector<2x1xi1>
    %182 = vector.broadcast %181 : vector<2x1xi1> to vector<2x64xi1>
    %183 = vector.broadcast %cst_38 : f32 to vector<2x64xf32>
    %184 = arith.select %182, %171, %183 : vector<2x64xi1>, vector<2x64xf32>
    %c6 = arith.constant 6 : index
    %c0_39 = arith.constant 0 : index
    %185 = vector.load %arg6[%c6, %c0_39] : memref<16x64xf32, #tpu.memory_space<vmem>>, vector<2x64xf32>
    tpu.vector_store %arg6[%c6, %c0_39], %184 {strides = array<i32>} : memref<16x64xf32, #tpu.memory_space<vmem>>, vector<2x64xf32>,
    %186 = vector.extract_strided_slice %8 {offsets = [8, 0], sizes = [2, 256], strides = [1, 1]} : vector<16x256xf32> to vector<2x256xf32>
    %187 = arith.truncf %177 : vector<2x64xf32> to vector<2x64xbf16>
    %cst_40 = arith.constant dense<0.000000e+00> : vector<2x256xf32>
    %188 = tpu.matmul %187, %9, %cst_40 {dimension_numbers = #tpu.dot_dimension_numbers<[1], [0], [0], [1], [0, 0, 1, 1], [], []>} : vector<2x64xbf16>, vector<64x256xbf16>, vector<2x256xf32> -> vector<2x256xf32>
    %189 = arith.addf %186, %188 : vector<2x256xf32>
    %190 = vector.extract_strided_slice %189 {offsets = [0, 0], sizes = [2, 64], strides = [1, 1]} : vector<2x256xf32> to vector<2x64xf32>
    %191 = arith.negf %190 : vector<2x64xf32>
    %192 = math.exp %191 : vector<2x64xf32>
    %cst_41 = arith.constant 1.000000e+00 : f32
    %193 = vector.broadcast %cst_41 : f32 to vector<2x64xf32>
    %194 = arith.addf %193, %192 : vector<2x64xf32>
    %195 = arith.divf %193, %194 : vector<2x64xf32>
    %196 = vector.extract_strided_slice %189 {offsets = [0, 64], sizes = [2, 64], strides = [1, 1]} : vector<2x256xf32> to vector<2x64xf32>
    %197 = arith.negf %196 : vector<2x64xf32>
    %198 = math.exp %197 : vector<2x64xf32>
    %cst_42 = arith.constant 1.000000e+00 : f32
    %199 = vector.broadcast %cst_42 : f32 to vector<2x64xf32>
    %200 = arith.addf %199, %198 : vector<2x64xf32>
    %201 = arith.divf %199, %200 : vector<2x64xf32>
    %202 = vector.extract_strided_slice %189 {offsets = [0, 128], sizes = [2, 64], strides = [1, 1]} : vector<2x256xf32> to vector<2x64xf32>
    %203 = math.tanh %202 : vector<2x64xf32>
    %204 = vector.extract_strided_slice %189 {offsets = [0, 192], sizes = [2, 64], strides = [1, 1]} : vector<2x256xf32> to vector<2x64xf32>
    %205 = arith.negf %204 : vector<2x64xf32>
    %206 = math.exp %205 : vector<2x64xf32>
    %cst_43 = arith.constant 1.000000e+00 : f32
    %207 = vector.broadcast %cst_43 : f32 to vector<2x64xf32>
    %208 = arith.addf %207, %206 : vector<2x64xf32>
    %209 = arith.divf %207, %208 : vector<2x64xf32>
    %210 = arith.mulf %201, %180 : vector<2x64xf32>
    %211 = arith.mulf %195, %203 : vector<2x64xf32>
    %212 = arith.addf %210, %211 : vector<2x64xf32>
    %213 = math.tanh %212 : vector<2x64xf32>
    %214 = arith.mulf %209, %213 : vector<2x64xf32>
    %c4_i32 = arith.constant 4 : i32
    %215 = arith.addi %11, %c4_i32 : i32
    %216 = vector.broadcast %215 : i32 to vector<2x1xi32>
    %217 = arith.cmpi slt, %216, %10 : vector<2x1xi32>
    %218 = vector.shape_cast %217 : vector<2x1xi1> to vector<2x1xi1>
    %219 = vector.broadcast %218 : vector<2x1xi1> to vector<2x64xi1>
    %220 = arith.select %219, %214, %177 : vector<2x64xi1>, vector<2x64xf32>
    %221 = vector.shape_cast %217 : vector<2x1xi1> to vector<2x1xi1>
    %222 = vector.broadcast %221 : vector<2x1xi1> to vector<2x64xi1>
    %223 = arith.select %222, %212, %180 : vector<2x64xi1>, vector<2x64xf32>
    %cst_44 = arith.constant 0.000000e+00 : f32
    %224 = vector.shape_cast %217 : vector<2x1xi1> to vector<2x1xi1>
    %225 = vector.broadcast %224 : vector<2x1xi1> to vector<2x64xi1>
    %226 = vector.broadcast %cst_44 : f32 to vector<2x64xf32>
    %227 = arith.select %225, %214, %226 : vector<2x64xi1>, vector<2x64xf32>
    %c8 = arith.constant 8 : index
    %c0_45 = arith.constant 0 : index
    %228 = vector.load %arg6[%c8, %c0_45] : memref<16x64xf32, #tpu.memory_space<vmem>>, vector<2x64xf32>
    tpu.vector_store %arg6[%c8, %c0_45], %227 {strides = array<i32>} : memref<16x64xf32, #tpu.memory_space<vmem>>, vector<2x64xf32>,
    %229 = vector.extract_strided_slice %8 {offsets = [10, 0], sizes = [2, 256], strides = [1, 1]} : vector<16x256xf32> to vector<2x256xf32>
    %230 = arith.truncf %220 : vector<2x64xf32> to vector<2x64xbf16>
    %cst_46 = arith.constant dense<0.000000e+00> : vector<2x256xf32>
    %231 = tpu.matmul %230, %9, %cst_46 {dimension_numbers = #tpu.dot_dimension_numbers<[1], [0], [0], [1], [0, 0, 1, 1], [], []>} : vector<2x64xbf16>, vector<64x256xbf16>, vector<2x256xf32> -> vector<2x256xf32>
    %232 = arith.addf %229, %231 : vector<2x256xf32>
    %233 = vector.extract_strided_slice %232 {offsets = [0, 0], sizes = [2, 64], strides = [1, 1]} : vector<2x256xf32> to vector<2x64xf32>
    %234 = arith.negf %233 : vector<2x64xf32>
    %235 = math.exp %234 : vector<2x64xf32>
    %cst_47 = arith.constant 1.000000e+00 : f32
    %236 = vector.broadcast %cst_47 : f32 to vector<2x64xf32>
    %237 = arith.addf %236, %235 : vector<2x64xf32>
    %238 = arith.divf %236, %237 : vector<2x64xf32>
    %239 = vector.extract_strided_slice %232 {offsets = [0, 64], sizes = [2, 64], strides = [1, 1]} : vector<2x256xf32> to vector<2x64xf32>
    %240 = arith.negf %239 : vector<2x64xf32>
    %241 = math.exp %240 : vector<2x64xf32>
    %cst_48 = arith.constant 1.000000e+00 : f32
    %242 = vector.broadcast %cst_48 : f32 to vector<2x64xf32>
    %243 = arith.addf %242, %241 : vector<2x64xf32>
    %244 = arith.divf %242, %243 : vector<2x64xf32>
    %245 = vector.extract_strided_slice %232 {offsets = [0, 128], sizes = [2, 64], strides = [1, 1]} : vector<2x256xf32> to vector<2x64xf32>
    %246 = math.tanh %245 : vector<2x64xf32>
    %247 = vector.extract_strided_slice %232 {offsets = [0, 192], sizes = [2, 64], strides = [1, 1]} : vector<2x256xf32> to vector<2x64xf32>
    %248 = arith.negf %247 : vector<2x64xf32>
    %249 = math.exp %248 : vector<2x64xf32>
    %cst_49 = arith.constant 1.000000e+00 : f32
    %250 = vector.broadcast %cst_49 : f32 to vector<2x64xf32>
    %251 = arith.addf %250, %249 : vector<2x64xf32>
    %252 = arith.divf %250, %251 : vector<2x64xf32>
    %253 = arith.mulf %244, %223 : vector<2x64xf32>
    %254 = arith.mulf %238, %246 : vector<2x64xf32>
    %255 = arith.addf %253, %254 : vector<2x64xf32>
    %256 = math.tanh %255 : vector<2x64xf32>
    %257 = arith.mulf %252, %256 : vector<2x64xf32>
    %c5_i32 = arith.constant 5 : i32
    %258 = arith.addi %11, %c5_i32 : i32
    %259 = vector.broadcast %258 : i32 to vector<2x1xi32>
    %260 = arith.cmpi slt, %259, %10 : vector<2x1xi32>
    %261 = vector.shape_cast %260 : vector<2x1xi1> to vector<2x1xi1>
    %262 = vector.broadcast %261 : vector<2x1xi1> to vector<2x64xi1>
    %263 = arith.select %262, %257, %220 : vector<2x64xi1>, vector<2x64xf32>
    %264 = vector.shape_cast %260 : vector<2x1xi1> to vector<2x1xi1>
    %265 = vector.broadcast %264 : vector<2x1xi1> to vector<2x64xi1>
    %266 = arith.select %265, %255, %223 : vector<2x64xi1>, vector<2x64xf32>
    %cst_50 = arith.constant 0.000000e+00 : f32
    %267 = vector.shape_cast %260 : vector<2x1xi1> to vector<2x1xi1>
    %268 = vector.broadcast %267 : vector<2x1xi1> to vector<2x64xi1>
    %269 = vector.broadcast %cst_50 : f32 to vector<2x64xf32>
    %270 = arith.select %268, %257, %269 : vector<2x64xi1>, vector<2x64xf32>
    %c10 = arith.constant 10 : index
    %c0_51 = arith.constant 0 : index
    %271 = vector.load %arg6[%c10, %c0_51] : memref<16x64xf32, #tpu.memory_space<vmem>>, vector<2x64xf32>
    tpu.vector_store %arg6[%c10, %c0_51], %270 {strides = array<i32>} : memref<16x64xf32, #tpu.memory_space<vmem>>, vector<2x64xf32>,
    %272 = vector.extract_strided_slice %8 {offsets = [12, 0], sizes = [2, 256], strides = [1, 1]} : vector<16x256xf32> to vector<2x256xf32>
    %273 = arith.truncf %263 : vector<2x64xf32> to vector<2x64xbf16>
    %cst_52 = arith.constant dense<0.000000e+00> : vector<2x256xf32>
    %274 = tpu.matmul %273, %9, %cst_52 {dimension_numbers = #tpu.dot_dimension_numbers<[1], [0], [0], [1], [0, 0, 1, 1], [], []>} : vector<2x64xbf16>, vector<64x256xbf16>, vector<2x256xf32> -> vector<2x256xf32>
    %275 = arith.addf %272, %274 : vector<2x256xf32>
    %276 = vector.extract_strided_slice %275 {offsets = [0, 0], sizes = [2, 64], strides = [1, 1]} : vector<2x256xf32> to vector<2x64xf32>
    %277 = arith.negf %276 : vector<2x64xf32>
    %278 = math.exp %277 : vector<2x64xf32>
    %cst_53 = arith.constant 1.000000e+00 : f32
    %279 = vector.broadcast %cst_53 : f32 to vector<2x64xf32>
    %280 = arith.addf %279, %278 : vector<2x64xf32>
    %281 = arith.divf %279, %280 : vector<2x64xf32>
    %282 = vector.extract_strided_slice %275 {offsets = [0, 64], sizes = [2, 64], strides = [1, 1]} : vector<2x256xf32> to vector<2x64xf32>
    %283 = arith.negf %282 : vector<2x64xf32>
    %284 = math.exp %283 : vector<2x64xf32>
    %cst_54 = arith.constant 1.000000e+00 : f32
    %285 = vector.broadcast %cst_54 : f32 to vector<2x64xf32>
    %286 = arith.addf %285, %284 : vector<2x64xf32>
    %287 = arith.divf %285, %286 : vector<2x64xf32>
    %288 = vector.extract_strided_slice %275 {offsets = [0, 128], sizes = [2, 64], strides = [1, 1]} : vector<2x256xf32> to vector<2x64xf32>
    %289 = math.tanh %288 : vector<2x64xf32>
    %290 = vector.extract_strided_slice %275 {offsets = [0, 192], sizes = [2, 64], strides = [1, 1]} : vector<2x256xf32> to vector<2x64xf32>
    %291 = arith.negf %290 : vector<2x64xf32>
    %292 = math.exp %291 : vector<2x64xf32>
    %cst_55 = arith.constant 1.000000e+00 : f32
    %293 = vector.broadcast %cst_55 : f32 to vector<2x64xf32>
    %294 = arith.addf %293, %292 : vector<2x64xf32>
    %295 = arith.divf %293, %294 : vector<2x64xf32>
    %296 = arith.mulf %287, %266 : vector<2x64xf32>
    %297 = arith.mulf %281, %289 : vector<2x64xf32>
    %298 = arith.addf %296, %297 : vector<2x64xf32>
    %299 = math.tanh %298 : vector<2x64xf32>
    %300 = arith.mulf %295, %299 : vector<2x64xf32>
    %c6_i32 = arith.constant 6 : i32
    %301 = arith.addi %11, %c6_i32 : i32
    %302 = vector.broadcast %301 : i32 to vector<2x1xi32>
    %303 = arith.cmpi slt, %302, %10 : vector<2x1xi32>
    %304 = vector.shape_cast %303 : vector<2x1xi1> to vector<2x1xi1>
    %305 = vector.broadcast %304 : vector<2x1xi1> to vector<2x64xi1>
    %306 = arith.select %305, %300, %263 : vector<2x64xi1>, vector<2x64xf32>
    %307 = vector.shape_cast %303 : vector<2x1xi1> to vector<2x1xi1>
    %308 = vector.broadcast %307 : vector<2x1xi1> to vector<2x64xi1>
    %309 = arith.select %308, %298, %266 : vector<2x64xi1>, vector<2x64xf32>
    %cst_56 = arith.constant 0.000000e+00 : f32
    %310 = vector.shape_cast %303 : vector<2x1xi1> to vector<2x1xi1>
    %311 = vector.broadcast %310 : vector<2x1xi1> to vector<2x64xi1>
    %312 = vector.broadcast %cst_56 : f32 to vector<2x64xf32>
    %313 = arith.select %311, %300, %312 : vector<2x64xi1>, vector<2x64xf32>
    %c12 = arith.constant 12 : index
    %c0_57 = arith.constant 0 : index
    %314 = vector.load %arg6[%c12, %c0_57] : memref<16x64xf32, #tpu.memory_space<vmem>>, vector<2x64xf32>
    tpu.vector_store %arg6[%c12, %c0_57], %313 {strides = array<i32>} : memref<16x64xf32, #tpu.memory_space<vmem>>, vector<2x64xf32>,
    %315 = vector.extract_strided_slice %8 {offsets = [14, 0], sizes = [2, 256], strides = [1, 1]} : vector<16x256xf32> to vector<2x256xf32>
    %316 = arith.truncf %306 : vector<2x64xf32> to vector<2x64xbf16>
    %cst_58 = arith.constant dense<0.000000e+00> : vector<2x256xf32>
    %317 = tpu.matmul %316, %9, %cst_58 {dimension_numbers = #tpu.dot_dimension_numbers<[1], [0], [0], [1], [0, 0, 1, 1], [], []>} : vector<2x64xbf16>, vector<64x256xbf16>, vector<2x256xf32> -> vector<2x256xf32>
    %318 = arith.addf %315, %317 : vector<2x256xf32>
    %319 = vector.extract_strided_slice %318 {offsets = [0, 0], sizes = [2, 64], strides = [1, 1]} : vector<2x256xf32> to vector<2x64xf32>
    %320 = arith.negf %319 : vector<2x64xf32>
    %321 = math.exp %320 : vector<2x64xf32>
    %cst_59 = arith.constant 1.000000e+00 : f32
    %322 = vector.broadcast %cst_59 : f32 to vector<2x64xf32>
    %323 = arith.addf %322, %321 : vector<2x64xf32>
    %324 = arith.divf %322, %323 : vector<2x64xf32>
    %325 = vector.extract_strided_slice %318 {offsets = [0, 64], sizes = [2, 64], strides = [1, 1]} : vector<2x256xf32> to vector<2x64xf32>
    %326 = arith.negf %325 : vector<2x64xf32>
    %327 = math.exp %326 : vector<2x64xf32>
    %cst_60 = arith.constant 1.000000e+00 : f32
    %328 = vector.broadcast %cst_60 : f32 to vector<2x64xf32>
    %329 = arith.addf %328, %327 : vector<2x64xf32>
    %330 = arith.divf %328, %329 : vector<2x64xf32>
    %331 = vector.extract_strided_slice %318 {offsets = [0, 128], sizes = [2, 64], strides = [1, 1]} : vector<2x256xf32> to vector<2x64xf32>
    %332 = math.tanh %331 : vector<2x64xf32>
    %333 = vector.extract_strided_slice %318 {offsets = [0, 192], sizes = [2, 64], strides = [1, 1]} : vector<2x256xf32> to vector<2x64xf32>
    %334 = arith.negf %333 : vector<2x64xf32>
    %335 = math.exp %334 : vector<2x64xf32>
    %cst_61 = arith.constant 1.000000e+00 : f32
    %336 = vector.broadcast %cst_61 : f32 to vector<2x64xf32>
    %337 = arith.addf %336, %335 : vector<2x64xf32>
    %338 = arith.divf %336, %337 : vector<2x64xf32>
    %339 = arith.mulf %330, %309 : vector<2x64xf32>
    %340 = arith.mulf %324, %332 : vector<2x64xf32>
    %341 = arith.addf %339, %340 : vector<2x64xf32>
    %342 = math.tanh %341 : vector<2x64xf32>
    %343 = arith.mulf %338, %342 : vector<2x64xf32>
    %c7_i32 = arith.constant 7 : i32
    %344 = arith.addi %11, %c7_i32 : i32
    %345 = vector.broadcast %344 : i32 to vector<2x1xi32>
    %346 = arith.cmpi slt, %345, %10 : vector<2x1xi32>
    %347 = vector.shape_cast %346 : vector<2x1xi1> to vector<2x1xi1>
    %348 = vector.broadcast %347 : vector<2x1xi1> to vector<2x64xi1>
    %349 = arith.select %348, %343, %306 : vector<2x64xi1>, vector<2x64xf32>
    %350 = vector.shape_cast %346 : vector<2x1xi1> to vector<2x1xi1>
    %351 = vector.broadcast %350 : vector<2x1xi1> to vector<2x64xi1>
    %352 = arith.select %351, %341, %309 : vector<2x64xi1>, vector<2x64xf32>
    %cst_62 = arith.constant 0.000000e+00 : f32
    %353 = vector.shape_cast %346 : vector<2x1xi1> to vector<2x1xi1>
    %354 = vector.broadcast %353 : vector<2x1xi1> to vector<2x64xi1>
    %355 = vector.broadcast %cst_62 : f32 to vector<2x64xf32>
    %356 = arith.select %354, %343, %355 : vector<2x64xi1>, vector<2x64xf32>
    %c14 = arith.constant 14 : index
    %c0_63 = arith.constant 0 : index
    %357 = vector.load %arg6[%c14, %c0_63] : memref<16x64xf32, #tpu.memory_space<vmem>>, vector<2x64xf32>
    tpu.vector_store %arg6[%c14, %c0_63], %356 {strides = array<i32>} : memref<16x64xf32, #tpu.memory_space<vmem>>, vector<2x64xf32>,
    %c0_64 = arith.constant 0 : index
    %c0_65 = arith.constant 0 : index
    %358 = vector.load %arg7[%c0_64, %c0_65] : memref<2x64xf32, #tpu.memory_space<vmem>>, vector<2x64xf32>
    tpu.vector_store %arg7[%c0_64, %c0_65], %349 {strides = array<i32>} : memref<2x64xf32, #tpu.memory_space<vmem>>, vector<2x64xf32>,
    %c0_66 = arith.constant 0 : index
    %c0_67 = arith.constant 0 : index
    %359 = vector.load %arg8[%c0_66, %c0_67] : memref<2x64xf32, #tpu.memory_space<vmem>>, vector<2x64xf32>
    tpu.vector_store %arg8[%c0_66, %c0_67], %352 {strides = array<i32>} : memref<2x64xf32, #tpu.memory_space<vmem>>, vector<2x64xf32>,
    return
  }
  func.func @transform_0(%arg0: i32) -> (i32, i32) {
    %c0_i32 = arith.constant 0 : i32
    %c0_i32_0 = arith.constant 0 : i32
    %c0_i32_1 = arith.constant 0 : i32
    return %c0_i32, %c0_i32_0 : i32, i32
  }
  func.func @transform_1(%arg0: i32) -> (i32, i32) {
    %c0_i32 = arith.constant 0 : i32
    %c0_i32_0 = arith.constant 0 : i32
    return %arg0, %c0_i32 : i32, i32
  }
  func.func @transform_2(%arg0: i32) -> (i32, i32) {
    %c0_i32 = arith.constant 0 : i32
    %c0_i32_0 = arith.constant 0 : i32
    %c0_i32_1 = arith.constant 0 : i32
    return %c0_i32, %c0_i32_0 : i32, i32
  }
  func.func @transform_3(%arg0: i32) -> (i32, i32) {
    %c0_i32 = arith.constant 0 : i32
    %c0_i32_0 = arith.constant 0 : i32
    %c0_i32_1 = arith.constant 0 : i32
    return %c0_i32, %c0_i32_0 : i32, i32
  }
  func.func @transform_4(%arg0: i32) -> (i32, i32) {
    %c0_i32 = arith.constant 0 : i32
    %c0_i32_0 = arith.constant 0 : i32
    %c0_i32_1 = arith.constant 0 : i32
    return %c0_i32, %c0_i32_0 : i32, i32
  }
  func.func @transform_5(%arg0: i32) -> (i32, i32) {
    %c0_i32 = arith.constant 0 : i32
    %c0_i32_0 = arith.constant 0 : i32
    return %arg0, %c0_i32 : i32, i32
  }
}

</mosaic_0001>

<llo_original>
// kernel: stacked_bilstms_forward.5
$region0: #{stacked_bilstms_forward.5}
  #allocation0 [shape = 'u32[]', space=smem, size = 0x4, offset = 0x4, fixed_abs, tag = 'smem constant byte address 0x4 - core index']
  #allocation1 [shape = 'u32[144,128]{1,0:T(1,128)}', space=vmem, size = 0x12000, scoped, tag = 'internal scratch']
  #allocation2 [shape = 'f32[2,64]{1,0:T(2,128)}', space=vmem, size = 0x400, scoped, tag = 'scratch operand']
  #allocation3 [shape = 'f32[2,64]{1,0:T(2,128)}', space=vmem, size = 0x400, scoped, tag = 'scratch operand']
  %s0 = inlined_call_operand.vmem [shape: s32[2,1], index: 0, kind: input, shape index: {}]
  %s1 = inlined_call_operand.vmem [shape: bf16[16,128], index: 1, kind: input, shape index: {}]
  %s2 = inlined_call_operand.vmem [shape: bf16[128,256], index: 2, kind: input, shape index: {}]
  %s3 = inlined_call_operand.vmem [shape: bf16[64,256], index: 3, kind: input, shape index: {}]
  %s4 = inlined_call_operand.vmem [shape: f32[1,256], index: 4, kind: input, shape index: {}]
  %s5 = inlined_call_operand.vmem [shape: f32[16,64], index: 5, kind: output, shape index: {}]
  %s6 = sld [smem:[#allocation0]]
  $region34: #{stacked_bilstms_forward.5} parent=0
    _
  %s8 = ssub.s32 1, %s6
  %s9 = scalar_select 0, %s8, %s6
  // Predicated region
  $region2: #{stacked_bilstms_forward.5} parent=0 // pred_check
    _
  $region3: #{stacked_bilstms_forward.5} parent=0 // pred_check_branch
    %11 = sbr.rel (0) target = $region5
  $region4: #{stacked_bilstms_forward.5} parent=0 // pred_region
    _
  $region5: #{stacked_bilstms_forward.5} parent=0 // pred_fallthru
    _
  // Predicated region
  $region6: #{stacked_bilstms_forward.5} parent=0 // pred_check
    _
  $region7: #{stacked_bilstms_forward.5} parent=0 // pred_check_branch
    %13 = sbr.rel (0) target = $region9
  $region8: #{stacked_bilstms_forward.5} parent=0 // pred_region
    _
  $region9: #{stacked_bilstms_forward.5} parent=0 // pred_fallthru
    _
  // Predicated region
  $region10: #{stacked_bilstms_forward.5} parent=0 // pred_check
    _
  $region11: #{stacked_bilstms_forward.5} parent=0 // pred_check_branch
    %15 = sbr.rel (0) target = $region13
  $region12: #{stacked_bilstms_forward.5} parent=0 // pred_region
    _
  $region13: #{stacked_bilstms_forward.5} parent=0 // pred_fallthru
    _
  // Predicated region
  $region14: #{stacked_bilstms_forward.5} parent=0 // pred_check
    _
  $region15: #{stacked_bilstms_forward.5} parent=0 // pred_check_branch
    %17 = sbr.rel (0) target = $region17
  $region16: #{stacked_bilstms_forward.5} parent=0 // pred_region
    _
  $region17: #{stacked_bilstms_forward.5} parent=0 // pred_fallthru
    _
  // Predicated region
  $region18: #{stacked_bilstms_forward.5} parent=0 // pred_check
    _
  $region19: #{stacked_bilstms_forward.5} parent=0 // pred_check_branch
    %19 = sbr.rel (0) target = $region21
  $region20: #{stacked_bilstms_forward.5} parent=0 // pred_region
    _
  $region21: #{stacked_bilstms_forward.5} parent=0 // pred_fallthru
    _
  %p21 = scmp.eq.s32.totalorder 0, 0
  // Predicated region
  $region22: #{stacked_bilstms_forward.5} parent=0 // pred_check
    %p22 = pneg %p21
  $region23: #{stacked_bilstms_forward.5} parent=0 // pred_check_branch
    %24 = sbr.rel (%p22) target = $region25
  $region24: #{stacked_bilstms_forward.5} parent=0 // pred_region
    %vm25 = vcmask 517120
    %26 = vst.msk [vmem:[#allocation2] sm:$0x3] %vm25, 0.0
    %27 = vst.msk [vmem:[#allocation3] sm:$0x3] %vm25, 0.0
  $region25: #{stacked_bilstms_forward.5} parent=0 // pred_fallthru
    _
  %v28 = vld [vmem:[%s1] sm:$0xf]
  %v29 = vld [vmem:[%s1 + $0x4] sm:$0xf]
  %v30 = vld [vmem:[%s2] sm:$0xff]
  %v31 = vld [vmem:[%s2 + $0x8] sm:$0xff]
  %v32 = vld [vmem:[%s2 + $0x10] sm:$0xff]
  %v33 = vld [vmem:[%s2 + $0x18] sm:$0xff]
  %v34 = vld [vmem:[%s2 + $0x20] sm:$0xff]
  %v35 = vld [vmem:[%s2 + $0x28] sm:$0xff]
  %v36 = vld [vmem:[%s2 + $0x30] sm:$0xff]
  %v37 = vld [vmem:[%s2 + $0x38] sm:$0xff]
  %v38 = vld [vmem:[%s2 + $0x40] sm:$0xff]
  %v39 = vld [vmem:[%s2 + $0x48] sm:$0xff]
  %v40 = vld [vmem:[%s2 + $0x50] sm:$0xff]
  %v41 = vld [vmem:[%s2 + $0x58] sm:$0xff]
  %v42 = vld [vmem:[%s2 + $0x60] sm:$0xff]
  %v43 = vld [vmem:[%s2 + $0x68] sm:$0xff]
  %v44 = vld [vmem:[%s2 + $0x70] sm:$0xff]
  %v45 = vld [vmem:[%s2 + $0x78] sm:$0xff]
  %v46 = vld [vmem:[%s4] sm:$0x3]
  %v48 = vlaneseq
  %v49 = vshrl.u32 %v48, 7
  %v50 = vsub.s32 0, %v49
  %v51 = vrot.slane %v46, %v50
  %v52 = vlaneseq
  %v53 = vshrl.u32 %v52, 7
  %v54 = vsub.s32 1, %v53
  %v55 = vrot.slane %v46, %v54
  %v60 = vunpack.c.l.b16 %v28
  %v61 = vunpack.c.l.b16 %v29
  %v62 = vpack.c.b16 %v61, %v60
  %v80 = vunpack.c.l.b16 %v30
  %v81 = vunpack.c.h.b16 %v30
  %v82 = vunpack.c.l.b16 %v31
  %v83 = vunpack.c.h.b16 %v31
  %v84 = vunpack.c.l.b16 %v32
  %v85 = vunpack.c.h.b16 %v32
  %v86 = vunpack.c.l.b16 %v33
  %v87 = vunpack.c.h.b16 %v33
  %v88 = vunpack.c.l.b16 %v34
  %v89 = vunpack.c.h.b16 %v34
  %v90 = vunpack.c.l.b16 %v35
  %v91 = vunpack.c.h.b16 %v35
  %v92 = vunpack.c.l.b16 %v36
  %v93 = vunpack.c.h.b16 %v36
  %v94 = vunpack.c.l.b16 %v37
  %v95 = vunpack.c.h.b16 %v37
  %v96 = vunpack.c.l.b16 %v38
  %v97 = vunpack.c.h.b16 %v38
  %v98 = vunpack.c.l.b16 %v39
  %v99 = vunpack.c.h.b16 %v39
  %v100 = vunpack.c.l.b16 %v40
  %v101 = vunpack.c.h.b16 %v40
  %v102 = vunpack.c.l.b16 %v41
  %v103 = vunpack.c.h.b16 %v41
  %v104 = vunpack.c.l.b16 %v42
  %v105 = vunpack.c.h.b16 %v42
  %v106 = vunpack.c.l.b16 %v43
  %v107 = vunpack.c.h.b16 %v43
  %v108 = vunpack.c.l.b16 %v44
  %v109 = vunpack.c.h.b16 %v44
  %v110 = vunpack.c.l.b16 %v45
  %v111 = vunpack.c.h.b16 %v45
  %v112 = vpack.c.b16 %v82, %v80
  %v113 = vpack.c.b16 %v83, %v81
  %v114 = vpack.c.b16 %v86, %v84
  %v115 = vpack.c.b16 %v87, %v85
  %v116 = vpack.c.b16 %v90, %v88
  %v117 = vpack.c.b16 %v91, %v89
  %v118 = vpack.c.b16 %v94, %v92
  %v119 = vpack.c.b16 %v95, %v93
  %v120 = vpack.c.b16 %v98, %v96
  %v121 = vpack.c.b16 %v99, %v97
  %v122 = vpack.c.b16 %v102, %v100
  %v123 = vpack.c.b16 %v103, %v101
  %v124 = vpack.c.b16 %v106, %v104
  %v125 = vpack.c.b16 %v107, %v105
  %v126 = vpack.c.b16 %v110, %v108
  %v127 = vpack.c.b16 %v111, %v109
  %144 = vmatprep.subr.bf16.mxu0 %v113
  %145 = vmatpush1.bf16.msra.mxu0 %v112
  %146 = vmatprep.subr.bf16.mxu0 %v115
  %147 = vmatpush1.bf16.msra.mxu0 %v114
  %148 = vmatprep.subr.bf16.mxu0 %v117
  %149 = vmatpush1.bf16.msra.mxu0 %v116
  %150 = vmatprep.subr.bf16.mxu0 %v119
  %151 = vmatpush1.bf16.msra.mxu0 %v118
  %152 = vmatprep.subr.bf16.mxu0 %v121
  %153 = vmatpush1.bf16.msra.mxu0 %v120
  %154 = vmatprep.subr.bf16.mxu0 %v123
  %155 = vmatpush1.bf16.msra.mxu0 %v122
  %156 = vmatprep.subr.bf16.mxu0 %v125
  %157 = vmatpush1.bf16.msra.mxu0 %v124
  %158 = vmatprep.subr.bf16.mxu0 %v127
  %159 = vmatpush1.bf16.msra.mxu0 %v126
  %160 = vmatprep.subr.bf16.mxu0 0
  %161 = vmatpush1.bf16.msra.mxu0 0
  %162 = vmatprep.subr.bf16.mxu0 0
  %163 = vmatpush1.bf16.msra.mxu0 0
  %164 = vmatprep.subr.bf16.mxu0 0
  %165 = vmatpush1.bf16.msra.mxu0 0
  %166 = vmatprep.subr.bf16.mxu0 0
  %167 = vmatpush1.bf16.msra.mxu0 0
  %168 = vmatprep.subr.bf16.mxu0 0
  %169 = vmatpush1.bf16.msra.mxu0 0
  %170 = vmatprep.subr.bf16.mxu0 0
  %171 = vmatpush1.bf16.msra.mxu0 0
  %172 = vmatprep.subr.bf16.mxu0 0
  %173 = vmatpush1.bf16.msra.mxu0 0
  %174 = vmatprep.subr.bf16.mxu0 0
  %175 = vmatpush1.bf16.msra.mxu0 0
  %176 = vmatprep.mubr.bf16.mxu0 0
  %177 = vmatmul.mubr.bf16.gmra.mrb[0].mxu0 %v62
  %v178 = vpop.f32.mrb[0].mxu0
  %v179 = vadd.f32 %v51, %v178
  %v180 = vpop.f32.mrb[0].mxu0
  %v181 = vadd.f32 %v55, %v180
  %v182 = vpop.f32.mrb[0].mxu0
  %v183 = vadd.f32 %v51, %v182
  %v184 = vpop.f32.mrb[0].mxu0
  %v185 = vadd.f32 %v55, %v184
  %186 = vdwg.mxu0
  %v187 = vld [vmem:[%s3] sm:$0xff]
  %v188 = vld [vmem:[%s3 + $0x8] sm:$0xff]
  %v189 = vld [vmem:[%s3 + $0x10] sm:$0xff]
  %v190 = vld [vmem:[%s3 + $0x18] sm:$0xff]
  %v191 = vld [vmem:[%s3 + $0x20] sm:$0xff]
  %v192 = vld [vmem:[%s3 + $0x28] sm:$0xff]
  %v193 = vld [vmem:[%s3 + $0x30] sm:$0xff]
  %v194 = vld [vmem:[%s3 + $0x38] sm:$0xff]
  %v195 = vld [vmem:[%s0] sm:$0x3]
  %s196 = smul.u32 0, 8
  %v197 = vld [vmem:[#allocation2] sm:$0x3]
  %v198 = vld [vmem:[#allocation3] sm:$0x3]
  %v199 = vpack.c.bf16 %v197, %v197
  %v208 = vunpack.c.l.b16 %v187
  %v209 = vunpack.c.h.b16 %v187
  %v210 = vunpack.c.l.b16 %v188
  %v211 = vunpack.c.h.b16 %v188
  %v212 = vunpack.c.l.b16 %v189
  %v213 = vunpack.c.h.b16 %v189
  %v214 = vunpack.c.l.b16 %v190
  %v215 = vunpack.c.h.b16 %v190
  %v216 = vunpack.c.l.b16 %v191
  %v217 = vunpack.c.h.b16 %v191
  %v218 = vunpack.c.l.b16 %v192
  %v219 = vunpack.c.h.b16 %v192
  %v220 = vunpack.c.l.b16 %v193
  %v221 = vunpack.c.h.b16 %v193
  %v222 = vunpack.c.l.b16 %v194
  %v223 = vunpack.c.h.b16 %v194
  %v224 = vpack.c.b16 %v210, %v208
  %v225 = vpack.c.b16 %v211, %v209
  %v226 = vpack.c.b16 %v214, %v212
  %v227 = vpack.c.b16 %v215, %v213
  %v228 = vpack.c.b16 %v218, %v216
  %v229 = vpack.c.b16 %v219, %v217
  %v230 = vpack.c.b16 %v222, %v220
  %v231 = vpack.c.b16 %v223, %v221
  %vm240 = vcmask 523264
  %v242 = vsel %vm240, %v199, 0
  %244 = vmatprep.subr.bf16.mxu0 %v225
  %245 = vmatpush1.bf16.msra.mxu0 %v224
  %246 = vmatprep.subr.bf16.mxu0 %v227
  %247 = vmatpush1.bf16.msra.mxu0 %v226
  %248 = vmatprep.subr.bf16.mxu0 %v229
  %249 = vmatpush1.bf16.msra.mxu0 %v228
  %250 = vmatprep.subr.bf16.mxu0 %v231
  %251 = vmatpush1.bf16.msra.mxu0 %v230
  %252 = vmatprep.subr.bf16.mxu0 0
  %253 = vmatpush1.bf16.msra.mxu0 0
  %254 = vmatprep.subr.bf16.mxu0 0
  %255 = vmatpush1.bf16.msra.mxu0 0
  %256 = vmatprep.subr.bf16.mxu0 0
  %257 = vmatpush1.bf16.msra.mxu0 0
  %258 = vmatprep.subr.bf16.mxu0 0
  %259 = vmatpush1.bf16.msra.mxu0 0
  %260 = vmatprep.subr.bf16.mxu0 0
  %261 = vmatpush1.bf16.msra.mxu0 0
  %262 = vmatprep.subr.bf16.mxu0 0
  %263 = vmatpush1.bf16.msra.mxu0 0
  %264 = vmatprep.subr.bf16.mxu0 0
  %265 = vmatpush1.bf16.msra.mxu0 0
  %266 = vmatprep.subr.bf16.mxu0 0
  %267 = vmatpush1.bf16.msra.mxu0 0
  %268 = vmatprep.subr.bf16.mxu0 0
  %269 = vmatpush1.bf16.msra.mxu0 0
  %270 = vmatprep.subr.bf16.mxu0 0
  %271 = vmatpush1.bf16.msra.mxu0 0
  %272 = vmatprep.subr.bf16.mxu0 0
  %273 = vmatpush1.bf16.msra.mxu0 0
  %274 = vmatprep.subr.bf16.mxu0 0
  %275 = vmatpush1.bf16.msra.mxu0 0
  %276 = vmatprep.mubr.bf16.mxu0 0
  %277 = vmatmul.mubr.bf16.gmra.mrb[0].mxu0 %v242
  %v278 = vpop.f32.mrb[0].mxu0
  %v279 = vadd.f32 0.0, %v278
  %v280 = vpop.f32.mrb[0].mxu0
  %v281 = vadd.f32 0.0, %v280
  %v282 = vpop.f32.mrb[0].mxu0
  %v283 = vpop.f32.mrb[0].mxu0
  %284 = vdwg.mxu0
  %v285 = vadd.f32 %v179, %v279
  %v286 = vadd.f32 %v181, %v281
  %v287 = vxor.u32 %v285, 2147483648
  %v288 = vmul.f32 %v287, 1.442695
  %v289 = vpow.pop %v288
  %v290 = vadd.f32 %v289, 1.0
  %v291 = vrcp.pop %v290
  %v292 = vmul.f32 1.0, %v291
  %v293 = vtanh.pop %v286
  %v294 = vxor.u32 %v286, 2147483648
  %v295 = vmul.f32 %v294, 1.442695
  %v296 = vpow.pop %v295
  %v297 = vadd.f32 %v296, 1.0
  %v298 = vrcp.pop %v297
  %v299 = vmul.f32 1.0, %v298
  %301 = vrot.lane.b32.xlu0 %v198, 64
  %v302 = vpop.permute.xlu0 %301
  %v304 = vmul.f32 %v292, %v302
  %v305 = vmul.f32 %v292, %v293
  %307 = vrot.lane.b32.xlu0 %v305, 64
  %v308 = vpop.permute.xlu0 %307
  %v310 = vadd.f32 %v304, %v308
  %v311 = vtanh.pop %v310
  %v312 = vmul.f32 %v299, %v311
  %v313 = vstv %s196
  %vm314 = vcmp.lt.s32.totalorder %v313, %v195
  %v315 = vsel %vm314, 1, 0
  %316 = vset.pattern.permute.xlu0 0
  %317 = vperm.xlu0 %316, %v315
  %v318 = vpop.permute.xlu0 %317
  %vm319 = vcmp.eq.s32.totalorder %v318, 1
  %321 = vrot.lane.b32.xlu0 %v197, 64
  %v322 = vpop.permute.xlu0 %321
  %v324 = vsel %vm319, %v312, %v322
  %v325 = vsel %vm319, %v310, %v302
  %v326 = vsel %vm319, %v312, 0.0
  %328 = vrot.lane.b32.xlu0 %v326, 64
  %v329 = vpop.permute.xlu0 %328
  %vm331 = vcmask 517120
  %332 = vst.msk [vmem:[%s5] sm:$0x3] %vm331, %v329
  %v333 = vpack.c.bf16 %v324, %v324
  %335 = vrot.lane.b32.xlu0 %v333, 64
  %v336 = vpop.permute.xlu0 %335
  %v338 = vsel %vm240, %v336, 0
  %340 = vmatprep.subr.bf16.mxu0 %v225
  %341 = vmatpush1.bf16.msra.mxu0 %v224
  %342 = vmatprep.subr.bf16.mxu0 %v227
  %343 = vmatpush1.bf16.msra.mxu0 %v226
  %344 = vmatprep.subr.bf16.mxu0 %v229
  %345 = vmatpush1.bf16.msra.mxu0 %v228
  %346 = vmatprep.subr.bf16.mxu0 %v231
  %347 = vmatpush1.bf16.msra.mxu0 %v230
  %348 = vmatprep.subr.bf16.mxu0 0
  %349 = vmatpush1.bf16.msra.mxu0 0
  %350 = vmatprep.subr.bf16.mxu0 0
  %351 = vmatpush1.bf16.msra.mxu0 0
  %352 = vmatprep.subr.bf16.mxu0 0
  %353 = vmatpush1.bf16.msra.mxu0 0
  %354 = vmatprep.subr.bf16.mxu0 0
  %355 = vmatpush1.bf16.msra.mxu0 0
  %356 = vmatprep.subr.bf16.mxu0 0
  %357 = vmatpush1.bf16.msra.mxu0 0
  %358 = vmatprep.subr.bf16.mxu0 0
  %359 = vmatpush1.bf16.msra.mxu0 0
  %360 = vmatprep.subr.bf16.mxu0 0
  %361 = vmatpush1.bf16.msra.mxu0 0
  %362 = vmatprep.subr.bf16.mxu0 0
  %363 = vmatpush1.bf16.msra.mxu0 0
  %364 = vmatprep.subr.bf16.mxu0 0
  %365 = vmatpush1.bf16.msra.mxu0 0
  %366 = vmatprep.subr.bf16.mxu0 0
  %367 = vmatpush1.bf16.msra.mxu0 0
  %368 = vmatprep.subr.bf16.mxu0 0
  %369 = vmatpush1.bf16.msra.mxu0 0
  %370 = vmatprep.subr.bf16.mxu0 0
  %371 = vmatpush1.bf16.msra.mxu0 0
  %372 = vmatprep.mubr.bf16.mxu0 0
  %373 = vmatmul.mubr.bf16.gmra.mrb[0].mxu0 %v338
  %v374 = vpop.f32.mrb[0].mxu0
  %v375 = vadd.f32 0.0, %v374
  %v376 = vpop.f32.mrb[0].mxu0
  %v377 = vadd.f32 0.0, %v376
  %v378 = vpop.f32.mrb[0].mxu0
  %v379 = vpop.f32.mrb[0].mxu0
  %380 = vdwg.mxu0
  %v383 = vrot.slane %v375, 6
  %v384 = vrot.slane %v377, 6
  %v387 = vadd.f32 %v179, %v383
  %v388 = vadd.f32 %v181, %v384
  %v389 = vxor.u32 %v387, 2147483648
  %v390 = vmul.f32 %v389, 1.442695
  %v391 = vpow.pop %v390
  %v392 = vadd.f32 %v391, 1.0
  %v393 = vrcp.pop %v392
  %v394 = vmul.f32 1.0, %v393
  %v395 = vtanh.pop %v388
  %v396 = vxor.u32 %v388, 2147483648
  %v397 = vmul.f32 %v396, 1.442695
  %v398 = vpow.pop %v397
  %v399 = vadd.f32 %v398, 1.0
  %v400 = vrcp.pop %v399
  %v401 = vmul.f32 1.0, %v400
  %v403 = vrot.slane %v325, 6
  %v405 = vmul.f32 %v394, %v403
  %v406 = vmul.f32 %v394, %v395
  %408 = vrot.lane.b32.xlu0 %v406, 64
  %v409 = vpop.permute.xlu0 %408
  %v411 = vadd.f32 %v405, %v409
  %v412 = vtanh.pop %v411
  %v413 = vmul.f32 %v401, %v412
  %s414 = sadd.s32 %s196, 1
  %v415 = vstv %s414
  %vm416 = vcmp.lt.s32.totalorder %v415, %v195
  %v417 = vsel %vm416, 1, 0
  %418 = vset.pattern.permute.xlu0 0
  %419 = vperm.xlu0 %418, %v417
  %v420 = vpop.permute.xlu0 %419
  %vm421 = vcmp.eq.s32.totalorder %v420, 1
  %v423 = vrot.slane %v413, 2
  %424 = vrot.lane.b32.xlu0 %v423, 64
  %v425 = vpop.permute.xlu0 %424
  %428 = vrot.lane.b32.xlu0 %v324, 64
  %v429 = vpop.permute.xlu0 %428
  %v431 = vsel %vm421, %v425, %v429
  %v433 = vrot.slane %v411, 2
  %434 = vrot.lane.b32.xlu0 %v433, 64
  %v435 = vpop.permute.xlu0 %434
  %437 = vrot.lane.b32.xlu0 %v325, 64
  %v438 = vpop.permute.xlu0 %437
  %v440 = vsel %vm421, %v435, %v438
  %v441 = vsel %vm421, %v425, 0.0
  %442 = vst.msk [vmem:[%s5 + $0x2] sm:$0x3] %vm331, %v441
  %v443 = vpack.c.bf16 %v431, %v431
  %v445 = vsel %vm240, %v443, 0
  %447 = vmatprep.subr.bf16.mxu0 %v225
  %448 = vmatpush1.bf16.msra.mxu0 %v224
  %449 = vmatprep.subr.bf16.mxu0 %v227
  %450 = vmatpush1.bf16.msra.mxu0 %v226
  %451 = vmatprep.subr.bf16.mxu0 %v229
  %452 = vmatpush1.bf16.msra.mxu0 %v228
  %453 = vmatprep.subr.bf16.mxu0 %v231
  %454 = vmatpush1.bf16.msra.mxu0 %v230
  %455 = vmatprep.subr.bf16.mxu0 0
  %456 = vmatpush1.bf16.msra.mxu0 0
  %457 = vmatprep.subr.bf16.mxu0 0
  %458 = vmatpush1.bf16.msra.mxu0 0
  %459 = vmatprep.subr.bf16.mxu0 0
  %460 = vmatpush1.bf16.msra.mxu0 0
  %461 = vmatprep.subr.bf16.mxu0 0
  %462 = vmatpush1.bf16.msra.mxu0 0
  %463 = vmatprep.subr.bf16.mxu0 0
  %464 = vmatpush1.bf16.msra.mxu0 0
  %465 = vmatprep.subr.bf16.mxu0 0
  %466 = vmatpush1.bf16.msra.mxu0 0
  %467 = vmatprep.subr.bf16.mxu0 0
  %468 = vmatpush1.bf16.msra.mxu0 0
  %469 = vmatprep.subr.bf16.mxu0 0
  %470 = vmatpush1.bf16.msra.mxu0 0
  %471 = vmatprep.subr.bf16.mxu0 0
  %472 = vmatpush1.bf16.msra.mxu0 0
  %473 = vmatprep.subr.bf16.mxu0 0
  %474 = vmatpush1.bf16.msra.mxu0 0
  %475 = vmatprep.subr.bf16.mxu0 0
  %476 = vmatpush1.bf16.msra.mxu0 0
  %477 = vmatprep.subr.bf16.mxu0 0
  %478 = vmatpush1.bf16.msra.mxu0 0
  %479 = vmatprep.mubr.bf16.mxu0 0
  %480 = vmatmul.mubr.bf16.gmra.mrb[0].mxu0 %v445
  %v481 = vpop.f32.mrb[0].mxu0
  %v482 = vadd.f32 0.0, %v481
  %v483 = vpop.f32.mrb[0].mxu0
  %v484 = vadd.f32 0.0, %v483
  %v485 = vpop.f32.mrb[0].mxu0
  %v486 = vpop.f32.mrb[0].mxu0
  %487 = vdwg.mxu0
  %v490 = vrot.slane %v482, 4
  %v491 = vrot.slane %v484, 4
  %v494 = vadd.f32 %v179, %v490
  %v495 = vadd.f32 %v181, %v491
  %v496 = vxor.u32 %v494, 2147483648
  %v497 = vmul.f32 %v496, 1.442695
  %v498 = vpow.pop %v497
  %v499 = vadd.f32 %v498, 1.0
  %v500 = vrcp.pop %v499
  %v501 = vmul.f32 1.0, %v500
  %v502 = vtanh.pop %v495
  %v503 = vxor.u32 %v495, 2147483648
  %v504 = vmul.f32 %v503, 1.442695
  %v505 = vpow.pop %v504
  %v506 = vadd.f32 %v505, 1.0
  %v507 = vrcp.pop %v506
  %v508 = vmul.f32 1.0, %v507
  %v510 = vrot.slane %v440, 4
  %511 = vrot.lane.b32.xlu0 %v510, 64
  %v512 = vpop.permute.xlu0 %511
  %v514 = vmul.f32 %v501, %v512
  %v515 = vmul.f32 %v501, %v502
  %517 = vrot.lane.b32.xlu0 %v515, 64
  %v518 = vpop.permute.xlu0 %517
  %v520 = vadd.f32 %v514, %v518
  %v521 = vtanh.pop %v520
  %v522 = vmul.f32 %v508, %v521
  %s523 = sadd.s32 %s196, 2
  %v524 = vstv %s523
  %vm525 = vcmp.lt.s32.totalorder %v524, %v195
  %v526 = vsel %vm525, 1, 0
  %527 = vset.pattern.permute.xlu0 0
  %528 = vperm.xlu0 %527, %v526
  %v529 = vpop.permute.xlu0 %528
  %vm530 = vcmp.eq.s32.totalorder %v529, 1
  %v532 = vrot.slane %v522, 4
  %533 = vrot.lane.b32.xlu0 %v532, 64
  %v534 = vpop.permute.xlu0 %533
  %v536 = vsel %vm530, %v534, %v431
  %v538 = vrot.slane %v520, 4
  %539 = vrot.lane.b32.xlu0 %v538, 64
  %v540 = vpop.permute.xlu0 %539
  %v542 = vsel %vm530, %v540, %v440
  %v543 = vsel %vm530, %v534, 0.0
  %544 = vst.msk [vmem:[%s5 + $0x4] sm:$0x3] %vm331, %v543
  %v545 = vpack.c.bf16 %v536, %v536
  %v547 = vsel %vm240, %v545, 0
  %549 = vmatprep.subr.bf16.mxu0 %v225
  %550 = vmatpush1.bf16.msra.mxu0 %v224
  %551 = vmatprep.subr.bf16.mxu0 %v227
  %552 = vmatpush1.bf16.msra.mxu0 %v226
  %553 = vmatprep.subr.bf16.mxu0 %v229
  %554 = vmatpush1.bf16.msra.mxu0 %v228
  %555 = vmatprep.subr.bf16.mxu0 %v231
  %556 = vmatpush1.bf16.msra.mxu0 %v230
  %557 = vmatprep.subr.bf16.mxu0 0
  %558 = vmatpush1.bf16.msra.mxu0 0
  %559 = vmatprep.subr.bf16.mxu0 0
  %560 = vmatpush1.bf16.msra.mxu0 0
  %561 = vmatprep.subr.bf16.mxu0 0
  %562 = vmatpush1.bf16.msra.mxu0 0
  %563 = vmatprep.subr.bf16.mxu0 0
  %564 = vmatpush1.bf16.msra.mxu0 0
  %565 = vmatprep.subr.bf16.mxu0 0
  %566 = vmatpush1.bf16.msra.mxu0 0
  %567 = vmatprep.subr.bf16.mxu0 0
  %568 = vmatpush1.bf16.msra.mxu0 0
  %569 = vmatprep.subr.bf16.mxu0 0
  %570 = vmatpush1.bf16.msra.mxu0 0
  %571 = vmatprep.subr.bf16.mxu0 0
  %572 = vmatpush1.bf16.msra.mxu0 0
  %573 = vmatprep.subr.bf16.mxu0 0
  %574 = vmatpush1.bf16.msra.mxu0 0
  %575 = vmatprep.subr.bf16.mxu0 0
  %576 = vmatpush1.bf16.msra.mxu0 0
  %577 = vmatprep.subr.bf16.mxu0 0
  %578 = vmatpush1.bf16.msra.mxu0 0
  %579 = vmatprep.subr.bf16.mxu0 0
  %580 = vmatpush1.bf16.msra.mxu0 0
  %581 = vmatprep.mubr.bf16.mxu0 0
  %582 = vmatmul.mubr.bf16.gmra.mrb[0].mxu0 %v547
  %v583 = vpop.f32.mrb[0].mxu0
  %v584 = vadd.f32 0.0, %v583
  %v585 = vpop.f32.mrb[0].mxu0
  %v586 = vadd.f32 0.0, %v585
  %v587 = vpop.f32.mrb[0].mxu0
  %v588 = vpop.f32.mrb[0].mxu0
  %589 = vdwg.mxu0
  %v592 = vrot.slane %v584, 2
  %v593 = vrot.slane %v586, 2
  %v596 = vadd.f32 %v179, %v592
  %v597 = vadd.f32 %v181, %v593
  %v598 = vxor.u32 %v596, 2147483648
  %v599 = vmul.f32 %v598, 1.442695
  %v600 = vpow.pop %v599
  %v601 = vadd.f32 %v600, 1.0
  %v602 = vrcp.pop %v601
  %v603 = vmul.f32 1.0, %v602
  %v604 = vtanh.pop %v597
  %v605 = vxor.u32 %v597, 2147483648
  %v606 = vmul.f32 %v605, 1.442695
  %v607 = vpow.pop %v606
  %v608 = vadd.f32 %v607, 1.0
  %v609 = vrcp.pop %v608
  %v610 = vmul.f32 1.0, %v609
  %v612 = vrot.slane %v542, 2
  %613 = vrot.lane.b32.xlu0 %v612, 64
  %v614 = vpop.permute.xlu0 %613
  %v616 = vmul.f32 %v603, %v614
  %v617 = vmul.f32 %v603, %v604
  %619 = vrot.lane.b32.xlu0 %v617, 64
  %v620 = vpop.permute.xlu0 %619
  %v622 = vadd.f32 %v616, %v620
  %v623 = vtanh.pop %v622
  %v624 = vmul.f32 %v610, %v623
  %s625 = sadd.s32 %s196, 3
  %v626 = vstv %s625
  %vm627 = vcmp.lt.s32.totalorder %v626, %v195
  %v628 = vsel %vm627, 1, 0
  %629 = vset.pattern.permute.xlu0 0
  %630 = vperm.xlu0 %629, %v628
  %v631 = vpop.permute.xlu0 %630
  %vm632 = vcmp.eq.s32.totalorder %v631, 1
  %v634 = vrot.slane %v624, 6
  %635 = vrot.lane.b32.xlu0 %v634, 64
  %v636 = vpop.permute.xlu0 %635
  %v638 = vsel %vm632, %v636, %v536
  %v640 = vrot.slane %v622, 6
  %641 = vrot.lane.b32.xlu0 %v640, 64
  %v642 = vpop.permute.xlu0 %641
  %v644 = vsel %vm632, %v642, %v542
  %v645 = vsel %vm632, %v636, 0.0
  %646 = vst.msk [vmem:[%s5 + $0x6] sm:$0x3] %vm331, %v645
  %v647 = vpack.c.bf16 %v638, %v638
  %v649 = vsel %vm240, %v647, 0
  %651 = vmatprep.subr.bf16.mxu0 %v225
  %652 = vmatpush1.bf16.msra.mxu0 %v224
  %653 = vmatprep.subr.bf16.mxu0 %v227
  %654 = vmatpush1.bf16.msra.mxu0 %v226
  %655 = vmatprep.subr.bf16.mxu0 %v229
  %656 = vmatpush1.bf16.msra.mxu0 %v228
  %657 = vmatprep.subr.bf16.mxu0 %v231
  %658 = vmatpush1.bf16.msra.mxu0 %v230
  %659 = vmatprep.subr.bf16.mxu0 0
  %660 = vmatpush1.bf16.msra.mxu0 0
  %661 = vmatprep.subr.bf16.mxu0 0
  %662 = vmatpush1.bf16.msra.mxu0 0
  %663 = vmatprep.subr.bf16.mxu0 0
  %664 = vmatpush1.bf16.msra.mxu0 0
  %665 = vmatprep.subr.bf16.mxu0 0
  %666 = vmatpush1.bf16.msra.mxu0 0
  %667 = vmatprep.subr.bf16.mxu0 0
  %668 = vmatpush1.bf16.msra.mxu0 0
  %669 = vmatprep.subr.bf16.mxu0 0
  %670 = vmatpush1.bf16.msra.mxu0 0
  %671 = vmatprep.subr.bf16.mxu0 0
  %672 = vmatpush1.bf16.msra.mxu0 0
  %673 = vmatprep.subr.bf16.mxu0 0
  %674 = vmatpush1.bf16.msra.mxu0 0
  %675 = vmatprep.subr.bf16.mxu0 0
  %676 = vmatpush1.bf16.msra.mxu0 0
  %677 = vmatprep.subr.bf16.mxu0 0
  %678 = vmatpush1.bf16.msra.mxu0 0
  %679 = vmatprep.subr.bf16.mxu0 0
  %680 = vmatpush1.bf16.msra.mxu0 0
  %681 = vmatprep.subr.bf16.mxu0 0
  %682 = vmatpush1.bf16.msra.mxu0 0
  %683 = vmatprep.mubr.bf16.mxu0 0
  %684 = vmatmul.mubr.bf16.gmra.mrb[0].mxu0 %v649
  %v685 = vpop.f32.mrb[0].mxu0
  %v686 = vadd.f32 0.0, %v685
  %v687 = vpop.f32.mrb[0].mxu0
  %v688 = vadd.f32 0.0, %v687
  %v689 = vpop.f32.mrb[0].mxu0
  %v690 = vpop.f32.mrb[0].mxu0
  %691 = vdwg.mxu0
  %v692 = vadd.f32 %v183, %v686
  %v693 = vadd.f32 %v185, %v688
  %v694 = vxor.u32 %v692, 2147483648
  %v695 = vmul.f32 %v694, 1.442695
  %v696 = vpow.pop %v695
  %v697 = vadd.f32 %v696, 1.0
  %v698 = vrcp.pop %v697
  %v699 = vmul.f32 1.0, %v698
  %v700 = vtanh.pop %v693
  %v701 = vxor.u32 %v693, 2147483648
  %v702 = vmul.f32 %v701, 1.442695
  %v703 = vpow.pop %v702
  %v704 = vadd.f32 %v703, 1.0
  %v705 = vrcp.pop %v704
  %v706 = vmul.f32 1.0, %v705
  %708 = vrot.lane.b32.xlu0 %v644, 64
  %v709 = vpop.permute.xlu0 %708
  %v711 = vmul.f32 %v699, %v709
  %v712 = vmul.f32 %v699, %v700
  %714 = vrot.lane.b32.xlu0 %v712, 64
  %v715 = vpop.permute.xlu0 %714
  %v717 = vadd.f32 %v711, %v715
  %v718 = vtanh.pop %v717
  %v719 = vmul.f32 %v706, %v718
  %s720 = sadd.s32 %s196, 4
  %v721 = vstv %s720
  %vm722 = vcmp.lt.s32.totalorder %v721, %v195
  %v723 = vsel %vm722, 1, 0
  %724 = vset.pattern.permute.xlu0 0
  %725 = vperm.xlu0 %724, %v723
  %v726 = vpop.permute.xlu0 %725
  %vm727 = vcmp.eq.s32.totalorder %v726, 1
  %729 = vrot.lane.b32.xlu0 %v638, 64
  %v730 = vpop.permute.xlu0 %729
  %v732 = vsel %vm727, %v719, %v730
  %v733 = vsel %vm727, %v717, %v709
  %v734 = vsel %vm727, %v719, 0.0
  %736 = vrot.lane.b32.xlu0 %v734, 64
  %v737 = vpop.permute.xlu0 %736
  %739 = vst.msk [vmem:[%s5 + $0x8] sm:$0x3] %vm331, %v737
  %v740 = vpack.c.bf16 %v732, %v732
  %742 = vrot.lane.b32.xlu0 %v740, 64
  %v743 = vpop.permute.xlu0 %742
  %v745 = vsel %vm240, %v743, 0
  %747 = vmatprep.subr.bf16.mxu0 %v225
  %748 = vmatpush1.bf16.msra.mxu0 %v224
  %749 = vmatprep.subr.bf16.mxu0 %v227
  %750 = vmatpush1.bf16.msra.mxu0 %v226
  %751 = vmatprep.subr.bf16.mxu0 %v229
  %752 = vmatpush1.bf16.msra.mxu0 %v228
  %753 = vmatprep.subr.bf16.mxu0 %v231
  %754 = vmatpush1.bf16.msra.mxu0 %v230
  %755 = vmatprep.subr.bf16.mxu0 0
  %756 = vmatpush1.bf16.msra.mxu0 0
  %757 = vmatprep.subr.bf16.mxu0 0
  %758 = vmatpush1.bf16.msra.mxu0 0
  %759 = vmatprep.subr.bf16.mxu0 0
  %760 = vmatpush1.bf16.msra.mxu0 0
  %761 = vmatprep.subr.bf16.mxu0 0
  %762 = vmatpush1.bf16.msra.mxu0 0
  %763 = vmatprep.subr.bf16.mxu0 0
  %764 = vmatpush1.bf16.msra.mxu0 0
  %765 = vmatprep.subr.bf16.mxu0 0
  %766 = vmatpush1.bf16.msra.mxu0 0
  %767 = vmatprep.subr.bf16.mxu0 0
  %768 = vmatpush1.bf16.msra.mxu0 0
  %769 = vmatprep.subr.bf16.mxu0 0
  %770 = vmatpush1.bf16.msra.mxu0 0
  %771 = vmatprep.subr.bf16.mxu0 0
  %772 = vmatpush1.bf16.msra.mxu0 0
  %773 = vmatprep.subr.bf16.mxu0 0
  %774 = vmatpush1.bf16.msra.mxu0 0
  %775 = vmatprep.subr.bf16.mxu0 0
  %776 = vmatpush1.bf16.msra.mxu0 0
  %777 = vmatprep.subr.bf16.mxu0 0
  %778 = vmatpush1.bf16.msra.mxu0 0
  %779 = vmatprep.mubr.bf16.mxu0 0
  %780 = vmatmul.mubr.bf16.gmra.mrb[0].mxu0 %v745
  %v781 = vpop.f32.mrb[0].mxu0
  %v782 = vadd.f32 0.0, %v781
  %v783 = vpop.f32.mrb[0].mxu0
  %v784 = vadd.f32 0.0, %v783
  %v785 = vpop.f32.mrb[0].mxu0
  %v786 = vpop.f32.mrb[0].mxu0
  %787 = vdwg.mxu0
  %v790 = vrot.slane %v782, 6
  %v791 = vrot.slane %v784, 6
  %v794 = vadd.f32 %v183, %v790
  %v795 = vadd.f32 %v185, %v791
  %v796 = vxor.u32 %v794, 2147483648
  %v797 = vmul.f32 %v796, 1.442695
  %v798 = vpow.pop %v797
  %v799 = vadd.f32 %v798, 1.0
  %v800 = vrcp.pop %v799
  %v801 = vmul.f32 1.0, %v800
  %v802 = vtanh.pop %v795
  %v803 = vxor.u32 %v795, 2147483648
  %v804 = vmul.f32 %v803, 1.442695
  %v805 = vpow.pop %v804
  %v806 = vadd.f32 %v805, 1.0
  %v807 = vrcp.pop %v806
  %v808 = vmul.f32 1.0, %v807
  %v810 = vrot.slane %v733, 6
  %v812 = vmul.f32 %v801, %v810
  %v813 = vmul.f32 %v801, %v802
  %815 = vrot.lane.b32.xlu0 %v813, 64
  %v816 = vpop.permute.xlu0 %815
  %v818 = vadd.f32 %v812, %v816
  %v819 = vtanh.pop %v818
  %v820 = vmul.f32 %v808, %v819
  %s821 = sadd.s32 %s196, 5
  %v822 = vstv %s821
  %vm823 = vcmp.lt.s32.totalorder %v822, %v195
  %v824 = vsel %vm823, 1, 0
  %825 = vset.pattern.permute.xlu0 0
  %826 = vperm.xlu0 %825, %v824
  %v827 = vpop.permute.xlu0 %826
  %vm828 = vcmp.eq.s32.totalorder %v827, 1
  %v830 = vrot.slane %v820, 2
  %831 = vrot.lane.b32.xlu0 %v830, 64
  %v832 = vpop.permute.xlu0 %831
  %835 = vrot.lane.b32.xlu0 %v732, 64
  %v836 = vpop.permute.xlu0 %835
  %v838 = vsel %vm828, %v832, %v836
  %v840 = vrot.slane %v818, 2
  %841 = vrot.lane.b32.xlu0 %v840, 64
  %v842 = vpop.permute.xlu0 %841
  %844 = vrot.lane.b32.xlu0 %v733, 64
  %v845 = vpop.permute.xlu0 %844
  %v847 = vsel %vm828, %v842, %v845
  %v848 = vsel %vm828, %v832, 0.0
  %849 = vst.msk [vmem:[%s5 + $0xa] sm:$0x3] %vm331, %v848
  %v850 = vpack.c.bf16 %v838, %v838
  %v852 = vsel %vm240, %v850, 0
  %854 = vmatprep.subr.bf16.mxu0 %v225
  %855 = vmatpush1.bf16.msra.mxu0 %v224
  %856 = vmatprep.subr.bf16.mxu0 %v227
  %857 = vmatpush1.bf16.msra.mxu0 %v226
  %858 = vmatprep.subr.bf16.mxu0 %v229
  %859 = vmatpush1.bf16.msra.mxu0 %v228
  %860 = vmatprep.subr.bf16.mxu0 %v231
  %861 = vmatpush1.bf16.msra.mxu0 %v230
  %862 = vmatprep.subr.bf16.mxu0 0
  %863 = vmatpush1.bf16.msra.mxu0 0
  %864 = vmatprep.subr.bf16.mxu0 0
  %865 = vmatpush1.bf16.msra.mxu0 0
  %866 = vmatprep.subr.bf16.mxu0 0
  %867 = vmatpush1.bf16.msra.mxu0 0
  %868 = vmatprep.subr.bf16.mxu0 0
  %869 = vmatpush1.bf16.msra.mxu0 0
  %870 = vmatprep.subr.bf16.mxu0 0
  %871 = vmatpush1.bf16.msra.mxu0 0
  %872 = vmatprep.subr.bf16.mxu0 0
  %873 = vmatpush1.bf16.msra.mxu0 0
  %874 = vmatprep.subr.bf16.mxu0 0
  %875 = vmatpush1.bf16.msra.mxu0 0
  %876 = vmatprep.subr.bf16.mxu0 0
  %877 = vmatpush1.bf16.msra.mxu0 0
  %878 = vmatprep.subr.bf16.mxu0 0
  %879 = vmatpush1.bf16.msra.mxu0 0
  %880 = vmatprep.subr.bf16.mxu0 0
  %881 = vmatpush1.bf16.msra.mxu0 0
  %882 = vmatprep.subr.bf16.mxu0 0
  %883 = vmatpush1.bf16.msra.mxu0 0
  %884 = vmatprep.subr.bf16.mxu0 0
  %885 = vmatpush1.bf16.msra.mxu0 0
  %886 = vmatprep.mubr.bf16.mxu0 0
  %887 = vmatmul.mubr.bf16.gmra.mrb[0].mxu0 %v852
  %v888 = vpop.f32.mrb[0].mxu0
  %v889 = vadd.f32 0.0, %v888
  %v890 = vpop.f32.mrb[0].mxu0
  %v891 = vadd.f32 0.0, %v890
  %v892 = vpop.f32.mrb[0].mxu0
  %v893 = vpop.f32.mrb[0].mxu0
  %894 = vdwg.mxu0
  %v897 = vrot.slane %v889, 4
  %v898 = vrot.slane %v891, 4
  %v901 = vadd.f32 %v183, %v897
  %v902 = vadd.f32 %v185, %v898
  %v903 = vxor.u32 %v901, 2147483648
  %v904 = vmul.f32 %v903, 1.442695
  %v905 = vpow.pop %v904
  %v906 = vadd.f32 %v905, 1.0
  %v907 = vrcp.pop %v906
  %v908 = vmul.f32 1.0, %v907
  %v909 = vtanh.pop %v902
  %v910 = vxor.u32 %v902, 2147483648
  %v911 = vmul.f32 %v910, 1.442695
  %v912 = vpow.pop %v911
  %v913 = vadd.f32 %v912, 1.0
  %v914 = vrcp.pop %v913
  %v915 = vmul.f32 1.0, %v914
  %v917 = vrot.slane %v847, 4
  %918 = vrot.lane.b32.xlu0 %v917, 64
  %v919 = vpop.permute.xlu0 %918
  %v921 = vmul.f32 %v908, %v919
  %v922 = vmul.f32 %v908, %v909
  %924 = vrot.lane.b32.xlu0 %v922, 64
  %v925 = vpop.permute.xlu0 %924
  %v927 = vadd.f32 %v921, %v925
  %v928 = vtanh.pop %v927
  %v929 = vmul.f32 %v915, %v928
  %s930 = sadd.s32 %s196, 6
  %v931 = vstv %s930
  %vm932 = vcmp.lt.s32.totalorder %v931, %v195
  %v933 = vsel %vm932, 1, 0
  %934 = vset.pattern.permute.xlu0 0
  %935 = vperm.xlu0 %934, %v933
  %v936 = vpop.permute.xlu0 %935
  %vm937 = vcmp.eq.s32.totalorder %v936, 1
  %v939 = vrot.slane %v929, 4
  %940 = vrot.lane.b32.xlu0 %v939, 64
  %v941 = vpop.permute.xlu0 %940
  %v943 = vsel %vm937, %v941, %v838
  %v945 = vrot.slane %v927, 4
  %946 = vrot.lane.b32.xlu0 %v945, 64
  %v947 = vpop.permute.xlu0 %946
  %v949 = vsel %vm937, %v947, %v847
  %v950 = vsel %vm937, %v941, 0.0
  %951 = vst.msk [vmem:[%s5 + $0xc] sm:$0x3] %vm331, %v950
  %v952 = vpack.c.bf16 %v943, %v943
  %v954 = vsel %vm240, %v952, 0
  %956 = vmatprep.subr.bf16.mxu0 %v225
  %957 = vmatpush1.bf16.msra.mxu0 %v224
  %958 = vmatprep.subr.bf16.mxu0 %v227
  %959 = vmatpush1.bf16.msra.mxu0 %v226
  %960 = vmatprep.subr.bf16.mxu0 %v229
  %961 = vmatpush1.bf16.msra.mxu0 %v228
  %962 = vmatprep.subr.bf16.mxu0 %v231
  %963 = vmatpush1.bf16.msra.mxu0 %v230
  %964 = vmatprep.subr.bf16.mxu0 0
  %965 = vmatpush1.bf16.msra.mxu0 0
  %966 = vmatprep.subr.bf16.mxu0 0
  %967 = vmatpush1.bf16.msra.mxu0 0
  %968 = vmatprep.subr.bf16.mxu0 0
  %969 = vmatpush1.bf16.msra.mxu0 0
  %970 = vmatprep.subr.bf16.mxu0 0
  %971 = vmatpush1.bf16.msra.mxu0 0
  %972 = vmatprep.subr.bf16.mxu0 0
  %973 = vmatpush1.bf16.msra.mxu0 0
  %974 = vmatprep.subr.bf16.mxu0 0
  %975 = vmatpush1.bf16.msra.mxu0 0
  %976 = vmatprep.subr.bf16.mxu0 0
  %977 = vmatpush1.bf16.msra.mxu0 0
  %978 = vmatprep.subr.bf16.mxu0 0
  %979 = vmatpush1.bf16.msra.mxu0 0
  %980 = vmatprep.subr.bf16.mxu0 0
  %981 = vmatpush1.bf16.msra.mxu0 0
  %982 = vmatprep.subr.bf16.mxu0 0
  %983 = vmatpush1.bf16.msra.mxu0 0
  %984 = vmatprep.subr.bf16.mxu0 0
  %985 = vmatpush1.bf16.msra.mxu0 0
  %986 = vmatprep.subr.bf16.mxu0 0
  %987 = vmatpush1.bf16.msra.mxu0 0
  %988 = vmatprep.mubr.bf16.mxu0 0
  %989 = vmatmul.mubr.bf16.gmra.mrb[0].mxu0 %v954
  %v990 = vpop.f32.mrb[0].mxu0
  %v991 = vadd.f32 0.0, %v990
  %v992 = vpop.f32.mrb[0].mxu0
  %v993 = vadd.f32 0.0, %v992
  %v994 = vpop.f32.mrb[0].mxu0
  %v995 = vpop.f32.mrb[0].mxu0
  %996 = vdwg.mxu0
  %v999 = vrot.slane %v991, 2
  %v1000 = vrot.slane %v993, 2
  %v1003 = vadd.f32 %v183, %v999
  %v1004 = vadd.f32 %v185, %v1000
  %v1005 = vxor.u32 %v1003, 2147483648
  %v1006 = vmul.f32 %v1005, 1.442695
  %v1007 = vpow.pop %v1006
  %v1008 = vadd.f32 %v1007, 1.0
  %v1009 = vrcp.pop %v1008
  %v1010 = vmul.f32 1.0, %v1009
  %v1011 = vtanh.pop %v1004
  %v1012 = vxor.u32 %v1004, 2147483648
  %v1013 = vmul.f32 %v1012, 1.442695
  %v1014 = vpow.pop %v1013
  %v1015 = vadd.f32 %v1014, 1.0
  %v1016 = vrcp.pop %v1015
  %v1017 = vmul.f32 1.0, %v1016
  %v1019 = vrot.slane %v949, 2
  %1020 = vrot.lane.b32.xlu0 %v1019, 64
  %v1021 = vpop.permute.xlu0 %1020
  %v1023 = vmul.f32 %v1010, %v1021
  %v1024 = vmul.f32 %v1010, %v1011
  %1026 = vrot.lane.b32.xlu0 %v1024, 64
  %v1027 = vpop.permute.xlu0 %1026
  %v1029 = vadd.f32 %v1023, %v1027
  %v1030 = vtanh.pop %v1029
  %v1031 = vmul.f32 %v1017, %v1030
  %s1032 = sadd.s32 %s196, 7
  %v1033 = vstv %s1032
  %vm1034 = vcmp.lt.s32.totalorder %v1033, %v195
  %v1035 = vsel %vm1034, 1, 0
  %1036 = vset.pattern.permute.xlu0 0
  %1037 = vperm.xlu0 %1036, %v1035
  %v1038 = vpop.permute.xlu0 %1037
  %vm1039 = vcmp.eq.s32.totalorder %v1038, 1
  %v1041 = vrot.slane %v1031, 6
  %1042 = vrot.lane.b32.xlu0 %v1041, 64
  %v1043 = vpop.permute.xlu0 %1042
  %v1045 = vsel %vm1039, %v1043, %v943
  %v1047 = vrot.slane %v1029, 6
  %1048 = vrot.lane.b32.xlu0 %v1047, 64
  %v1049 = vpop.permute.xlu0 %1048
  %v1051 = vsel %vm1039, %v1049, %v949
  %v1052 = vsel %vm1039, %v1043, 0.0
  %1053 = vst.msk [vmem:[%s5 + $0xe] sm:$0x3] %vm331, %v1052
  %1054 = vst.msk [vmem:[#allocation2] sm:$0x3] %vm331, %v1045
  %1055 = vst.msk [vmem:[#allocation3] sm:$0x3] %vm331, %v1051
  // Predicated region
  $region26: #{stacked_bilstms_forward.5} parent=0 // pred_check
    _
  $region27: #{stacked_bilstms_forward.5} parent=0 // pred_check_branch
    %1057 = sbr.rel (0) target = $region29
  $region28: #{stacked_bilstms_forward.5} parent=0 // pred_region
    _
  $region29: #{stacked_bilstms_forward.5} parent=0 // pred_fallthru
    _
  // Predicated region
  $region30: #{stacked_bilstms_forward.5} parent=0 // pred_check
    _
  $region31: #{stacked_bilstms_forward.5} parent=0 // pred_check_branch
    %1059 = sbr.rel (0) target = $region33
  $region32: #{stacked_bilstms_forward.5} parent=0 // pred_region
    _
  $region33: #{stacked_bilstms_forward.5} parent=0 // pred_fallthru
    _

// kernel: stacked_bilstms_forward.4
$region0: #{stacked_bilstms_forward.4}
  #allocation0 [shape = 'u32[]', space=smem, size = 0x4, offset = 0x4, fixed_abs, tag = 'smem constant byte address 0x4 - core index']
  #allocation1 [shape = 'u32[144,128]{1,0:T(1,128)}', space=vmem, size = 0x12000, scoped, tag = 'internal scratch']
  #allocation2 [shape = 'f32[2,64]{1,0:T(2,128)}', space=vmem, size = 0x400, scoped, tag = 'scratch operand']
  #allocation3 [shape = 'f32[2,64]{1,0:T(2,128)}', space=vmem, size = 0x400, scoped, tag = 'scratch operand']
  %s0 = inlined_call_operand.vmem [shape: s32[2,1], index: 0, kind: input, shape index: {}]
  %s1 = inlined_call_operand.vmem [shape: bf16[16,32], index: 1, kind: input, shape index: {}]
  %s2 = inlined_call_operand.vmem [shape: bf16[32,256], index: 2, kind: input, shape index: {}]
  %s3 = inlined_call_operand.vmem [shape: bf16[64,256], index: 3, kind: input, shape index: {}]
  %s4 = inlined_call_operand.vmem [shape: f32[1,256], index: 4, kind: input, shape index: {}]
  %s5 = inlined_call_operand.vmem [shape: f32[16,64], index: 5, kind: output, shape index: {}]
  %s6 = sld [smem:[#allocation0]]
  $region34: #{stacked_bilstms_forward.4} parent=0
    _
  %s8 = ssub.s32 1, %s6
  %s9 = scalar_select 0, %s8, %s6
  // Predicated region
  $region2: #{stacked_bilstms_forward.4} parent=0 // pred_check
    _
  $region3: #{stacked_bilstms_forward.4} parent=0 // pred_check_branch
    %11 = sbr.rel (0) target = $region5
  $region4: #{stacked_bilstms_forward.4} parent=0 // pred_region
    _
  $region5: #{stacked_bilstms_forward.4} parent=0 // pred_fallthru
    _
  // Predicated region
  $region6: #{stacked_bilstms_forward.4} parent=0 // pred_check
    _
  $region7: #{stacked_bilstms_forward.4} parent=0 // pred_check_branch
    %13 = sbr.rel (0) target = $region9
  $region8: #{stacked_bilstms_forward.4} parent=0 // pred_region
    _
  $region9: #{stacked_bilstms_forward.4} parent=0 // pred_fallthru
    _
  // Predicated region
  $region10: #{stacked_bilstms_forward.4} parent=0 // pred_check
    _
  $region11: #{stacked_bilstms_forward.4} parent=0 // pred_check_branch
    %15 = sbr.rel (0) target = $region13
  $region12: #{stacked_bilstms_forward.4} parent=0 // pred_region
    _
  $region13: #{stacked_bilstms_forward.4} parent=0 // pred_fallthru
    _
  // Predicated region
  $region14: #{stacked_bilstms_forward.4} parent=0 // pred_check
    _
  $region15: #{stacked_bilstms_forward.4} parent=0 // pred_check_branch
    %17 = sbr.rel (0) target = $region17
  $region16: #{stacked_bilstms_forward.4} parent=0 // pred_region
    _
  $region17: #{stacked_bilstms_forward.4} parent=0 // pred_fallthru
    _
  // Predicated region
  $region18: #{stacked_bilstms_forward.4} parent=0 // pred_check
    _
  $region19: #{stacked_bilstms_forward.4} parent=0 // pred_check_branch
    %19 = sbr.rel (0) target = $region21
  $region20: #{stacked_bilstms_forward.4} parent=0 // pred_region
    _
  $region21: #{stacked_bilstms_forward.4} parent=0 // pred_fallthru
    _
  %p21 = scmp.eq.s32.totalorder 0, 0
  // Predicated region
  $region22: #{stacked_bilstms_forward.4} parent=0 // pred_check
    %p22 = pneg %p21
  $region23: #{stacked_bilstms_forward.4} parent=0 // pred_check_branch
    %24 = sbr.rel (%p22) target = $region25
  $region24: #{stacked_bilstms_forward.4} parent=0 // pred_region
    %vm25 = vcmask 517120
    %26 = vst.msk [vmem:[#allocation2] sm:$0x3] %vm25, 0.0
    %27 = vst.msk [vmem:[#allocation3] sm:$0x3] %vm25, 0.0
  $region25: #{stacked_bilstms_forward.4} parent=0 // pred_fallthru
    _
  %v28 = vld [vmem:[%s1] sm:$0xf]
  %v29 = vld [vmem:[%s1 + $0x4] sm:$0xf]
  %v30 = vld [vmem:[%s2] sm:$0xff]
  %v31 = vld [vmem:[%s2 + $0x8] sm:$0xff]
  %v32 = vld [vmem:[%s2 + $0x10] sm:$0xff]
  %v33 = vld [vmem:[%s2 + $0x18] sm:$0xff]
  %v34 = vld [vmem:[%s4] sm:$0x3]
  %v36 = vlaneseq
  %v37 = vshrl.u32 %v36, 7
  %v38 = vsub.s32 0, %v37
  %v39 = vrot.slane %v34, %v38
  %v40 = vlaneseq
  %v41 = vshrl.u32 %v40, 7
  %v42 = vsub.s32 1, %v41
  %v43 = vrot.slane %v34, %v42
  %v48 = vunpack.c.l.b16 %v28
  %v49 = vunpack.c.l.b16 %v29
  %v50 = vpack.c.b16 %v49, %v48
  %v55 = vunpack.c.l.b16 %v30
  %v56 = vunpack.c.h.b16 %v30
  %v57 = vunpack.c.l.b16 %v31
  %v58 = vunpack.c.h.b16 %v31
  %v59 = vunpack.c.l.b16 %v32
  %v60 = vunpack.c.h.b16 %v32
  %v61 = vunpack.c.l.b16 %v33
  %v62 = vunpack.c.h.b16 %v33
  %v63 = vpack.c.b16 %v57, %v55
  %v64 = vpack.c.b16 %v58, %v56
  %v65 = vpack.c.b16 %v61, %v59
  %v66 = vpack.c.b16 %v62, %v60
  %vm71 = vcmask 261120
  %v73 = vsel %vm71, %v50, 0
  %75 = vmatprep.subr.bf16.mxu0 %v64
  %76 = vmatpush1.bf16.msra.mxu0 %v63
  %77 = vmatprep.subr.bf16.mxu0 %v66
  %78 = vmatpush1.bf16.msra.mxu0 %v65
  %79 = vmatprep.subr.bf16.mxu0 0
  %80 = vmatpush1.bf16.msra.mxu0 0
  %81 = vmatprep.subr.bf16.mxu0 0
  %82 = vmatpush1.bf16.msra.mxu0 0
  %83 = vmatprep.subr.bf16.mxu0 0
  %84 = vmatpush1.bf16.msra.mxu0 0
  %85 = vmatprep.subr.bf16.mxu0 0
  %86 = vmatpush1.bf16.msra.mxu0 0
  %87 = vmatprep.subr.bf16.mxu0 0
  %88 = vmatpush1.bf16.msra.mxu0 0
  %89 = vmatprep.subr.bf16.mxu0 0
  %90 = vmatpush1.bf16.msra.mxu0 0
  %91 = vmatprep.subr.bf16.mxu0 0
  %92 = vmatpush1.bf16.msra.mxu0 0
  %93 = vmatprep.subr.bf16.mxu0 0
  %94 = vmatpush1.bf16.msra.mxu0 0
  %95 = vmatprep.subr.bf16.mxu0 0
  %96 = vmatpush1.bf16.msra.mxu0 0
  %97 = vmatprep.subr.bf16.mxu0 0
  %98 = vmatpush1.bf16.msra.mxu0 0
  %99 = vmatprep.subr.bf16.mxu0 0
  %100 = vmatpush1.bf16.msra.mxu0 0
  %101 = vmatprep.subr.bf16.mxu0 0
  %102 = vmatpush1.bf16.msra.mxu0 0
  %103 = vmatprep.subr.bf16.mxu0 0
  %104 = vmatpush1.bf16.msra.mxu0 0
  %105 = vmatprep.subr.bf16.mxu0 0
  %106 = vmatpush1.bf16.msra.mxu0 0
  %107 = vmatprep.mubr.bf16.mxu0 0
  %108 = vmatmul.mubr.bf16.gmra.mrb[0].mxu0 %v73
  %v109 = vpop.f32.mrb[0].mxu0
  %v110 = vadd.f32 %v39, %v109
  %v111 = vpop.f32.mrb[0].mxu0
  %v112 = vadd.f32 %v43, %v111
  %v113 = vpop.f32.mrb[0].mxu0
  %v114 = vadd.f32 %v39, %v113
  %v115 = vpop.f32.mrb[0].mxu0
  %v116 = vadd.f32 %v43, %v115
  %117 = vdwg.mxu0
  %v118 = vld [vmem:[%s3] sm:$0xff]
  %v119 = vld [vmem:[%s3 + $0x8] sm:$0xff]
  %v120 = vld [vmem:[%s3 + $0x10] sm:$0xff]
  %v121 = vld [vmem:[%s3 + $0x18] sm:$0xff]
  %v122 = vld [vmem:[%s3 + $0x20] sm:$0xff]
  %v123 = vld [vmem:[%s3 + $0x28] sm:$0xff]
  %v124 = vld [vmem:[%s3 + $0x30] sm:$0xff]
  %v125 = vld [vmem:[%s3 + $0x38] sm:$0xff]
  %v126 = vld [vmem:[%s0] sm:$0x3]
  %s127 = smul.u32 0, 8
  %v128 = vld [vmem:[#allocation2] sm:$0x3]
  %v129 = vld [vmem:[#allocation3] sm:$0x3]
  %v130 = vpack.c.bf16 %v128, %v128
  %v139 = vunpack.c.l.b16 %v118
  %v140 = vunpack.c.h.b16 %v118
  %v141 = vunpack.c.l.b16 %v119
  %v142 = vunpack.c.h.b16 %v119
  %v143 = vunpack.c.l.b16 %v120
  %v144 = vunpack.c.h.b16 %v120
  %v145 = vunpack.c.l.b16 %v121
  %v146 = vunpack.c.h.b16 %v121
  %v147 = vunpack.c.l.b16 %v122
  %v148 = vunpack.c.h.b16 %v122
  %v149 = vunpack.c.l.b16 %v123
  %v150 = vunpack.c.h.b16 %v123
  %v151 = vunpack.c.l.b16 %v124
  %v152 = vunpack.c.h.b16 %v124
  %v153 = vunpack.c.l.b16 %v125
  %v154 = vunpack.c.h.b16 %v125
  %v155 = vpack.c.b16 %v141, %v139
  %v156 = vpack.c.b16 %v142, %v140
  %v157 = vpack.c.b16 %v145, %v143
  %v158 = vpack.c.b16 %v146, %v144
  %v159 = vpack.c.b16 %v149, %v147
  %v160 = vpack.c.b16 %v150, %v148
  %v161 = vpack.c.b16 %v153, %v151
  %v162 = vpack.c.b16 %v154, %v152
  %vm171 = vcmask 523264
  %v173 = vsel %vm171, %v130, 0
  %175 = vmatprep.subr.bf16.mxu0 %v156
  %176 = vmatpush1.bf16.msra.mxu0 %v155
  %177 = vmatprep.subr.bf16.mxu0 %v158
  %178 = vmatpush1.bf16.msra.mxu0 %v157
  %179 = vmatprep.subr.bf16.mxu0 %v160
  %180 = vmatpush1.bf16.msra.mxu0 %v159
  %181 = vmatprep.subr.bf16.mxu0 %v162
  %182 = vmatpush1.bf16.msra.mxu0 %v161
  %183 = vmatprep.subr.bf16.mxu0 0
  %184 = vmatpush1.bf16.msra.mxu0 0
  %185 = vmatprep.subr.bf16.mxu0 0
  %186 = vmatpush1.bf16.msra.mxu0 0
  %187 = vmatprep.subr.bf16.mxu0 0
  %188 = vmatpush1.bf16.msra.mxu0 0
  %189 = vmatprep.subr.bf16.mxu0 0
  %190 = vmatpush1.bf16.msra.mxu0 0
  %191 = vmatprep.subr.bf16.mxu0 0
  %192 = vmatpush1.bf16.msra.mxu0 0
  %193 = vmatprep.subr.bf16.mxu0 0
  %194 = vmatpush1.bf16.msra.mxu0 0
  %195 = vmatprep.subr.bf16.mxu0 0
  %196 = vmatpush1.bf16.msra.mxu0 0
  %197 = vmatprep.subr.bf16.mxu0 0
  %198 = vmatpush1.bf16.msra.mxu0 0
  %199 = vmatprep.subr.bf16.mxu0 0
  %200 = vmatpush1.bf16.msra.mxu0 0
  %201 = vmatprep.subr.bf16.mxu0 0
  %202 = vmatpush1.bf16.msra.mxu0 0
  %203 = vmatprep.subr.bf16.mxu0 0
  %204 = vmatpush1.bf16.msra.mxu0 0
  %205 = vmatprep.subr.bf16.mxu0 0
  %206 = vmatpush1.bf16.msra.mxu0 0
  %207 = vmatprep.mubr.bf16.mxu0 0
  %208 = vmatmul.mubr.bf16.gmra.mrb[0].mxu0 %v173
  %v209 = vpop.f32.mrb[0].mxu0
  %v210 = vadd.f32 0.0, %v209
  %v211 = vpop.f32.mrb[0].mxu0
  %v212 = vadd.f32 0.0, %v211
  %v213 = vpop.f32.mrb[0].mxu0
  %v214 = vpop.f32.mrb[0].mxu0
  %215 = vdwg.mxu0
  %v216 = vadd.f32 %v110, %v210
  %v217 = vadd.f32 %v112, %v212
  %v218 = vxor.u32 %v216, 2147483648
  %v219 = vmul.f32 %v218, 1.442695
  %v220 = vpow.pop %v219
  %v221 = vadd.f32 %v220, 1.0
  %v222 = vrcp.pop %v221
  %v223 = vmul.f32 1.0, %v222
  %v224 = vtanh.pop %v217
  %v225 = vxor.u32 %v217, 2147483648
  %v226 = vmul.f32 %v225, 1.442695
  %v227 = vpow.pop %v226
  %v228 = vadd.f32 %v227, 1.0
  %v229 = vrcp.pop %v228
  %v230 = vmul.f32 1.0, %v229
  %232 = vrot.lane.b32.xlu0 %v129, 64
  %v233 = vpop.permute.xlu0 %232
  %v235 = vmul.f32 %v223, %v233
  %v236 = vmul.f32 %v223, %v224
  %238 = vrot.lane.b32.xlu0 %v236, 64
  %v239 = vpop.permute.xlu0 %238
  %v241 = vadd.f32 %v235, %v239
  %v242 = vtanh.pop %v241
  %v243 = vmul.f32 %v230, %v242
  %v244 = vstv %s127
  %vm245 = vcmp.lt.s32.totalorder %v244, %v126
  %v246 = vsel %vm245, 1, 0
  %247 = vset.pattern.permute.xlu0 0
  %248 = vperm.xlu0 %247, %v246
  %v249 = vpop.permute.xlu0 %248
  %vm250 = vcmp.eq.s32.totalorder %v249, 1
  %252 = vrot.lane.b32.xlu0 %v128, 64
  %v253 = vpop.permute.xlu0 %252
  %v255 = vsel %vm250, %v243, %v253
  %v256 = vsel %vm250, %v241, %v233
  %v257 = vsel %vm250, %v243, 0.0
  %259 = vrot.lane.b32.xlu0 %v257, 64
  %v260 = vpop.permute.xlu0 %259
  %vm262 = vcmask 517120
  %263 = vst.msk [vmem:[%s5] sm:$0x3] %vm262, %v260
  %v264 = vpack.c.bf16 %v255, %v255
  %266 = vrot.lane.b32.xlu0 %v264, 64
  %v267 = vpop.permute.xlu0 %266
  %v269 = vsel %vm171, %v267, 0
  %271 = vmatprep.subr.bf16.mxu0 %v156
  %272 = vmatpush1.bf16.msra.mxu0 %v155
  %273 = vmatprep.subr.bf16.mxu0 %v158
  %274 = vmatpush1.bf16.msra.mxu0 %v157
  %275 = vmatprep.subr.bf16.mxu0 %v160
  %276 = vmatpush1.bf16.msra.mxu0 %v159
  %277 = vmatprep.subr.bf16.mxu0 %v162
  %278 = vmatpush1.bf16.msra.mxu0 %v161
  %279 = vmatprep.subr.bf16.mxu0 0
  %280 = vmatpush1.bf16.msra.mxu0 0
  %281 = vmatprep.subr.bf16.mxu0 0
  %282 = vmatpush1.bf16.msra.mxu0 0
  %283 = vmatprep.subr.bf16.mxu0 0
  %284 = vmatpush1.bf16.msra.mxu0 0
  %285 = vmatprep.subr.bf16.mxu0 0
  %286 = vmatpush1.bf16.msra.mxu0 0
  %287 = vmatprep.subr.bf16.mxu0 0
  %288 = vmatpush1.bf16.msra.mxu0 0
  %289 = vmatprep.subr.bf16.mxu0 0
  %290 = vmatpush1.bf16.msra.mxu0 0
  %291 = vmatprep.subr.bf16.mxu0 0
  %292 = vmatpush1.bf16.msra.mxu0 0
  %293 = vmatprep.subr.bf16.mxu0 0
  %294 = vmatpush1.bf16.msra.mxu0 0
  %295 = vmatprep.subr.bf16.mxu0 0
  %296 = vmatpush1.bf16.msra.mxu0 0
  %297 = vmatprep.subr.bf16.mxu0 0
  %298 = vmatpush1.bf16.msra.mxu0 0
  %299 = vmatprep.subr.bf16.mxu0 0
  %300 = vmatpush1.bf16.msra.mxu0 0
  %301 = vmatprep.subr.bf16.mxu0 0
  %302 = vmatpush1.bf16.msra.mxu0 0
  %303 = vmatprep.mubr.bf16.mxu0 0
  %304 = vmatmul.mubr.bf16.gmra.mrb[0].mxu0 %v269
  %v305 = vpop.f32.mrb[0].mxu0
  %v306 = vadd.f32 0.0, %v305
  %v307 = vpop.f32.mrb[0].mxu0
  %v308 = vadd.f32 0.0, %v307
  %v309 = vpop.f32.mrb[0].mxu0
  %v310 = vpop.f32.mrb[0].mxu0
  %311 = vdwg.mxu0
  %v314 = vrot.slane %v306, 6
  %v315 = vrot.slane %v308, 6
  %v318 = vadd.f32 %v110, %v314
  %v319 = vadd.f32 %v112, %v315
  %v320 = vxor.u32 %v318, 2147483648
  %v321 = vmul.f32 %v320, 1.442695
  %v322 = vpow.pop %v321
  %v323 = vadd.f32 %v322, 1.0
  %v324 = vrcp.pop %v323
  %v325 = vmul.f32 1.0, %v324
  %v326 = vtanh.pop %v319
  %v327 = vxor.u32 %v319, 2147483648
  %v328 = vmul.f32 %v327, 1.442695
  %v329 = vpow.pop %v328
  %v330 = vadd.f32 %v329, 1.0
  %v331 = vrcp.pop %v330
  %v332 = vmul.f32 1.0, %v331
  %v334 = vrot.slane %v256, 6
  %v336 = vmul.f32 %v325, %v334
  %v337 = vmul.f32 %v325, %v326
  %339 = vrot.lane.b32.xlu0 %v337, 64
  %v340 = vpop.permute.xlu0 %339
  %v342 = vadd.f32 %v336, %v340
  %v343 = vtanh.pop %v342
  %v344 = vmul.f32 %v332, %v343
  %s345 = sadd.s32 %s127, 1
  %v346 = vstv %s345
  %vm347 = vcmp.lt.s32.totalorder %v346, %v126
  %v348 = vsel %vm347, 1, 0
  %349 = vset.pattern.permute.xlu0 0
  %350 = vperm.xlu0 %349, %v348
  %v351 = vpop.permute.xlu0 %350
  %vm352 = vcmp.eq.s32.totalorder %v351, 1
  %v354 = vrot.slane %v344, 2
  %355 = vrot.lane.b32.xlu0 %v354, 64
  %v356 = vpop.permute.xlu0 %355
  %359 = vrot.lane.b32.xlu0 %v255, 64
  %v360 = vpop.permute.xlu0 %359
  %v362 = vsel %vm352, %v356, %v360
  %v364 = vrot.slane %v342, 2
  %365 = vrot.lane.b32.xlu0 %v364, 64
  %v366 = vpop.permute.xlu0 %365
  %368 = vrot.lane.b32.xlu0 %v256, 64
  %v369 = vpop.permute.xlu0 %368
  %v371 = vsel %vm352, %v366, %v369
  %v372 = vsel %vm352, %v356, 0.0
  %373 = vst.msk [vmem:[%s5 + $0x2] sm:$0x3] %vm262, %v372
  %v374 = vpack.c.bf16 %v362, %v362
  %v376 = vsel %vm171, %v374, 0
  %378 = vmatprep.subr.bf16.mxu0 %v156
  %379 = vmatpush1.bf16.msra.mxu0 %v155
  %380 = vmatprep.subr.bf16.mxu0 %v158
  %381 = vmatpush1.bf16.msra.mxu0 %v157
  %382 = vmatprep.subr.bf16.mxu0 %v160
  %383 = vmatpush1.bf16.msra.mxu0 %v159
  %384 = vmatprep.subr.bf16.mxu0 %v162
  %385 = vmatpush1.bf16.msra.mxu0 %v161
  %386 = vmatprep.subr.bf16.mxu0 0
  %387 = vmatpush1.bf16.msra.mxu0 0
  %388 = vmatprep.subr.bf16.mxu0 0
  %389 = vmatpush1.bf16.msra.mxu0 0
  %390 = vmatprep.subr.bf16.mxu0 0
  %391 = vmatpush1.bf16.msra.mxu0 0
  %392 = vmatprep.subr.bf16.mxu0 0
  %393 = vmatpush1.bf16.msra.mxu0 0
  %394 = vmatprep.subr.bf16.mxu0 0
  %395 = vmatpush1.bf16.msra.mxu0 0
  %396 = vmatprep.subr.bf16.mxu0 0
  %397 = vmatpush1.bf16.msra.mxu0 0
  %398 = vmatprep.subr.bf16.mxu0 0
  %399 = vmatpush1.bf16.msra.mxu0 0
  %400 = vmatprep.subr.bf16.mxu0 0
  %401 = vmatpush1.bf16.msra.mxu0 0
  %402 = vmatprep.subr.bf16.mxu0 0
  %403 = vmatpush1.bf16.msra.mxu0 0
  %404 = vmatprep.subr.bf16.mxu0 0
  %405 = vmatpush1.bf16.msra.mxu0 0
  %406 = vmatprep.subr.bf16.mxu0 0
  %407 = vmatpush1.bf16.msra.mxu0 0
  %408 = vmatprep.subr.bf16.mxu0 0
  %409 = vmatpush1.bf16.msra.mxu0 0
  %410 = vmatprep.mubr.bf16.mxu0 0
  %411 = vmatmul.mubr.bf16.gmra.mrb[0].mxu0 %v376
  %v412 = vpop.f32.mrb[0].mxu0
  %v413 = vadd.f32 0.0, %v412
  %v414 = vpop.f32.mrb[0].mxu0
  %v415 = vadd.f32 0.0, %v414
  %v416 = vpop.f32.mrb[0].mxu0
  %v417 = vpop.f32.mrb[0].mxu0
  %418 = vdwg.mxu0
  %v421 = vrot.slane %v413, 4
  %v422 = vrot.slane %v415, 4
  %v425 = vadd.f32 %v110, %v421
  %v426 = vadd.f32 %v112, %v422
  %v427 = vxor.u32 %v425, 2147483648
  %v428 = vmul.f32 %v427, 1.442695
  %v429 = vpow.pop %v428
  %v430 = vadd.f32 %v429, 1.0
  %v431 = vrcp.pop %v430
  %v432 = vmul.f32 1.0, %v431
  %v433 = vtanh.pop %v426
  %v434 = vxor.u32 %v426, 2147483648
  %v435 = vmul.f32 %v434, 1.442695
  %v436 = vpow.pop %v435
  %v437 = vadd.f32 %v436, 1.0
  %v438 = vrcp.pop %v437
  %v439 = vmul.f32 1.0, %v438
  %v441 = vrot.slane %v371, 4
  %442 = vrot.lane.b32.xlu0 %v441, 64
  %v443 = vpop.permute.xlu0 %442
  %v445 = vmul.f32 %v432, %v443
  %v446 = vmul.f32 %v432, %v433
  %448 = vrot.lane.b32.xlu0 %v446, 64
  %v449 = vpop.permute.xlu0 %448
  %v451 = vadd.f32 %v445, %v449
  %v452 = vtanh.pop %v451
  %v453 = vmul.f32 %v439, %v452
  %s454 = sadd.s32 %s127, 2
  %v455 = vstv %s454
  %vm456 = vcmp.lt.s32.totalorder %v455, %v126
  %v457 = vsel %vm456, 1, 0
  %458 = vset.pattern.permute.xlu0 0
  %459 = vperm.xlu0 %458, %v457
  %v460 = vpop.permute.xlu0 %459
  %vm461 = vcmp.eq.s32.totalorder %v460, 1
  %v463 = vrot.slane %v453, 4
  %464 = vrot.lane.b32.xlu0 %v463, 64
  %v465 = vpop.permute.xlu0 %464
  %v467 = vsel %vm461, %v465, %v362
  %v469 = vrot.slane %v451, 4
  %470 = vrot.lane.b32.xlu0 %v469, 64
  %v471 = vpop.permute.xlu0 %470
  %v473 = vsel %vm461, %v471, %v371
  %v474 = vsel %vm461, %v465, 0.0
  %475 = vst.msk [vmem:[%s5 + $0x4] sm:$0x3] %vm262, %v474
  %v476 = vpack.c.bf16 %v467, %v467
  %v478 = vsel %vm171, %v476, 0
  %480 = vmatprep.subr.bf16.mxu0 %v156
  %481 = vmatpush1.bf16.msra.mxu0 %v155
  %482 = vmatprep.subr.bf16.mxu0 %v158
  %483 = vmatpush1.bf16.msra.mxu0 %v157
  %484 = vmatprep.subr.bf16.mxu0 %v160
  %485 = vmatpush1.bf16.msra.mxu0 %v159
  %486 = vmatprep.subr.bf16.mxu0 %v162
  %487 = vmatpush1.bf16.msra.mxu0 %v161
  %488 = vmatprep.subr.bf16.mxu0 0
  %489 = vmatpush1.bf16.msra.mxu0 0
  %490 = vmatprep.subr.bf16.mxu0 0
  %491 = vmatpush1.bf16.msra.mxu0 0
  %492 = vmatprep.subr.bf16.mxu0 0
  %493 = vmatpush1.bf16.msra.mxu0 0
  %494 = vmatprep.subr.bf16.mxu0 0
  %495 = vmatpush1.bf16.msra.mxu0 0
  %496 = vmatprep.subr.bf16.mxu0 0
  %497 = vmatpush1.bf16.msra.mxu0 0
  %498 = vmatprep.subr.bf16.mxu0 0
  %499 = vmatpush1.bf16.msra.mxu0 0
  %500 = vmatprep.subr.bf16.mxu0 0
  %501 = vmatpush1.bf16.msra.mxu0 0
  %502 = vmatprep.subr.bf16.mxu0 0
  %503 = vmatpush1.bf16.msra.mxu0 0
  %504 = vmatprep.subr.bf16.mxu0 0
  %505 = vmatpush1.bf16.msra.mxu0 0
  %506 = vmatprep.subr.bf16.mxu0 0
  %507 = vmatpush1.bf16.msra.mxu0 0
  %508 = vmatprep.subr.bf16.mxu0 0
  %509 = vmatpush1.bf16.msra.mxu0 0
  %510 = vmatprep.subr.bf16.mxu0 0
  %511 = vmatpush1.bf16.msra.mxu0 0
  %512 = vmatprep.mubr.bf16.mxu0 0
  %513 = vmatmul.mubr.bf16.gmra.mrb[0].mxu0 %v478
  %v514 = vpop.f32.mrb[0].mxu0
  %v515 = vadd.f32 0.0, %v514
  %v516 = vpop.f32.mrb[0].mxu0
  %v517 = vadd.f32 0.0, %v516
  %v518 = vpop.f32.mrb[0].mxu0
  %v519 = vpop.f32.mrb[0].mxu0
  %520 = vdwg.mxu0
  %v523 = vrot.slane %v515, 2
  %v524 = vrot.slane %v517, 2
  %v527 = vadd.f32 %v110, %v523
  %v528 = vadd.f32 %v112, %v524
  %v529 = vxor.u32 %v527, 2147483648
  %v530 = vmul.f32 %v529, 1.442695
  %v531 = vpow.pop %v530
  %v532 = vadd.f32 %v531, 1.0
  %v533 = vrcp.pop %v532
  %v534 = vmul.f32 1.0, %v533
  %v535 = vtanh.pop %v528
  %v536 = vxor.u32 %v528, 2147483648
  %v537 = vmul.f32 %v536, 1.442695
  %v538 = vpow.pop %v537
  %v539 = vadd.f32 %v538, 1.0
  %v540 = vrcp.pop %v539
  %v541 = vmul.f32 1.0, %v540
  %v543 = vrot.slane %v473, 2
  %544 = vrot.lane.b32.xlu0 %v543, 64
  %v545 = vpop.permute.xlu0 %544
  %v547 = vmul.f32 %v534, %v545
  %v548 = vmul.f32 %v534, %v535
  %550 = vrot.lane.b32.xlu0 %v548, 64
  %v551 = vpop.permute.xlu0 %550
  %v553 = vadd.f32 %v547, %v551
  %v554 = vtanh.pop %v553
  %v555 = vmul.f32 %v541, %v554
  %s556 = sadd.s32 %s127, 3
  %v557 = vstv %s556
  %vm558 = vcmp.lt.s32.totalorder %v557, %v126
  %v559 = vsel %vm558, 1, 0
  %560 = vset.pattern.permute.xlu0 0
  %561 = vperm.xlu0 %560, %v559
  %v562 = vpop.permute.xlu0 %561
  %vm563 = vcmp.eq.s32.totalorder %v562, 1
  %v565 = vrot.slane %v555, 6
  %566 = vrot.lane.b32.xlu0 %v565, 64
  %v567 = vpop.permute.xlu0 %566
  %v569 = vsel %vm563, %v567, %v467
  %v571 = vrot.slane %v553, 6
  %572 = vrot.lane.b32.xlu0 %v571, 64
  %v573 = vpop.permute.xlu0 %572
  %v575 = vsel %vm563, %v573, %v473
  %v576 = vsel %vm563, %v567, 0.0
  %577 = vst.msk [vmem:[%s5 + $0x6] sm:$0x3] %vm262, %v576
  %v578 = vpack.c.bf16 %v569, %v569
  %v580 = vsel %vm171, %v578, 0
  %582 = vmatprep.subr.bf16.mxu0 %v156
  %583 = vmatpush1.bf16.msra.mxu0 %v155
  %584 = vmatprep.subr.bf16.mxu0 %v158
  %585 = vmatpush1.bf16.msra.mxu0 %v157
  %586 = vmatprep.subr.bf16.mxu0 %v160
  %587 = vmatpush1.bf16.msra.mxu0 %v159
  %588 = vmatprep.subr.bf16.mxu0 %v162
  %589 = vmatpush1.bf16.msra.mxu0 %v161
  %590 = vmatprep.subr.bf16.mxu0 0
  %591 = vmatpush1.bf16.msra.mxu0 0
  %592 = vmatprep.subr.bf16.mxu0 0
  %593 = vmatpush1.bf16.msra.mxu0 0
  %594 = vmatprep.subr.bf16.mxu0 0
  %595 = vmatpush1.bf16.msra.mxu0 0
  %596 = vmatprep.subr.bf16.mxu0 0
  %597 = vmatpush1.bf16.msra.mxu0 0
  %598 = vmatprep.subr.bf16.mxu0 0
  %599 = vmatpush1.bf16.msra.mxu0 0
  %600 = vmatprep.subr.bf16.mxu0 0
  %601 = vmatpush1.bf16.msra.mxu0 0
  %602 = vmatprep.subr.bf16.mxu0 0
  %603 = vmatpush1.bf16.msra.mxu0 0
  %604 = vmatprep.subr.bf16.mxu0 0
  %605 = vmatpush1.bf16.msra.mxu0 0
  %606 = vmatprep.subr.bf16.mxu0 0
  %607 = vmatpush1.bf16.msra.mxu0 0
  %608 = vmatprep.subr.bf16.mxu0 0
  %609 = vmatpush1.bf16.msra.mxu0 0
  %610 = vmatprep.subr.bf16.mxu0 0
  %611 = vmatpush1.bf16.msra.mxu0 0
  %612 = vmatprep.subr.bf16.mxu0 0
  %613 = vmatpush1.bf16.msra.mxu0 0
  %614 = vmatprep.mubr.bf16.mxu0 0
  %615 = vmatmul.mubr.bf16.gmra.mrb[0].mxu0 %v580
  %v616 = vpop.f32.mrb[0].mxu0
  %v617 = vadd.f32 0.0, %v616
  %v618 = vpop.f32.mrb[0].mxu0
  %v619 = vadd.f32 0.0, %v618
  %v620 = vpop.f32.mrb[0].mxu0
  %v621 = vpop.f32.mrb[0].mxu0
  %622 = vdwg.mxu0
  %v623 = vadd.f32 %v114, %v617
  %v624 = vadd.f32 %v116, %v619
  %v625 = vxor.u32 %v623, 2147483648
  %v626 = vmul.f32 %v625, 1.442695
  %v627 = vpow.pop %v626
  %v628 = vadd.f32 %v627, 1.0
  %v629 = vrcp.pop %v628
  %v630 = vmul.f32 1.0, %v629
  %v631 = vtanh.pop %v624
  %v632 = vxor.u32 %v624, 2147483648
  %v633 = vmul.f32 %v632, 1.442695
  %v634 = vpow.pop %v633
  %v635 = vadd.f32 %v634, 1.0
  %v636 = vrcp.pop %v635
  %v637 = vmul.f32 1.0, %v636
  %639 = vrot.lane.b32.xlu0 %v575, 64
  %v640 = vpop.permute.xlu0 %639
  %v642 = vmul.f32 %v630, %v640
  %v643 = vmul.f32 %v630, %v631
  %645 = vrot.lane.b32.xlu0 %v643, 64
  %v646 = vpop.permute.xlu0 %645
  %v648 = vadd.f32 %v642, %v646
  %v649 = vtanh.pop %v648
  %v650 = vmul.f32 %v637, %v649
  %s651 = sadd.s32 %s127, 4
  %v652 = vstv %s651
  %vm653 = vcmp.lt.s32.totalorder %v652, %v126
  %v654 = vsel %vm653, 1, 0
  %655 = vset.pattern.permute.xlu0 0
  %656 = vperm.xlu0 %655, %v654
  %v657 = vpop.permute.xlu0 %656
  %vm658 = vcmp.eq.s32.totalorder %v657, 1
  %660 = vrot.lane.b32.xlu0 %v569, 64
  %v661 = vpop.permute.xlu0 %660
  %v663 = vsel %vm658, %v650, %v661
  %v664 = vsel %vm658, %v648, %v640
  %v665 = vsel %vm658, %v650, 0.0
  %667 = vrot.lane.b32.xlu0 %v665, 64
  %v668 = vpop.permute.xlu0 %667
  %670 = vst.msk [vmem:[%s5 + $0x8] sm:$0x3] %vm262, %v668
  %v671 = vpack.c.bf16 %v663, %v663
  %673 = vrot.lane.b32.xlu0 %v671, 64
  %v674 = vpop.permute.xlu0 %673
  %v676 = vsel %vm171, %v674, 0
  %678 = vmatprep.subr.bf16.mxu0 %v156
  %679 = vmatpush1.bf16.msra.mxu0 %v155
  %680 = vmatprep.subr.bf16.mxu0 %v158
  %681 = vmatpush1.bf16.msra.mxu0 %v157
  %682 = vmatprep.subr.bf16.mxu0 %v160
  %683 = vmatpush1.bf16.msra.mxu0 %v159
  %684 = vmatprep.subr.bf16.mxu0 %v162
  %685 = vmatpush1.bf16.msra.mxu0 %v161
  %686 = vmatprep.subr.bf16.mxu0 0
  %687 = vmatpush1.bf16.msra.mxu0 0
  %688 = vmatprep.subr.bf16.mxu0 0
  %689 = vmatpush1.bf16.msra.mxu0 0
  %690 = vmatprep.subr.bf16.mxu0 0
  %691 = vmatpush1.bf16.msra.mxu0 0
  %692 = vmatprep.subr.bf16.mxu0 0
  %693 = vmatpush1.bf16.msra.mxu0 0
  %694 = vmatprep.subr.bf16.mxu0 0
  %695 = vmatpush1.bf16.msra.mxu0 0
  %696 = vmatprep.subr.bf16.mxu0 0
  %697 = vmatpush1.bf16.msra.mxu0 0
  %698 = vmatprep.subr.bf16.mxu0 0
  %699 = vmatpush1.bf16.msra.mxu0 0
  %700 = vmatprep.subr.bf16.mxu0 0
  %701 = vmatpush1.bf16.msra.mxu0 0
  %702 = vmatprep.subr.bf16.mxu0 0
  %703 = vmatpush1.bf16.msra.mxu0 0
  %704 = vmatprep.subr.bf16.mxu0 0
  %705 = vmatpush1.bf16.msra.mxu0 0
  %706 = vmatprep.subr.bf16.mxu0 0
  %707 = vmatpush1.bf16.msra.mxu0 0
  %708 = vmatprep.subr.bf16.mxu0 0
  %709 = vmatpush1.bf16.msra.mxu0 0
  %710 = vmatprep.mubr.bf16.mxu0 0
  %711 = vmatmul.mubr.bf16.gmra.mrb[0].mxu0 %v676
  %v712 = vpop.f32.mrb[0].mxu0
  %v713 = vadd.f32 0.0, %v712
  %v714 = vpop.f32.mrb[0].mxu0
  %v715 = vadd.f32 0.0, %v714
  %v716 = vpop.f32.mrb[0].mxu0
  %v717 = vpop.f32.mrb[0].mxu0
  %718 = vdwg.mxu0
  %v721 = vrot.slane %v713, 6
  %v722 = vrot.slane %v715, 6
  %v725 = vadd.f32 %v114, %v721
  %v726 = vadd.f32 %v116, %v722
  %v727 = vxor.u32 %v725, 2147483648
  %v728 = vmul.f32 %v727, 1.442695
  %v729 = vpow.pop %v728
  %v730 = vadd.f32 %v729, 1.0
  %v731 = vrcp.pop %v730
  %v732 = vmul.f32 1.0, %v731
  %v733 = vtanh.pop %v726
  %v734 = vxor.u32 %v726, 2147483648
  %v735 = vmul.f32 %v734, 1.442695
  %v736 = vpow.pop %v735
  %v737 = vadd.f32 %v736, 1.0
  %v738 = vrcp.pop %v737
  %v739 = vmul.f32 1.0, %v738
  %v741 = vrot.slane %v664, 6
  %v743 = vmul.f32 %v732, %v741
  %v744 = vmul.f32 %v732, %v733
  %746 = vrot.lane.b32.xlu0 %v744, 64
  %v747 = vpop.permute.xlu0 %746
  %v749 = vadd.f32 %v743, %v747
  %v750 = vtanh.pop %v749
  %v751 = vmul.f32 %v739, %v750
  %s752 = sadd.s32 %s127, 5
  %v753 = vstv %s752
  %vm754 = vcmp.lt.s32.totalorder %v753, %v126
  %v755 = vsel %vm754, 1, 0
  %756 = vset.pattern.permute.xlu0 0
  %757 = vperm.xlu0 %756, %v755
  %v758 = vpop.permute.xlu0 %757
  %vm759 = vcmp.eq.s32.totalorder %v758, 1
  %v761 = vrot.slane %v751, 2
  %762 = vrot.lane.b32.xlu0 %v761, 64
  %v763 = vpop.permute.xlu0 %762
  %766 = vrot.lane.b32.xlu0 %v663, 64
  %v767 = vpop.permute.xlu0 %766
  %v769 = vsel %vm759, %v763, %v767
  %v771 = vrot.slane %v749, 2
  %772 = vrot.lane.b32.xlu0 %v771, 64
  %v773 = vpop.permute.xlu0 %772
  %775 = vrot.lane.b32.xlu0 %v664, 64
  %v776 = vpop.permute.xlu0 %775
  %v778 = vsel %vm759, %v773, %v776
  %v779 = vsel %vm759, %v763, 0.0
  %780 = vst.msk [vmem:[%s5 + $0xa] sm:$0x3] %vm262, %v779
  %v781 = vpack.c.bf16 %v769, %v769
  %v783 = vsel %vm171, %v781, 0
  %785 = vmatprep.subr.bf16.mxu0 %v156
  %786 = vmatpush1.bf16.msra.mxu0 %v155
  %787 = vmatprep.subr.bf16.mxu0 %v158
  %788 = vmatpush1.bf16.msra.mxu0 %v157
  %789 = vmatprep.subr.bf16.mxu0 %v160
  %790 = vmatpush1.bf16.msra.mxu0 %v159
  %791 = vmatprep.subr.bf16.mxu0 %v162
  %792 = vmatpush1.bf16.msra.mxu0 %v161
  %793 = vmatprep.subr.bf16.mxu0 0
  %794 = vmatpush1.bf16.msra.mxu0 0
  %795 = vmatprep.subr.bf16.mxu0 0
  %796 = vmatpush1.bf16.msra.mxu0 0
  %797 = vmatprep.subr.bf16.mxu0 0
  %798 = vmatpush1.bf16.msra.mxu0 0
  %799 = vmatprep.subr.bf16.mxu0 0
  %800 = vmatpush1.bf16.msra.mxu0 0
  %801 = vmatprep.subr.bf16.mxu0 0
  %802 = vmatpush1.bf16.msra.mxu0 0
  %803 = vmatprep.subr.bf16.mxu0 0
  %804 = vmatpush1.bf16.msra.mxu0 0
  %805 = vmatprep.subr.bf16.mxu0 0
  %806 = vmatpush1.bf16.msra.mxu0 0
  %807 = vmatprep.subr.bf16.mxu0 0
  %808 = vmatpush1.bf16.msra.mxu0 0
  %809 = vmatprep.subr.bf16.mxu0 0
  %810 = vmatpush1.bf16.msra.mxu0 0
  %811 = vmatprep.subr.bf16.mxu0 0
  %812 = vmatpush1.bf16.msra.mxu0 0
  %813 = vmatprep.subr.bf16.mxu0 0
  %814 = vmatpush1.bf16.msra.mxu0 0
  %815 = vmatprep.subr.bf16.mxu0 0
  %816 = vmatpush1.bf16.msra.mxu0 0
  %817 = vmatprep.mubr.bf16.mxu0 0
  %818 = vmatmul.mubr.bf16.gmra.mrb[0].mxu0 %v783
  %v819 = vpop.f32.mrb[0].mxu0
  %v820 = vadd.f32 0.0, %v819
  %v821 = vpop.f32.mrb[0].mxu0
  %v822 = vadd.f32 0.0, %v821
  %v823 = vpop.f32.mrb[0].mxu0
  %v824 = vpop.f32.mrb[0].mxu0
  %825 = vdwg.mxu0
  %v828 = vrot.slane %v820, 4
  %v829 = vrot.slane %v822, 4
  %v832 = vadd.f32 %v114, %v828
  %v833 = vadd.f32 %v116, %v829
  %v834 = vxor.u32 %v832, 2147483648
  %v835 = vmul.f32 %v834, 1.442695
  %v836 = vpow.pop %v835
  %v837 = vadd.f32 %v836, 1.0
  %v838 = vrcp.pop %v837
  %v839 = vmul.f32 1.0, %v838
  %v840 = vtanh.pop %v833
  %v841 = vxor.u32 %v833, 2147483648
  %v842 = vmul.f32 %v841, 1.442695
  %v843 = vpow.pop %v842
  %v844 = vadd.f32 %v843, 1.0
  %v845 = vrcp.pop %v844
  %v846 = vmul.f32 1.0, %v845
  %v848 = vrot.slane %v778, 4
  %849 = vrot.lane.b32.xlu0 %v848, 64
  %v850 = vpop.permute.xlu0 %849
  %v852 = vmul.f32 %v839, %v850
  %v853 = vmul.f32 %v839, %v840
  %855 = vrot.lane.b32.xlu0 %v853, 64
  %v856 = vpop.permute.xlu0 %855
  %v858 = vadd.f32 %v852, %v856
  %v859 = vtanh.pop %v858
  %v860 = vmul.f32 %v846, %v859
  %s861 = sadd.s32 %s127, 6
  %v862 = vstv %s861
  %vm863 = vcmp.lt.s32.totalorder %v862, %v126
  %v864 = vsel %vm863, 1, 0
  %865 = vset.pattern.permute.xlu0 0
  %866 = vperm.xlu0 %865, %v864
  %v867 = vpop.permute.xlu0 %866
  %vm868 = vcmp.eq.s32.totalorder %v867, 1
  %v870 = vrot.slane %v860, 4
  %871 = vrot.lane.b32.xlu0 %v870, 64
  %v872 = vpop.permute.xlu0 %871
  %v874 = vsel %vm868, %v872, %v769
  %v876 = vrot.slane %v858, 4
  %877 = vrot.lane.b32.xlu0 %v876, 64
  %v878 = vpop.permute.xlu0 %877
  %v880 = vsel %vm868, %v878, %v778
  %v881 = vsel %vm868, %v872, 0.0
  %882 = vst.msk [vmem:[%s5 + $0xc] sm:$0x3] %vm262, %v881
  %v883 = vpack.c.bf16 %v874, %v874
  %v885 = vsel %vm171, %v883, 0
  %887 = vmatprep.subr.bf16.mxu0 %v156
  %888 = vmatpush1.bf16.msra.mxu0 %v155
  %889 = vmatprep.subr.bf16.mxu0 %v158
  %890 = vmatpush1.bf16.msra.mxu0 %v157
  %891 = vmatprep.subr.bf16.mxu0 %v160
  %892 = vmatpush1.bf16.msra.mxu0 %v159
  %893 = vmatprep.subr.bf16.mxu0 %v162
  %894 = vmatpush1.bf16.msra.mxu0 %v161
  %895 = vmatprep.subr.bf16.mxu0 0
  %896 = vmatpush1.bf16.msra.mxu0 0
  %897 = vmatprep.subr.bf16.mxu0 0
  %898 = vmatpush1.bf16.msra.mxu0 0
  %899 = vmatprep.subr.bf16.mxu0 0
  %900 = vmatpush1.bf16.msra.mxu0 0
  %901 = vmatprep.subr.bf16.mxu0 0
  %902 = vmatpush1.bf16.msra.mxu0 0
  %903 = vmatprep.subr.bf16.mxu0 0
  %904 = vmatpush1.bf16.msra.mxu0 0
  %905 = vmatprep.subr.bf16.mxu0 0
  %906 = vmatpush1.bf16.msra.mxu0 0
  %907 = vmatprep.subr.bf16.mxu0 0
  %908 = vmatpush1.bf16.msra.mxu0 0
  %909 = vmatprep.subr.bf16.mxu0 0
  %910 = vmatpush1.bf16.msra.mxu0 0
  %911 = vmatprep.subr.bf16.mxu0 0
  %912 = vmatpush1.bf16.msra.mxu0 0
  %913 = vmatprep.subr.bf16.mxu0 0
  %914 = vmatpush1.bf16.msra.mxu0 0
  %915 = vmatprep.subr.bf16.mxu0 0
  %916 = vmatpush1.bf16.msra.mxu0 0
  %917 = vmatprep.subr.bf16.mxu0 0
  %918 = vmatpush1.bf16.msra.mxu0 0
  %919 = vmatprep.mubr.bf16.mxu0 0
  %920 = vmatmul.mubr.bf16.gmra.mrb[0].mxu0 %v885
  %v921 = vpop.f32.mrb[0].mxu0
  %v922 = vadd.f32 0.0, %v921
  %v923 = vpop.f32.mrb[0].mxu0
  %v924 = vadd.f32 0.0, %v923
  %v925 = vpop.f32.mrb[0].mxu0
  %v926 = vpop.f32.mrb[0].mxu0
  %927 = vdwg.mxu0
  %v930 = vrot.slane %v922, 2
  %v931 = vrot.slane %v924, 2
  %v934 = vadd.f32 %v114, %v930
  %v935 = vadd.f32 %v116, %v931
  %v936 = vxor.u32 %v934, 2147483648
  %v937 = vmul.f32 %v936, 1.442695
  %v938 = vpow.pop %v937
  %v939 = vadd.f32 %v938, 1.0
  %v940 = vrcp.pop %v939
  %v941 = vmul.f32 1.0, %v940
  %v942 = vtanh.pop %v935
  %v943 = vxor.u32 %v935, 2147483648
  %v944 = vmul.f32 %v943, 1.442695
  %v945 = vpow.pop %v944
  %v946 = vadd.f32 %v945, 1.0
  %v947 = vrcp.pop %v946
  %v948 = vmul.f32 1.0, %v947
  %v950 = vrot.slane %v880, 2
  %951 = vrot.lane.b32.xlu0 %v950, 64
  %v952 = vpop.permute.xlu0 %951
  %v954 = vmul.f32 %v941, %v952
  %v955 = vmul.f32 %v941, %v942
  %957 = vrot.lane.b32.xlu0 %v955, 64
  %v958 = vpop.permute.xlu0 %957
  %v960 = vadd.f32 %v954, %v958
  %v961 = vtanh.pop %v960
  %v962 = vmul.f32 %v948, %v961
  %s963 = sadd.s32 %s127, 7
  %v964 = vstv %s963
  %vm965 = vcmp.lt.s32.totalorder %v964, %v126
  %v966 = vsel %vm965, 1, 0
  %967 = vset.pattern.permute.xlu0 0
  %968 = vperm.xlu0 %967, %v966
  %v969 = vpop.permute.xlu0 %968
  %vm970 = vcmp.eq.s32.totalorder %v969, 1
  %v972 = vrot.slane %v962, 6
  %973 = vrot.lane.b32.xlu0 %v972, 64
  %v974 = vpop.permute.xlu0 %973
  %v976 = vsel %vm970, %v974, %v874
  %v978 = vrot.slane %v960, 6
  %979 = vrot.lane.b32.xlu0 %v978, 64
  %v980 = vpop.permute.xlu0 %979
  %v982 = vsel %vm970, %v980, %v880
  %v983 = vsel %vm970, %v974, 0.0
  %984 = vst.msk [vmem:[%s5 + $0xe] sm:$0x3] %vm262, %v983
  %985 = vst.msk [vmem:[#allocation2] sm:$0x3] %vm262, %v976
  %986 = vst.msk [vmem:[#allocation3] sm:$0x3] %vm262, %v982
  // Predicated region
  $region26: #{stacked_bilstms_forward.4} parent=0 // pred_check
    _
  $region27: #{stacked_bilstms_forward.4} parent=0 // pred_check_branch
    %988 = sbr.rel (0) target = $region29
  $region28: #{stacked_bilstms_forward.4} parent=0 // pred_region
    _
  $region29: #{stacked_bilstms_forward.4} parent=0 // pred_fallthru
    _
  // Predicated region
  $region30: #{stacked_bilstms_forward.4} parent=0 // pred_check
    _
  $region31: #{stacked_bilstms_forward.4} parent=0 // pred_check_branch
    %990 = sbr.rel (0) target = $region33
  $region32: #{stacked_bilstms_forward.4} parent=0 // pred_region
    _
  $region33: #{stacked_bilstms_forward.4} parent=0 // pred_fallthru
    _

</llo_original>
